<compile_context>
chip_gen: v7x
topology: tpu7x:2x2x1
jax: 0.10.0
libtpu: 0.0.40
codegen_flags: <defaults>
</compile_context>

<pallas_src>
import math

import jax
import jax.numpy as jnp
from jax import lax
from jax.experimental import pallas as pl
from jax.experimental.pallas import tpu as pltpu


def _penalized_tanh(v):
    a = jnp.tanh(v)
    return jnp.where(v > 0, a, 0.25 * a)


def _gru_pen_tanh_kernel(x_ref,      # (T, Bb, 2I) f32: row t holds [x_t | x_{T-1-t}]
                         wx_ref,     # (2I, 6H) bf16: block-diag x2h, gate-interleaved cols
                         bx_ref,     # (1, 6H)  f32: bx + [bh_r, bh_i, 0] (r/i recurrent bias folded)
                         wh_ref,     # (2H, 6H) bf16: block-diag h2h, gate-interleaved cols
                         bhn_ref,    # (1, 2H)  f32: [bh_n_fwd | bh_n_bwd]
                         outs_ref,   # (T, Bb, 2H) time-major output
                         gx_scr):    # (T, Bb, 6H) f32 scratch
    T, Bb, H6 = gx_scr.shape
    H2 = H6 // 3                      # 2*H: packed [fwd | bwd] lane width

    # One big MXU matmul: input->gate projections for all timesteps and both
    # directions at once (bf16 operands, f32 accumulate; r/i biases pre-folded).
    x2d = x_ref[...].reshape(T * Bb, x_ref.shape[-1]).astype(jnp.bfloat16)
    gx = jnp.dot(x2d, wx_ref[...], preferred_element_type=jnp.float32) + bx_ref[...]
    gx_scr[...] = gx.reshape(T, Bb, H6)

    # Hoisted out of the time loop (JAX does not CSE broadcast_in_dim).
    bhn = jnp.broadcast_to(bhn_ref[...], (Bb, H2))

    # Lane-packed bidirectional state: h = [h_fwd | h_bwd]  -> (Bb, 2H).
    h = jnp.zeros((Bb, H2), jnp.float32)

    # Sequential recurrence.  T is a small compile-time constant here, so a fully
    # unrolled static loop (constant indices) gives the LLO scheduler the whole chain.
    # TODO(synk): for long T switch to lax.fori_loop(..., unroll=2..4) with pl.ds offsets.
    for t in range(T):
        gxt = gx_scr[t]                                     # (Bb, 6H) dense slab
        gh = jnp.dot(h.astype(jnp.bfloat16), wh_ref[...],   # one fused MXU call per step
                     preferred_element_type=jnp.float32)    # (Bb, 6H), no bias
        r = _penalized_tanh(gxt[:, :H2] + gh[:, :H2])
        z = _penalized_tanh(gxt[:, H2:2 * H2] + gh[:, H2:2 * H2])
        n = _penalized_tanh(gxt[:, 2 * H2:] + r * (gh[:, 2 * H2:] + bhn))
        h = n + z * (h - n)
        outs_ref[t] = h.astype(outs_ref.dtype)              # dense (Bb, 2H) store


def _interleave_gate_cols(fwd, bwd, hidden):
    """Column order [r_f|r_b, i_f|i_b, n_f|n_b] so each gate is one full 2H lane slab."""
    parts = []
    for g in range(3):
        parts.append(fwd[..., g * hidden:(g + 1) * hidden])
        parts.append(bwd[..., g * hidden:(g + 1) * hidden])
    return jnp.concatenate(parts, axis=-1)


def _pick_block_b(batch):
    """Batch rows per grid step: single-TC chips (v5e/v6e) want one batch-wide block;
    dual-TC v7x wants >=2 'parallel' blocks so both TensorCores get work."""
    try:
        kind = jax.devices()[0].device_kind.lower()
    except Exception:
        kind = ""
    if "v7" in kind and batch % 2 == 0 and (batch // 2) % 8 == 0:
        return batch // 2
    return batch


def gru_pen_tanh(x, wxf, bxf, whf, bhf, wxb, bxb, whb, bhb, *, block_b=None):
    """x: (B, T, I); per-direction weights (in, 3H) / biases (1, 3H) (pre-transposed
    torch Linear params, gate column order [r, i, n]).  Returns (outs (B,T,2H), out (B,2H))."""
    B, T, I = x.shape
    H = whf.shape[0]
    H2, H3, H6 = 2 * H, 3 * H, 6 * H

    if block_b is None:
        block_b = _pick_block_b(B)
    block_b = min(block_b, B)
    assert B % block_b == 0 and block_b % 8 == 0, \
        "batch must be divisible by block_b and block_b by 8 (pad the batch otherwise)"
    nb = B // block_b

    f32 = jnp.float32
    zi = jnp.zeros((I, H3), f32)
    zh = jnp.zeros((H, H3), f32)
    # Block-diagonal x2h over the feature-concat input [x_t | x_{T-1-t}] (bf16, cast once).
    wx_p = _interleave_gate_cols(jnp.concatenate([wxf, zi], axis=0),
                                 jnp.concatenate([zi, wxb], axis=0), H).astype(jnp.bfloat16)
    # Block-diagonal h2h over the lane-packed state [h_f | h_b].
    wh_p = _interleave_gate_cols(jnp.concatenate([whf, zh], axis=0),
                                 jnp.concatenate([zh, whb], axis=0), H).astype(jnp.bfloat16)
    bx_p = _interleave_gate_cols(bxf, bxb, H).astype(f32)
    bh_p = _interleave_gate_cols(bhf, bhb, H).astype(f32)
    # Fold r/i recurrent biases into the precomputed projection; bh_n is multiplied by
    # the reset gate and must stay in the per-step path.
    bx_fold = bx_p + jnp.concatenate([bh_p[:, :2 * H2], jnp.zeros((1, H2), f32)], axis=1)
    bhn = bh_p[:, 2 * H2:]

    # Time-major x with the backward direction's time reversal folded into a feature
    # concat: row t is [x_t | x_{T-1-t}]  -> (T, B, 2I).
    x_t = jnp.transpose(x, (1, 0, 2))
    x2 = jnp.concatenate([x_t, x_t[::-1]], axis=-1)

    outs_t = pl.pallas_call(
        _gru_pen_tanh_kernel,
        out_shape=jax.ShapeDtypeStruct((T, B, H2), x.dtype),
        grid=(nb,),
        in_specs=[
            pl.BlockSpec((T, block_b, 2 * I), lambda b: (0, b, 0)),   # x2 batch block
            pl.BlockSpec((2 * I, H6), lambda b: (0, 0)),              # packed x2h weight
            pl.BlockSpec((1, H6), lambda b: (0, 0)),                  # folded bias
            pl.BlockSpec((H2, H6), lambda b: (0, 0)),                 # packed h2h weight
            pl.BlockSpec((1, H2), lambda b: (0, 0)),                  # bh_n
        ],
        out_specs=pl.BlockSpec((T, block_b, H2), lambda b: (0, b, 0)),
        scratch_shapes=[pltpu.VMEM((T, block_b, H6), jnp.float32)],
        compiler_params=pltpu.CompilerParams(
            dimension_semantics=("parallel",),
            # Scratch + weights are only a few hundred KiB here; set
            # vmem_limit_bytes (and/or bf16 scratch) for large T*H on v7x's 64 MiB VMEM.
        ),
    )(x2, wx_p, bx_fold, wh_p, bhn)

    outs = jnp.transpose(outs_t, (1, 0, 2))   # (B, T, 2H), torch layout
    out = outs[:, -1, :]                      # torch: outs[-1].squeeze(); B>1 -> (B, 2H)
    return outs, out


def _reference(x, wxf, bxf, whf, bhf, wxb, bxb, whb, bhb):
    """Pure-JAX mirror of the PyTorch forward (high-precision matmuls, per-direction cells)."""
    B, T, I = x.shape
    H = whf.shape[0]
    hp = lax.Precision.HIGHEST

    def cell(xt, h, wx, bx, wh, bh):
        gx = jnp.dot(xt, wx, precision=hp) + bx
        gh = jnp.dot(h, wh, precision=hp) + bh
        i_r, i_i, i_n = jnp.split(gx, 3, axis=1)
        h_r, h_i, h_n = jnp.split(gh, 3, axis=1)
        r = _penalized_tanh(i_r + h_r)
        z = _penalized_tanh(i_i + h_i)
        n = _penalized_tanh(i_n + r * h_n)
        return n + z * (h - n)

    h_f = jnp.zeros((B, H), x.dtype)
    h_b = jnp.zeros((B, H), x.dtype)
    outs = []
    for t in range(T):
        h_f = cell(x[:, t, :], h_f, wxf, bxf, whf, bhf)
        h_b = cell(x[:, T - 1 - t, :], h_b, wxb, bxb, whb, bhb)
        outs.append(jnp.concatenate([h_f, h_b], axis=1))
    outs = jnp.stack(outs, axis=1)                 # (B, T, 2H)
    return outs, outs[:, -1, :]


if __name__ == "__main__":
    # batch=16, seq=8, input_dim=64, hidden_dim=64: lane-full 2H=128 packed state,
    # sublane-full batch blocks, and enough batch for 2 parallel blocks on v7x.
    B, T, I, H = 16, 8, 64, 64
    std = 1.0 / math.sqrt(H)

    key = jax.random.PRNGKey(0)
    kx, *kw = jax.random.split(key, 10)

    def u(k, shape):
        return jax.random.uniform(k, shape, jnp.float32, -std, std)

    x = jax.random.normal(kx, (B, T, I), dtype=jnp.float32)
    wxf, bxf = u(kw[0], (I, 3 * H)), u(kw[1], (1, 3 * H))
    whf, bhf = u(kw[2], (H, 3 * H)), u(kw[3], (1, 3 * H))
    wxb, bxb = u(kw[4], (I, 3 * H)), u(kw[5], (1, 3 * H))
    whb, bhb = u(kw[6], (H, 3 * H)), u(kw[7], (1, 3 * H))

    outs, out = gru_pen_tanh(x, wxf, bxf, whf, bhf, wxb, bxb, whb, bhb)
    jax.block_until_ready((outs, out))

    r_outs, r_out = _reference(x, wxf, bxf, whf, bhf, wxb, bxb, whb, bhb)
    assert outs.shape == (B, T, 2 * H) and out.shape == (B, 2 * H)
    # Kernel matmuls run with bf16 operands / f32 accumulate (per perf review);
    # outputs are tanh-bounded O(1), so 1e-2 covers the compounded rounding at T=8.
    err = float(jnp.max(jnp.abs(outs - r_outs)))
    assert jnp.allclose(outs, r_outs, atol=1e-2, rtol=1e-2), err
    assert jnp.allclose(out, r_out, atol=1e-2, rtol=1e-2)

    print("KERNEL_OK")
</pallas_src>

<mosaic_0001>
module attributes {stable_mosaic.version = 11 : i64} {
  func.func @_gru_pen_tanh_kernel(%arg0: i32, %arg1: memref<8x16x128xf32, #tpu.memory_space<vmem>>, %arg2: memref<128x384xbf16, #tpu.memory_space<vmem>>, %arg3: memref<1x384xf32, #tpu.memory_space<vmem>>, %arg4: memref<128x384xbf16, #tpu.memory_space<vmem>>, %arg5: memref<1x128xf32, #tpu.memory_space<vmem>>, %arg6: memref<8x16x128xf32, #tpu.memory_space<vmem>>, %arg7: memref<8x16x384xf32, #tpu.memory_space<vmem>>) attributes {dimension_semantics = [#tpu.dimension_semantics<parallel>], iteration_bounds = array<i64: 1>, scalar_prefetch = 0 : i64, scratch_operands = 1 : i64, tpu.core_type = #tpu.core_type<tc>, window_params = [{transform_indices = @transform_0, window_bounds = array<i64: 8, 16, 128>}, {pipeline_mode = #tpu.pipeline_mode<synchronous>, transform_indices = @transform_1, window_bounds = array<i64: 128, 384>}, {pipeline_mode = #tpu.pipeline_mode<synchronous>, transform_indices = @transform_2, window_bounds = array<i64: 1, 384>}, {pipeline_mode = #tpu.pipeline_mode<synchronous>, transform_indices = @transform_3, window_bounds = array<i64: 128, 384>}, {pipeline_mode = #tpu.pipeline_mode<synchronous>, transform_indices = @transform_4, window_bounds = array<i64: 1, 128>}, {transform_indices = @transform_5, window_bounds = array<i64: 8, 16, 128>}]} {
    %c0 = arith.constant 0 : index
    %c0_0 = arith.constant 0 : index
    %c0_1 = arith.constant 0 : index
    %0 = vector.load %arg1[%c0, %c0_0, %c0_1] : memref<8x16x128xf32, #tpu.memory_space<vmem>>, vector<8x16x128xf32>
    %1 = vector.shape_cast %0 : vector<8x16x128xf32> to vector<128x128xf32>
    %2 = arith.truncf %1 : vector<128x128xf32> to vector<128x128xbf16>
    %c0_2 = arith.constant 0 : index
    %c0_3 = arith.constant 0 : index
    %3 = vector.load %arg2[%c0_2, %c0_3] : memref<128x384xbf16, #tpu.memory_space<vmem>>, vector<128x384xbf16>
    %cst = arith.constant dense<0.000000e+00> : vector<128x384xf32>
    %4 = tpu.matmul %2, %3, %cst {dimension_numbers = #tpu.dot_dimension_numbers<[1], [0], [0], [1], [0, 0, 1, 1], [], []>} : vector<128x128xbf16>, vector<128x384xbf16>, vector<128x384xf32> -> vector<128x384xf32>
    %c0_4 = arith.constant 0 : index
    %c0_5 = arith.constant 0 : index
    %5 = vector.load %arg3[%c0_4, %c0_5] : memref<1x384xf32, #tpu.memory_space<vmem>>, vector<1x384xf32>
    %6 = vector.broadcast %5 : vector<1x384xf32> to vector<128x384xf32>
    %7 = arith.addf %4, %6 : vector<128x384xf32>
    %8 = vector.shape_cast %7 : vector<128x384xf32> to vector<8x16x384xf32>
    %c0_6 = arith.constant 0 : index
    %c0_7 = arith.constant 0 : index
    %c0_8 = arith.constant 0 : index
    %9 = vector.load %arg7[%c0_6, %c0_7, %c0_8] : memref<8x16x384xf32, #tpu.memory_space<vmem>>, vector<8x16x384xf32>
    tpu.vector_store %arg7[%c0_6, %c0_7, %c0_8], %8 {strides = array<i32>} : memref<8x16x384xf32, #tpu.memory_space<vmem>>, vector<8x16x384xf32>,
    %c0_9 = arith.constant 0 : index
    %c0_10 = arith.constant 0 : index
    %10 = vector.load %arg5[%c0_9, %c0_10] : memref<1x128xf32, #tpu.memory_space<vmem>>, vector<1x128xf32>
    %11 = vector.shape_cast %10 : vector<1x128xf32> to vector<1x128xf32>
    %12 = vector.broadcast %11 : vector<1x128xf32> to vector<16x128xf32>
    %cst_11 = arith.constant 0.000000e+00 : f32
    %13 = vector.broadcast %cst_11 : f32 to vector<16x128xf32>
    %c0_12 = arith.constant 0 : index
    %c0_13 = arith.constant 0 : index
    %c0_14 = arith.constant 0 : index
    %14 = vector.load %arg7[%c0_12, %c0_13, %c0_14] : memref<8x16x384xf32, #tpu.memory_space<vmem>>, vector<1x16x384xf32>
    %15 = vector.shape_cast %14 : vector<1x16x384xf32> to vector<16x384xf32>
    %16 = arith.truncf %13 : vector<16x128xf32> to vector<16x128xbf16>
    %c0_15 = arith.constant 0 : index
    %c0_16 = arith.constant 0 : index
    %17 = vector.load %arg4[%c0_15, %c0_16] : memref<128x384xbf16, #tpu.memory_space<vmem>>, vector<128x384xbf16>
    %cst_17 = arith.constant dense<0.000000e+00> : vector<16x384xf32>
    %18 = tpu.matmul %16, %17, %cst_17 {dimension_numbers = #tpu.dot_dimension_numbers<[1], [0], [0], [1], [0, 0, 1, 1], [], []>} : vector<16x128xbf16>, vector<128x384xbf16>, vector<16x384xf32> -> vector<16x384xf32>
    %19 = vector.extract_strided_slice %15 {offsets = [0, 0], sizes = [16, 128], strides = [1, 1]} : vector<16x384xf32> to vector<16x128xf32>
    %20 = vector.extract_strided_slice %18 {offsets = [0, 0], sizes = [16, 128], strides = [1, 1]} : vector<16x384xf32> to vector<16x128xf32>
    %21 = arith.addf %19, %20 : vector<16x128xf32>
    %22 = math.tanh %21 : vector<16x128xf32>
    %cst_18 = arith.constant 0.000000e+00 : f32
    %23 = vector.broadcast %cst_18 : f32 to vector<16x128xf32>
    %24 = arith.cmpf ogt, %21, %23 : vector<16x128xf32>
    %cst_19 = arith.constant 2.500000e-01 : f32
    %25 = vector.broadcast %cst_19 : f32 to vector<16x128xf32>
    %26 = arith.mulf %25, %22 : vector<16x128xf32>
    %27 = arith.select %24, %22, %26 : vector<16x128xi1>, vector<16x128xf32>
    %28 = vector.extract_strided_slice %15 {offsets = [0, 128], sizes = [16, 128], strides = [1, 1]} : vector<16x384xf32> to vector<16x128xf32>
    %29 = vector.extract_strided_slice %18 {offsets = [0, 128], sizes = [16, 128], strides = [1, 1]} : vector<16x384xf32> to vector<16x128xf32>
    %30 = arith.addf %28, %29 : vector<16x128xf32>
    %31 = math.tanh %30 : vector<16x128xf32>
    %cst_20 = arith.constant 0.000000e+00 : f32
    %32 = vector.broadcast %cst_20 : f32 to vector<16x128xf32>
    %33 = arith.cmpf ogt, %30, %32 : vector<16x128xf32>
    %cst_21 = arith.constant 2.500000e-01 : f32
    %34 = vector.broadcast %cst_21 : f32 to vector<16x128xf32>
    %35 = arith.mulf %34, %31 : vector<16x128xf32>
    %36 = arith.select %33, %31, %35 : vector<16x128xi1>, vector<16x128xf32>
    %37 = vector.extract_strided_slice %15 {offsets = [0, 256], sizes = [16, 128], strides = [1, 1]} : vector<16x384xf32> to vector<16x128xf32>
    %38 = vector.extract_strided_slice %18 {offsets = [0, 256], sizes = [16, 128], strides = [1, 1]} : vector<16x384xf32> to vector<16x128xf32>
    %39 = arith.addf %38, %12 : vector<16x128xf32>
    %40 = arith.mulf %27, %39 : vector<16x128xf32>
    %41 = arith.addf %37, %40 : vector<16x128xf32>
    %42 = math.tanh %41 : vector<16x128xf32>
    %cst_22 = arith.constant 0.000000e+00 : f32
    %43 = vector.broadcast %cst_22 : f32 to vector<16x128xf32>
    %44 = arith.cmpf ogt, %41, %43 : vector<16x128xf32>
    %cst_23 = arith.constant 2.500000e-01 : f32
    %45 = vector.broadcast %cst_23 : f32 to vector<16x128xf32>
    %46 = arith.mulf %45, %42 : vector<16x128xf32>
    %47 = arith.select %44, %42, %46 : vector<16x128xi1>, vector<16x128xf32>
    %48 = arith.subf %13, %47 : vector<16x128xf32>
    %49 = arith.mulf %36, %48 : vector<16x128xf32>
    %50 = arith.addf %47, %49 : vector<16x128xf32>
    %c0_24 = arith.constant 0 : index
    %c0_25 = arith.constant 0 : index
    %c0_26 = arith.constant 0 : index
    %51 = vector.load %arg6[%c0_24, %c0_25, %c0_26] : memref<8x16x128xf32, #tpu.memory_space<vmem>>, vector<1x16x128xf32>
    %52 = vector.shape_cast %51 : vector<1x16x128xf32> to vector<16x128xf32>
    %53 = vector.shape_cast %50 : vector<16x128xf32> to vector<1x16x128xf32>
    tpu.vector_store %arg6[%c0_24, %c0_25, %c0_26], %53 {strides = array<i32>} : memref<8x16x128xf32, #tpu.memory_space<vmem>>, vector<1x16x128xf32>,
    %c1 = arith.constant 1 : index
    %c0_27 = arith.constant 0 : index
    %c0_28 = arith.constant 0 : index
    %54 = vector.load %arg7[%c1, %c0_27, %c0_28] : memref<8x16x384xf32, #tpu.memory_space<vmem>>, vector<1x16x384xf32>
    %55 = vector.shape_cast %54 : vector<1x16x384xf32> to vector<16x384xf32>
    %56 = arith.truncf %50 : vector<16x128xf32> to vector<16x128xbf16>
    %c0_29 = arith.constant 0 : index
    %c0_30 = arith.constant 0 : index
    %57 = vector.load %arg4[%c0_29, %c0_30] : memref<128x384xbf16, #tpu.memory_space<vmem>>, vector<128x384xbf16>
    %cst_31 = arith.constant dense<0.000000e+00> : vector<16x384xf32>
    %58 = tpu.matmul %56, %57, %cst_31 {dimension_numbers = #tpu.dot_dimension_numbers<[1], [0], [0], [1], [0, 0, 1, 1], [], []>} : vector<16x128xbf16>, vector<128x384xbf16>, vector<16x384xf32> -> vector<16x384xf32>
    %59 = vector.extract_strided_slice %55 {offsets = [0, 0], sizes = [16, 128], strides = [1, 1]} : vector<16x384xf32> to vector<16x128xf32>
    %60 = vector.extract_strided_slice %58 {offsets = [0, 0], sizes = [16, 128], strides = [1, 1]} : vector<16x384xf32> to vector<16x128xf32>
    %61 = arith.addf %59, %60 : vector<16x128xf32>
    %62 = math.tanh %61 : vector<16x128xf32>
    %cst_32 = arith.constant 0.000000e+00 : f32
    %63 = vector.broadcast %cst_32 : f32 to vector<16x128xf32>
    %64 = arith.cmpf ogt, %61, %63 : vector<16x128xf32>
    %cst_33 = arith.constant 2.500000e-01 : f32
    %65 = vector.broadcast %cst_33 : f32 to vector<16x128xf32>
    %66 = arith.mulf %65, %62 : vector<16x128xf32>
    %67 = arith.select %64, %62, %66 : vector<16x128xi1>, vector<16x128xf32>
    %68 = vector.extract_strided_slice %55 {offsets = [0, 128], sizes = [16, 128], strides = [1, 1]} : vector<16x384xf32> to vector<16x128xf32>
    %69 = vector.extract_strided_slice %58 {offsets = [0, 128], sizes = [16, 128], strides = [1, 1]} : vector<16x384xf32> to vector<16x128xf32>
    %70 = arith.addf %68, %69 : vector<16x128xf32>
    %71 = math.tanh %70 : vector<16x128xf32>
    %cst_34 = arith.constant 0.000000e+00 : f32
    %72 = vector.broadcast %cst_34 : f32 to vector<16x128xf32>
    %73 = arith.cmpf ogt, %70, %72 : vector<16x128xf32>
    %cst_35 = arith.constant 2.500000e-01 : f32
    %74 = vector.broadcast %cst_35 : f32 to vector<16x128xf32>
    %75 = arith.mulf %74, %71 : vector<16x128xf32>
    %76 = arith.select %73, %71, %75 : vector<16x128xi1>, vector<16x128xf32>
    %77 = vector.extract_strided_slice %55 {offsets = [0, 256], sizes = [16, 128], strides = [1, 1]} : vector<16x384xf32> to vector<16x128xf32>
    %78 = vector.extract_strided_slice %58 {offsets = [0, 256], sizes = [16, 128], strides = [1, 1]} : vector<16x384xf32> to vector<16x128xf32>
    %79 = arith.addf %78, %12 : vector<16x128xf32>
    %80 = arith.mulf %67, %79 : vector<16x128xf32>
    %81 = arith.addf %77, %80 : vector<16x128xf32>
    %82 = math.tanh %81 : vector<16x128xf32>
    %cst_36 = arith.constant 0.000000e+00 : f32
    %83 = vector.broadcast %cst_36 : f32 to vector<16x128xf32>
    %84 = arith.cmpf ogt, %81, %83 : vector<16x128xf32>
    %cst_37 = arith.constant 2.500000e-01 : f32
    %85 = vector.broadcast %cst_37 : f32 to vector<16x128xf32>
    %86 = arith.mulf %85, %82 : vector<16x128xf32>
    %87 = arith.select %84, %82, %86 : vector<16x128xi1>, vector<16x128xf32>
    %88 = arith.subf %50, %87 : vector<16x128xf32>
    %89 = arith.mulf %76, %88 : vector<16x128xf32>
    %90 = arith.addf %87, %89 : vector<16x128xf32>
    %c1_38 = arith.constant 1 : index
    %c0_39 = arith.constant 0 : index
    %c0_40 = arith.constant 0 : index
    %91 = vector.load %arg6[%c1_38, %c0_39, %c0_40] : memref<8x16x128xf32, #tpu.memory_space<vmem>>, vector<1x16x128xf32>
    %92 = vector.shape_cast %91 : vector<1x16x128xf32> to vector<16x128xf32>
    %93 = vector.shape_cast %90 : vector<16x128xf32> to vector<1x16x128xf32>
    tpu.vector_store %arg6[%c1_38, %c0_39, %c0_40], %93 {strides = array<i32>} : memref<8x16x128xf32, #tpu.memory_space<vmem>>, vector<1x16x128xf32>,
    %c2 = arith.constant 2 : index
    %c0_41 = arith.constant 0 : index
    %c0_42 = arith.constant 0 : index
    %94 = vector.load %arg7[%c2, %c0_41, %c0_42] : memref<8x16x384xf32, #tpu.memory_space<vmem>>, vector<1x16x384xf32>
    %95 = vector.shape_cast %94 : vector<1x16x384xf32> to vector<16x384xf32>
    %96 = arith.truncf %90 : vector<16x128xf32> to vector<16x128xbf16>
    %c0_43 = arith.constant 0 : index
    %c0_44 = arith.constant 0 : index
    %97 = vector.load %arg4[%c0_43, %c0_44] : memref<128x384xbf16, #tpu.memory_space<vmem>>, vector<128x384xbf16>
    %cst_45 = arith.constant dense<0.000000e+00> : vector<16x384xf32>
    %98 = tpu.matmul %96, %97, %cst_45 {dimension_numbers = #tpu.dot_dimension_numbers<[1], [0], [0], [1], [0, 0, 1, 1], [], []>} : vector<16x128xbf16>, vector<128x384xbf16>, vector<16x384xf32> -> vector<16x384xf32>
    %99 = vector.extract_strided_slice %95 {offsets = [0, 0], sizes = [16, 128], strides = [1, 1]} : vector<16x384xf32> to vector<16x128xf32>
    %100 = vector.extract_strided_slice %98 {offsets = [0, 0], sizes = [16, 128], strides = [1, 1]} : vector<16x384xf32> to vector<16x128xf32>
    %101 = arith.addf %99, %100 : vector<16x128xf32>
    %102 = math.tanh %101 : vector<16x128xf32>
    %cst_46 = arith.constant 0.000000e+00 : f32
    %103 = vector.broadcast %cst_46 : f32 to vector<16x128xf32>
    %104 = arith.cmpf ogt, %101, %103 : vector<16x128xf32>
    %cst_47 = arith.constant 2.500000e-01 : f32
    %105 = vector.broadcast %cst_47 : f32 to vector<16x128xf32>
    %106 = arith.mulf %105, %102 : vector<16x128xf32>
    %107 = arith.select %104, %102, %106 : vector<16x128xi1>, vector<16x128xf32>
    %108 = vector.extract_strided_slice %95 {offsets = [0, 128], sizes = [16, 128], strides = [1, 1]} : vector<16x384xf32> to vector<16x128xf32>
    %109 = vector.extract_strided_slice %98 {offsets = [0, 128], sizes = [16, 128], strides = [1, 1]} : vector<16x384xf32> to vector<16x128xf32>
    %110 = arith.addf %108, %109 : vector<16x128xf32>
    %111 = math.tanh %110 : vector<16x128xf32>
    %cst_48 = arith.constant 0.000000e+00 : f32
    %112 = vector.broadcast %cst_48 : f32 to vector<16x128xf32>
    %113 = arith.cmpf ogt, %110, %112 : vector<16x128xf32>
    %cst_49 = arith.constant 2.500000e-01 : f32
    %114 = vector.broadcast %cst_49 : f32 to vector<16x128xf32>
    %115 = arith.mulf %114, %111 : vector<16x128xf32>
    %116 = arith.select %113, %111, %115 : vector<16x128xi1>, vector<16x128xf32>
    %117 = vector.extract_strided_slice %95 {offsets = [0, 256], sizes = [16, 128], strides = [1, 1]} : vector<16x384xf32> to vector<16x128xf32>
    %118 = vector.extract_strided_slice %98 {offsets = [0, 256], sizes = [16, 128], strides = [1, 1]} : vector<16x384xf32> to vector<16x128xf32>
    %119 = arith.addf %118, %12 : vector<16x128xf32>
    %120 = arith.mulf %107, %119 : vector<16x128xf32>
    %121 = arith.addf %117, %120 : vector<16x128xf32>
    %122 = math.tanh %121 : vector<16x128xf32>
    %cst_50 = arith.constant 0.000000e+00 : f32
    %123 = vector.broadcast %cst_50 : f32 to vector<16x128xf32>
    %124 = arith.cmpf ogt, %121, %123 : vector<16x128xf32>
    %cst_51 = arith.constant 2.500000e-01 : f32
    %125 = vector.broadcast %cst_51 : f32 to vector<16x128xf32>
    %126 = arith.mulf %125, %122 : vector<16x128xf32>
    %127 = arith.select %124, %122, %126 : vector<16x128xi1>, vector<16x128xf32>
    %128 = arith.subf %90, %127 : vector<16x128xf32>
    %129 = arith.mulf %116, %128 : vector<16x128xf32>
    %130 = arith.addf %127, %129 : vector<16x128xf32>
    %c2_52 = arith.constant 2 : index
    %c0_53 = arith.constant 0 : index
    %c0_54 = arith.constant 0 : index
    %131 = vector.load %arg6[%c2_52, %c0_53, %c0_54] : memref<8x16x128xf32, #tpu.memory_space<vmem>>, vector<1x16x128xf32>
    %132 = vector.shape_cast %131 : vector<1x16x128xf32> to vector<16x128xf32>
    %133 = vector.shape_cast %130 : vector<16x128xf32> to vector<1x16x128xf32>
    tpu.vector_store %arg6[%c2_52, %c0_53, %c0_54], %133 {strides = array<i32>} : memref<8x16x128xf32, #tpu.memory_space<vmem>>, vector<1x16x128xf32>,
    %c3 = arith.constant 3 : index
    %c0_55 = arith.constant 0 : index
    %c0_56 = arith.constant 0 : index
    %134 = vector.load %arg7[%c3, %c0_55, %c0_56] : memref<8x16x384xf32, #tpu.memory_space<vmem>>, vector<1x16x384xf32>
    %135 = vector.shape_cast %134 : vector<1x16x384xf32> to vector<16x384xf32>
    %136 = arith.truncf %130 : vector<16x128xf32> to vector<16x128xbf16>
    %c0_57 = arith.constant 0 : index
    %c0_58 = arith.constant 0 : index
    %137 = vector.load %arg4[%c0_57, %c0_58] : memref<128x384xbf16, #tpu.memory_space<vmem>>, vector<128x384xbf16>
    %cst_59 = arith.constant dense<0.000000e+00> : vector<16x384xf32>
    %138 = tpu.matmul %136, %137, %cst_59 {dimension_numbers = #tpu.dot_dimension_numbers<[1], [0], [0], [1], [0, 0, 1, 1], [], []>} : vector<16x128xbf16>, vector<128x384xbf16>, vector<16x384xf32> -> vector<16x384xf32>
    %139 = vector.extract_strided_slice %135 {offsets = [0, 0], sizes = [16, 128], strides = [1, 1]} : vector<16x384xf32> to vector<16x128xf32>
    %140 = vector.extract_strided_slice %138 {offsets = [0, 0], sizes = [16, 128], strides = [1, 1]} : vector<16x384xf32> to vector<16x128xf32>
    %141 = arith.addf %139, %140 : vector<16x128xf32>
    %142 = math.tanh %141 : vector<16x128xf32>
    %cst_60 = arith.constant 0.000000e+00 : f32
    %143 = vector.broadcast %cst_60 : f32 to vector<16x128xf32>
    %144 = arith.cmpf ogt, %141, %143 : vector<16x128xf32>
    %cst_61 = arith.constant 2.500000e-01 : f32
    %145 = vector.broadcast %cst_61 : f32 to vector<16x128xf32>
    %146 = arith.mulf %145, %142 : vector<16x128xf32>
    %147 = arith.select %144, %142, %146 : vector<16x128xi1>, vector<16x128xf32>
    %148 = vector.extract_strided_slice %135 {offsets = [0, 128], sizes = [16, 128], strides = [1, 1]} : vector<16x384xf32> to vector<16x128xf32>
    %149 = vector.extract_strided_slice %138 {offsets = [0, 128], sizes = [16, 128], strides = [1, 1]} : vector<16x384xf32> to vector<16x128xf32>
    %150 = arith.addf %148, %149 : vector<16x128xf32>
    %151 = math.tanh %150 : vector<16x128xf32>
    %cst_62 = arith.constant 0.000000e+00 : f32
    %152 = vector.broadcast %cst_62 : f32 to vector<16x128xf32>
    %153 = arith.cmpf ogt, %150, %152 : vector<16x128xf32>
    %cst_63 = arith.constant 2.500000e-01 : f32
    %154 = vector.broadcast %cst_63 : f32 to vector<16x128xf32>
    %155 = arith.mulf %154, %151 : vector<16x128xf32>
    %156 = arith.select %153, %151, %155 : vector<16x128xi1>, vector<16x128xf32>
    %157 = vector.extract_strided_slice %135 {offsets = [0, 256], sizes = [16, 128], strides = [1, 1]} : vector<16x384xf32> to vector<16x128xf32>
    %158 = vector.extract_strided_slice %138 {offsets = [0, 256], sizes = [16, 128], strides = [1, 1]} : vector<16x384xf32> to vector<16x128xf32>
    %159 = arith.addf %158, %12 : vector<16x128xf32>
    %160 = arith.mulf %147, %159 : vector<16x128xf32>
    %161 = arith.addf %157, %160 : vector<16x128xf32>
    %162 = math.tanh %161 : vector<16x128xf32>
    %cst_64 = arith.constant 0.000000e+00 : f32
    %163 = vector.broadcast %cst_64 : f32 to vector<16x128xf32>
    %164 = arith.cmpf ogt, %161, %163 : vector<16x128xf32>
    %cst_65 = arith.constant 2.500000e-01 : f32
    %165 = vector.broadcast %cst_65 : f32 to vector<16x128xf32>
    %166 = arith.mulf %165, %162 : vector<16x128xf32>
    %167 = arith.select %164, %162, %166 : vector<16x128xi1>, vector<16x128xf32>
    %168 = arith.subf %130, %167 : vector<16x128xf32>
    %169 = arith.mulf %156, %168 : vector<16x128xf32>
    %170 = arith.addf %167, %169 : vector<16x128xf32>
    %c3_66 = arith.constant 3 : index
    %c0_67 = arith.constant 0 : index
    %c0_68 = arith.constant 0 : index
    %171 = vector.load %arg6[%c3_66, %c0_67, %c0_68] : memref<8x16x128xf32, #tpu.memory_space<vmem>>, vector<1x16x128xf32>
    %172 = vector.shape_cast %171 : vector<1x16x128xf32> to vector<16x128xf32>
    %173 = vector.shape_cast %170 : vector<16x128xf32> to vector<1x16x128xf32>
    tpu.vector_store %arg6[%c3_66, %c0_67, %c0_68], %173 {strides = array<i32>} : memref<8x16x128xf32, #tpu.memory_space<vmem>>, vector<1x16x128xf32>,
    %c4 = arith.constant 4 : index
    %c0_69 = arith.constant 0 : index
    %c0_70 = arith.constant 0 : index
    %174 = vector.load %arg7[%c4, %c0_69, %c0_70] : memref<8x16x384xf32, #tpu.memory_space<vmem>>, vector<1x16x384xf32>
    %175 = vector.shape_cast %174 : vector<1x16x384xf32> to vector<16x384xf32>
    %176 = arith.truncf %170 : vector<16x128xf32> to vector<16x128xbf16>
    %c0_71 = arith.constant 0 : index
    %c0_72 = arith.constant 0 : index
    %177 = vector.load %arg4[%c0_71, %c0_72] : memref<128x384xbf16, #tpu.memory_space<vmem>>, vector<128x384xbf16>
    %cst_73 = arith.constant dense<0.000000e+00> : vector<16x384xf32>
    %178 = tpu.matmul %176, %177, %cst_73 {dimension_numbers = #tpu.dot_dimension_numbers<[1], [0], [0], [1], [0, 0, 1, 1], [], []>} : vector<16x128xbf16>, vector<128x384xbf16>, vector<16x384xf32> -> vector<16x384xf32>
    %179 = vector.extract_strided_slice %175 {offsets = [0, 0], sizes = [16, 128], strides = [1, 1]} : vector<16x384xf32> to vector<16x128xf32>
    %180 = vector.extract_strided_slice %178 {offsets = [0, 0], sizes = [16, 128], strides = [1, 1]} : vector<16x384xf32> to vector<16x128xf32>
    %181 = arith.addf %179, %180 : vector<16x128xf32>
    %182 = math.tanh %181 : vector<16x128xf32>
    %cst_74 = arith.constant 0.000000e+00 : f32
    %183 = vector.broadcast %cst_74 : f32 to vector<16x128xf32>
    %184 = arith.cmpf ogt, %181, %183 : vector<16x128xf32>
    %cst_75 = arith.constant 2.500000e-01 : f32
    %185 = vector.broadcast %cst_75 : f32 to vector<16x128xf32>
    %186 = arith.mulf %185, %182 : vector<16x128xf32>
    %187 = arith.select %184, %182, %186 : vector<16x128xi1>, vector<16x128xf32>
    %188 = vector.extract_strided_slice %175 {offsets = [0, 128], sizes = [16, 128], strides = [1, 1]} : vector<16x384xf32> to vector<16x128xf32>
    %189 = vector.extract_strided_slice %178 {offsets = [0, 128], sizes = [16, 128], strides = [1, 1]} : vector<16x384xf32> to vector<16x128xf32>
    %190 = arith.addf %188, %189 : vector<16x128xf32>
    %191 = math.tanh %190 : vector<16x128xf32>
    %cst_76 = arith.constant 0.000000e+00 : f32
    %192 = vector.broadcast %cst_76 : f32 to vector<16x128xf32>
    %193 = arith.cmpf ogt, %190, %192 : vector<16x128xf32>
    %cst_77 = arith.constant 2.500000e-01 : f32
    %194 = vector.broadcast %cst_77 : f32 to vector<16x128xf32>
    %195 = arith.mulf %194, %191 : vector<16x128xf32>
    %196 = arith.select %193, %191, %195 : vector<16x128xi1>, vector<16x128xf32>
    %197 = vector.extract_strided_slice %175 {offsets = [0, 256], sizes = [16, 128], strides = [1, 1]} : vector<16x384xf32> to vector<16x128xf32>
    %198 = vector.extract_strided_slice %178 {offsets = [0, 256], sizes = [16, 128], strides = [1, 1]} : vector<16x384xf32> to vector<16x128xf32>
    %199 = arith.addf %198, %12 : vector<16x128xf32>
    %200 = arith.mulf %187, %199 : vector<16x128xf32>
    %201 = arith.addf %197, %200 : vector<16x128xf32>
    %202 = math.tanh %201 : vector<16x128xf32>
    %cst_78 = arith.constant 0.000000e+00 : f32
    %203 = vector.broadcast %cst_78 : f32 to vector<16x128xf32>
    %204 = arith.cmpf ogt, %201, %203 : vector<16x128xf32>
    %cst_79 = arith.constant 2.500000e-01 : f32
    %205 = vector.broadcast %cst_79 : f32 to vector<16x128xf32>
    %206 = arith.mulf %205, %202 : vector<16x128xf32>
    %207 = arith.select %204, %202, %206 : vector<16x128xi1>, vector<16x128xf32>
    %208 = arith.subf %170, %207 : vector<16x128xf32>
    %209 = arith.mulf %196, %208 : vector<16x128xf32>
    %210 = arith.addf %207, %209 : vector<16x128xf32>
    %c4_80 = arith.constant 4 : index
    %c0_81 = arith.constant 0 : index
    %c0_82 = arith.constant 0 : index
    %211 = vector.load %arg6[%c4_80, %c0_81, %c0_82] : memref<8x16x128xf32, #tpu.memory_space<vmem>>, vector<1x16x128xf32>
    %212 = vector.shape_cast %211 : vector<1x16x128xf32> to vector<16x128xf32>
    %213 = vector.shape_cast %210 : vector<16x128xf32> to vector<1x16x128xf32>
    tpu.vector_store %arg6[%c4_80, %c0_81, %c0_82], %213 {strides = array<i32>} : memref<8x16x128xf32, #tpu.memory_space<vmem>>, vector<1x16x128xf32>,
    %c5 = arith.constant 5 : index
    %c0_83 = arith.constant 0 : index
    %c0_84 = arith.constant 0 : index
    %214 = vector.load %arg7[%c5, %c0_83, %c0_84] : memref<8x16x384xf32, #tpu.memory_space<vmem>>, vector<1x16x384xf32>
    %215 = vector.shape_cast %214 : vector<1x16x384xf32> to vector<16x384xf32>
    %216 = arith.truncf %210 : vector<16x128xf32> to vector<16x128xbf16>
    %c0_85 = arith.constant 0 : index
    %c0_86 = arith.constant 0 : index
    %217 = vector.load %arg4[%c0_85, %c0_86] : memref<128x384xbf16, #tpu.memory_space<vmem>>, vector<128x384xbf16>
    %cst_87 = arith.constant dense<0.000000e+00> : vector<16x384xf32>
    %218 = tpu.matmul %216, %217, %cst_87 {dimension_numbers = #tpu.dot_dimension_numbers<[1], [0], [0], [1], [0, 0, 1, 1], [], []>} : vector<16x128xbf16>, vector<128x384xbf16>, vector<16x384xf32> -> vector<16x384xf32>
    %219 = vector.extract_strided_slice %215 {offsets = [0, 0], sizes = [16, 128], strides = [1, 1]} : vector<16x384xf32> to vector<16x128xf32>
    %220 = vector.extract_strided_slice %218 {offsets = [0, 0], sizes = [16, 128], strides = [1, 1]} : vector<16x384xf32> to vector<16x128xf32>
    %221 = arith.addf %219, %220 : vector<16x128xf32>
    %222 = math.tanh %221 : vector<16x128xf32>
    %cst_88 = arith.constant 0.000000e+00 : f32
    %223 = vector.broadcast %cst_88 : f32 to vector<16x128xf32>
    %224 = arith.cmpf ogt, %221, %223 : vector<16x128xf32>
    %cst_89 = arith.constant 2.500000e-01 : f32
    %225 = vector.broadcast %cst_89 : f32 to vector<16x128xf32>
    %226 = arith.mulf %225, %222 : vector<16x128xf32>
    %227 = arith.select %224, %222, %226 : vector<16x128xi1>, vector<16x128xf32>
    %228 = vector.extract_strided_slice %215 {offsets = [0, 128], sizes = [16, 128], strides = [1, 1]} : vector<16x384xf32> to vector<16x128xf32>
    %229 = vector.extract_strided_slice %218 {offsets = [0, 128], sizes = [16, 128], strides = [1, 1]} : vector<16x384xf32> to vector<16x128xf32>
    %230 = arith.addf %228, %229 : vector<16x128xf32>
    %231 = math.tanh %230 : vector<16x128xf32>
    %cst_90 = arith.constant 0.000000e+00 : f32
    %232 = vector.broadcast %cst_90 : f32 to vector<16x128xf32>
    %233 = arith.cmpf ogt, %230, %232 : vector<16x128xf32>
    %cst_91 = arith.constant 2.500000e-01 : f32
    %234 = vector.broadcast %cst_91 : f32 to vector<16x128xf32>
    %235 = arith.mulf %234, %231 : vector<16x128xf32>
    %236 = arith.select %233, %231, %235 : vector<16x128xi1>, vector<16x128xf32>
    %237 = vector.extract_strided_slice %215 {offsets = [0, 256], sizes = [16, 128], strides = [1, 1]} : vector<16x384xf32> to vector<16x128xf32>
    %238 = vector.extract_strided_slice %218 {offsets = [0, 256], sizes = [16, 128], strides = [1, 1]} : vector<16x384xf32> to vector<16x128xf32>
    %239 = arith.addf %238, %12 : vector<16x128xf32>
    %240 = arith.mulf %227, %239 : vector<16x128xf32>
    %241 = arith.addf %237, %240 : vector<16x128xf32>
    %242 = math.tanh %241 : vector<16x128xf32>
    %cst_92 = arith.constant 0.000000e+00 : f32
    %243 = vector.broadcast %cst_92 : f32 to vector<16x128xf32>
    %244 = arith.cmpf ogt, %241, %243 : vector<16x128xf32>
    %cst_93 = arith.constant 2.500000e-01 : f32
    %245 = vector.broadcast %cst_93 : f32 to vector<16x128xf32>
    %246 = arith.mulf %245, %242 : vector<16x128xf32>
    %247 = arith.select %244, %242, %246 : vector<16x128xi1>, vector<16x128xf32>
    %248 = arith.subf %210, %247 : vector<16x128xf32>
    %249 = arith.mulf %236, %248 : vector<16x128xf32>
    %250 = arith.addf %247, %249 : vector<16x128xf32>
    %c5_94 = arith.constant 5 : index
    %c0_95 = arith.constant 0 : index
    %c0_96 = arith.constant 0 : index
    %251 = vector.load %arg6[%c5_94, %c0_95, %c0_96] : memref<8x16x128xf32, #tpu.memory_space<vmem>>, vector<1x16x128xf32>
    %252 = vector.shape_cast %251 : vector<1x16x128xf32> to vector<16x128xf32>
    %253 = vector.shape_cast %250 : vector<16x128xf32> to vector<1x16x128xf32>
    tpu.vector_store %arg6[%c5_94, %c0_95, %c0_96], %253 {strides = array<i32>} : memref<8x16x128xf32, #tpu.memory_space<vmem>>, vector<1x16x128xf32>,
    %c6 = arith.constant 6 : index
    %c0_97 = arith.constant 0 : index
    %c0_98 = arith.constant 0 : index
    %254 = vector.load %arg7[%c6, %c0_97, %c0_98] : memref<8x16x384xf32, #tpu.memory_space<vmem>>, vector<1x16x384xf32>
    %255 = vector.shape_cast %254 : vector<1x16x384xf32> to vector<16x384xf32>
    %256 = arith.truncf %250 : vector<16x128xf32> to vector<16x128xbf16>
    %c0_99 = arith.constant 0 : index
    %c0_100 = arith.constant 0 : index
    %257 = vector.load %arg4[%c0_99, %c0_100] : memref<128x384xbf16, #tpu.memory_space<vmem>>, vector<128x384xbf16>
    %cst_101 = arith.constant dense<0.000000e+00> : vector<16x384xf32>
    %258 = tpu.matmul %256, %257, %cst_101 {dimension_numbers = #tpu.dot_dimension_numbers<[1], [0], [0], [1], [0, 0, 1, 1], [], []>} : vector<16x128xbf16>, vector<128x384xbf16>, vector<16x384xf32> -> vector<16x384xf32>
    %259 = vector.extract_strided_slice %255 {offsets = [0, 0], sizes = [16, 128], strides = [1, 1]} : vector<16x384xf32> to vector<16x128xf32>
    %260 = vector.extract_strided_slice %258 {offsets = [0, 0], sizes = [16, 128], strides = [1, 1]} : vector<16x384xf32> to vector<16x128xf32>
    %261 = arith.addf %259, %260 : vector<16x128xf32>
    %262 = math.tanh %261 : vector<16x128xf32>
    %cst_102 = arith.constant 0.000000e+00 : f32
    %263 = vector.broadcast %cst_102 : f32 to vector<16x128xf32>
    %264 = arith.cmpf ogt, %261, %263 : vector<16x128xf32>
    %cst_103 = arith.constant 2.500000e-01 : f32
    %265 = vector.broadcast %cst_103 : f32 to vector<16x128xf32>
    %266 = arith.mulf %265, %262 : vector<16x128xf32>
    %267 = arith.select %264, %262, %266 : vector<16x128xi1>, vector<16x128xf32>
    %268 = vector.extract_strided_slice %255 {offsets = [0, 128], sizes = [16, 128], strides = [1, 1]} : vector<16x384xf32> to vector<16x128xf32>
    %269 = vector.extract_strided_slice %258 {offsets = [0, 128], sizes = [16, 128], strides = [1, 1]} : vector<16x384xf32> to vector<16x128xf32>
    %270 = arith.addf %268, %269 : vector<16x128xf32>
    %271 = math.tanh %270 : vector<16x128xf32>
    %cst_104 = arith.constant 0.000000e+00 : f32
    %272 = vector.broadcast %cst_104 : f32 to vector<16x128xf32>
    %273 = arith.cmpf ogt, %270, %272 : vector<16x128xf32>
    %cst_105 = arith.constant 2.500000e-01 : f32
    %274 = vector.broadcast %cst_105 : f32 to vector<16x128xf32>
    %275 = arith.mulf %274, %271 : vector<16x128xf32>
    %276 = arith.select %273, %271, %275 : vector<16x128xi1>, vector<16x128xf32>
    %277 = vector.extract_strided_slice %255 {offsets = [0, 256], sizes = [16, 128], strides = [1, 1]} : vector<16x384xf32> to vector<16x128xf32>
    %278 = vector.extract_strided_slice %258 {offsets = [0, 256], sizes = [16, 128], strides = [1, 1]} : vector<16x384xf32> to vector<16x128xf32>
    %279 = arith.addf %278, %12 : vector<16x128xf32>
    %280 = arith.mulf %267, %279 : vector<16x128xf32>
    %281 = arith.addf %277, %280 : vector<16x128xf32>
    %282 = math.tanh %281 : vector<16x128xf32>
    %cst_106 = arith.constant 0.000000e+00 : f32
    %283 = vector.broadcast %cst_106 : f32 to vector<16x128xf32>
    %284 = arith.cmpf ogt, %281, %283 : vector<16x128xf32>
    %cst_107 = arith.constant 2.500000e-01 : f32
    %285 = vector.broadcast %cst_107 : f32 to vector<16x128xf32>
    %286 = arith.mulf %285, %282 : vector<16x128xf32>
    %287 = arith.select %284, %282, %286 : vector<16x128xi1>, vector<16x128xf32>
    %288 = arith.subf %250, %287 : vector<16x128xf32>
    %289 = arith.mulf %276, %288 : vector<16x128xf32>
    %290 = arith.addf %287, %289 : vector<16x128xf32>
    %c6_108 = arith.constant 6 : index
    %c0_109 = arith.constant 0 : index
    %c0_110 = arith.constant 0 : index
    %291 = vector.load %arg6[%c6_108, %c0_109, %c0_110] : memref<8x16x128xf32, #tpu.memory_space<vmem>>, vector<1x16x128xf32>
    %292 = vector.shape_cast %291 : vector<1x16x128xf32> to vector<16x128xf32>
    %293 = vector.shape_cast %290 : vector<16x128xf32> to vector<1x16x128xf32>
    tpu.vector_store %arg6[%c6_108, %c0_109, %c0_110], %293 {strides = array<i32>} : memref<8x16x128xf32, #tpu.memory_space<vmem>>, vector<1x16x128xf32>,
    %c7 = arith.constant 7 : index
    %c0_111 = arith.constant 0 : index
    %c0_112 = arith.constant 0 : index
    %294 = vector.load %arg7[%c7, %c0_111, %c0_112] : memref<8x16x384xf32, #tpu.memory_space<vmem>>, vector<1x16x384xf32>
    %295 = vector.shape_cast %294 : vector<1x16x384xf32> to vector<16x384xf32>
    %296 = arith.truncf %290 : vector<16x128xf32> to vector<16x128xbf16>
    %c0_113 = arith.constant 0 : index
    %c0_114 = arith.constant 0 : index
    %297 = vector.load %arg4[%c0_113, %c0_114] : memref<128x384xbf16, #tpu.memory_space<vmem>>, vector<128x384xbf16>
    %cst_115 = arith.constant dense<0.000000e+00> : vector<16x384xf32>
    %298 = tpu.matmul %296, %297, %cst_115 {dimension_numbers = #tpu.dot_dimension_numbers<[1], [0], [0], [1], [0, 0, 1, 1], [], []>} : vector<16x128xbf16>, vector<128x384xbf16>, vector<16x384xf32> -> vector<16x384xf32>
    %299 = vector.extract_strided_slice %295 {offsets = [0, 0], sizes = [16, 128], strides = [1, 1]} : vector<16x384xf32> to vector<16x128xf32>
    %300 = vector.extract_strided_slice %298 {offsets = [0, 0], sizes = [16, 128], strides = [1, 1]} : vector<16x384xf32> to vector<16x128xf32>
    %301 = arith.addf %299, %300 : vector<16x128xf32>
    %302 = math.tanh %301 : vector<16x128xf32>
    %cst_116 = arith.constant 0.000000e+00 : f32
    %303 = vector.broadcast %cst_116 : f32 to vector<16x128xf32>
    %304 = arith.cmpf ogt, %301, %303 : vector<16x128xf32>
    %cst_117 = arith.constant 2.500000e-01 : f32
    %305 = vector.broadcast %cst_117 : f32 to vector<16x128xf32>
    %306 = arith.mulf %305, %302 : vector<16x128xf32>
    %307 = arith.select %304, %302, %306 : vector<16x128xi1>, vector<16x128xf32>
    %308 = vector.extract_strided_slice %295 {offsets = [0, 128], sizes = [16, 128], strides = [1, 1]} : vector<16x384xf32> to vector<16x128xf32>
    %309 = vector.extract_strided_slice %298 {offsets = [0, 128], sizes = [16, 128], strides = [1, 1]} : vector<16x384xf32> to vector<16x128xf32>
    %310 = arith.addf %308, %309 : vector<16x128xf32>
    %311 = math.tanh %310 : vector<16x128xf32>
    %cst_118 = arith.constant 0.000000e+00 : f32
    %312 = vector.broadcast %cst_118 : f32 to vector<16x128xf32>
    %313 = arith.cmpf ogt, %310, %312 : vector<16x128xf32>
    %cst_119 = arith.constant 2.500000e-01 : f32
    %314 = vector.broadcast %cst_119 : f32 to vector<16x128xf32>
    %315 = arith.mulf %314, %311 : vector<16x128xf32>
    %316 = arith.select %313, %311, %315 : vector<16x128xi1>, vector<16x128xf32>
    %317 = vector.extract_strided_slice %295 {offsets = [0, 256], sizes = [16, 128], strides = [1, 1]} : vector<16x384xf32> to vector<16x128xf32>
    %318 = vector.extract_strided_slice %298 {offsets = [0, 256], sizes = [16, 128], strides = [1, 1]} : vector<16x384xf32> to vector<16x128xf32>
    %319 = arith.addf %318, %12 : vector<16x128xf32>
    %320 = arith.mulf %307, %319 : vector<16x128xf32>
    %321 = arith.addf %317, %320 : vector<16x128xf32>
    %322 = math.tanh %321 : vector<16x128xf32>
    %cst_120 = arith.constant 0.000000e+00 : f32
    %323 = vector.broadcast %cst_120 : f32 to vector<16x128xf32>
    %324 = arith.cmpf ogt, %321, %323 : vector<16x128xf32>
    %cst_121 = arith.constant 2.500000e-01 : f32
    %325 = vector.broadcast %cst_121 : f32 to vector<16x128xf32>
    %326 = arith.mulf %325, %322 : vector<16x128xf32>
    %327 = arith.select %324, %322, %326 : vector<16x128xi1>, vector<16x128xf32>
    %328 = arith.subf %290, %327 : vector<16x128xf32>
    %329 = arith.mulf %316, %328 : vector<16x128xf32>
    %330 = arith.addf %327, %329 : vector<16x128xf32>
    %c7_122 = arith.constant 7 : index
    %c0_123 = arith.constant 0 : index
    %c0_124 = arith.constant 0 : index
    %331 = vector.load %arg6[%c7_122, %c0_123, %c0_124] : memref<8x16x128xf32, #tpu.memory_space<vmem>>, vector<1x16x128xf32>
    %332 = vector.shape_cast %331 : vector<1x16x128xf32> to vector<16x128xf32>
    %333 = vector.shape_cast %330 : vector<16x128xf32> to vector<1x16x128xf32>
    tpu.vector_store %arg6[%c7_122, %c0_123, %c0_124], %333 {strides = array<i32>} : memref<8x16x128xf32, #tpu.memory_space<vmem>>, vector<1x16x128xf32>,
    return
  }
  func.func @transform_0(%arg0: i32) -> (i32, i32, i32) {
    %c0_i32 = arith.constant 0 : i32
    %c0_i32_0 = arith.constant 0 : i32
    %c0_i32_1 = arith.constant 0 : i32
    return %c0_i32, %arg0, %c0_i32_0 : i32, i32, i32
  }
  func.func @transform_1(%arg0: i32) -> (i32, i32) {
    %c0_i32 = arith.constant 0 : i32
    %c0_i32_0 = arith.constant 0 : i32
    %c0_i32_1 = arith.constant 0 : i32
    return %c0_i32, %c0_i32_0 : i32, i32
  }
  func.func @transform_2(%arg0: i32) -> (i32, i32) {
    %c0_i32 = arith.constant 0 : i32
    %c0_i32_0 = arith.constant 0 : i32
    %c0_i32_1 = arith.constant 0 : i32
    return %c0_i32, %c0_i32_0 : i32, i32
  }
  func.func @transform_3(%arg0: i32) -> (i32, i32) {
    %c0_i32 = arith.constant 0 : i32
    %c0_i32_0 = arith.constant 0 : i32
    %c0_i32_1 = arith.constant 0 : i32
    return %c0_i32, %c0_i32_0 : i32, i32
  }
  func.func @transform_4(%arg0: i32) -> (i32, i32) {
    %c0_i32 = arith.constant 0 : i32
    %c0_i32_0 = arith.constant 0 : i32
    %c0_i32_1 = arith.constant 0 : i32
    return %c0_i32, %c0_i32_0 : i32, i32
  }
  func.func @transform_5(%arg0: i32) -> (i32, i32, i32) {
    %c0_i32 = arith.constant 0 : i32
    %c0_i32_0 = arith.constant 0 : i32
    %c0_i32_1 = arith.constant 0 : i32
    return %c0_i32, %arg0, %c0_i32_0 : i32, i32, i32
  }
}

</mosaic_0001>

<llo_original>
// kernel: tpu_custom_call.1
$region0: #{tpu_custom_call.1}
  #allocation0 [shape = 'u32[]', space=smem, size = 0x4, offset = 0x4, fixed_abs, tag = 'smem constant byte address 0x4 - core index']
  #allocation1 [shape = 'u32[144,128]{1,0:T(1,128)}', space=vmem, size = 0x12000, scoped, tag = 'internal scratch']
  #allocation2 [shape = 'f32[8,16,384]{2,1,0:T(8,128)}', space=vmem, size = 0x30000, scoped, tag = 'scratch operand']
  %s0 = inlined_call_operand.hbm [shape: f32[8,16,128], index: 0, kind: input, shape index: {}]
  %s1 = inlined_call_operand.hbm [shape: bf16[128,384], index: 1, kind: input, shape index: {}]
  %s2 = inlined_call_operand.vmem [shape: f32[1,384], index: 2, kind: input, shape index: {}]
  %s3 = inlined_call_operand.hbm [shape: bf16[128,384], index: 3, kind: input, shape index: {}]
  %s4 = inlined_call_operand.vmem [shape: f32[1,128], index: 4, kind: input, shape index: {}]
  %s5 = inlined_call_operand.hbm [shape: f32[8,16,128], index: 5, kind: output, shape index: {}]
  %s6 = sld [smem:[#allocation0]]
  $region42: #{tpu_custom_call.1} parent=0
    _
  %s8 = ssub.s32 1, %s6
  %s9 = scalar_select 0, %s8, %s6
  $region1: #{tpu_custom_call.1} parent=0
    #allocation3 [shape = 'u8[65536]{0}', space=vmem, size = 0x10000, scoped, tag = 'input window, operand 0, single buffered']
    #allocation4 [shape = 's32[1]{0}', space=sflag, size = 0x4, scoped, tag = 'scoped memory for tpu_custom_call.1']
    #allocation5 [shape = 's32[1]{0}', space=sflag, size = 0x4, scoped, tag = 'scoped memory for tpu_custom_call.1']
    #allocation6 [shape = 'u8[98304]{0}', space=vmem, size = 0x18000, scoped, tag = 'input window, operand 1, single buffered']
    #allocation7 [shape = 's32[1]{0}', space=sflag, size = 0x4, scoped, tag = 'scoped memory for tpu_custom_call.1']
    #allocation8 [shape = 'u8[98304]{0}', space=vmem, size = 0x18000, scoped, tag = 'input window, operand 3, single buffered']
    #allocation9 [shape = 'u8[65536]{0}', space=vmem, size = 0x10000, scoped, tag = 'output window, operand 0, single buffered']
    %10 = vsyncpa [#allocation4], 0
    %11 = vsyncpa [#allocation7], 0
    %12 = vsyncpa [#allocation5], 0
    // Predicated region
    $region2: #{tpu_custom_call.1} parent=1 // pred_check
      _
    $region3: #{tpu_custom_call.1} parent=1 // pred_check_branch
      %14 = sbr.rel (0) target = $region5
    $region4: #{tpu_custom_call.1} parent=1 // pred_region
      %s16 = ssub.s32 2048, 2048
      %17 = vsyncadd [#allocation4], %s16
      %s18 = sshll.u32 [#allocation3], 4
      %s19 = int_to_ptr.vmem [resolvable:$true] %s18
      %24 = dma.hbm_to_vmem [thread:$0]  %s0, 2048, %s19, [#allocation4], 128, 128, 8
    $region5: #{tpu_custom_call.1} parent=1 // pred_fallthru
      _
    // Predicated region
    $region6: #{tpu_custom_call.1} parent=1 // pred_check
      _
    $region7: #{tpu_custom_call.1} parent=1 // pred_check_branch
      %26 = sbr.rel (0) target = $region9
    $region8: #{tpu_custom_call.1} parent=1 // pred_region
      %s28 = ssub.s32 3072, 3072
      %29 = vsyncadd [#allocation7], %s28
      %s30 = sshll.u32 [#allocation6], 4
      %s31 = int_to_ptr.vmem [resolvable:$true] %s30
      %36 = dma.hbm_to_vmem [thread:$0]  %s1, 3072, %s31, [#allocation7], 192, 192, 12
    $region9: #{tpu_custom_call.1} parent=1 // pred_fallthru
      _
    // Predicated region
    $region10: #{tpu_custom_call.1} parent=1 // pred_check
      _
    $region11: #{tpu_custom_call.1} parent=1 // pred_check_branch
      %38 = sbr.rel (0) target = $region13
    $region12: #{tpu_custom_call.1} parent=1 // pred_region
      _
    $region13: #{tpu_custom_call.1} parent=1 // pred_fallthru
      _
    // Predicated region
    $region14: #{tpu_custom_call.1} parent=1 // pred_check
      _
    $region15: #{tpu_custom_call.1} parent=1 // pred_check_branch
      %40 = sbr.rel (0) target = $region17
    $region16: #{tpu_custom_call.1} parent=1 // pred_region
      %s42 = ssub.s32 3072, 3072
      %43 = vsyncadd [#allocation7], %s42
      %s44 = sshll.u32 [#allocation8], 4
      %s45 = int_to_ptr.vmem [resolvable:$true] %s44
      %50 = dma.hbm_to_vmem [thread:$0]  %s3, 3072, %s45, [#allocation7], 192, 192, 12
    $region17: #{tpu_custom_call.1} parent=1 // pred_fallthru
      _
    // Predicated region
    $region18: #{tpu_custom_call.1} parent=1 // pred_check
      _
    $region19: #{tpu_custom_call.1} parent=1 // pred_check_branch
      %52 = sbr.rel (0) target = $region21
    $region20: #{tpu_custom_call.1} parent=1 // pred_region
      _
    $region21: #{tpu_custom_call.1} parent=1 // pred_fallthru
      _
    // Predicated region
    $region22: #{tpu_custom_call.1} parent=1 // pred_check
      _
    $region23: #{tpu_custom_call.1} parent=1 // pred_check_branch
      %54 = sbr.rel (0) target = $region25
    $region24: #{tpu_custom_call.1} parent=1 // pred_region
      %55 = dma.done [#allocation4], 2048
    $region25: #{tpu_custom_call.1} parent=1 // pred_fallthru
      _
    // Predicated region
    $region26: #{tpu_custom_call.1} parent=1 // pred_check
      _
    $region27: #{tpu_custom_call.1} parent=1 // pred_check_branch
      %57 = sbr.rel (0) target = $region29
    $region28: #{tpu_custom_call.1} parent=1 // pred_region
      %58 = dma.done [#allocation7], 3072
    $region29: #{tpu_custom_call.1} parent=1 // pred_fallthru
      _
    // Predicated region
    $region30: #{tpu_custom_call.1} parent=1 // pred_check
      _
    $region31: #{tpu_custom_call.1} parent=1 // pred_check_branch
      %60 = sbr.rel (0) target = $region33
    $region32: #{tpu_custom_call.1} parent=1 // pred_region
      %61 = dma.done [#allocation7], 3072
    $region33: #{tpu_custom_call.1} parent=1 // pred_fallthru
      _
    %v63 = vld [vmem:[#allocation3] sm:$0xff]
    %v64 = vld [vmem:[#allocation3 + $0x8] sm:$0xff]
    %v65 = vld [vmem:[#allocation3 + $0x10] sm:$0xff]
    %v66 = vld [vmem:[#allocation3 + $0x18] sm:$0xff]
    %v67 = vld [vmem:[#allocation3 + $0x20] sm:$0xff]
    %v68 = vld [vmem:[#allocation3 + $0x28] sm:$0xff]
    %v69 = vld [vmem:[#allocation3 + $0x30] sm:$0xff]
    %v70 = vld [vmem:[#allocation3 + $0x38] sm:$0xff]
    %v71 = vld [vmem:[#allocation3 + $0x40] sm:$0xff]
    %v72 = vld [vmem:[#allocation3 + $0x48] sm:$0xff]
    %v73 = vld [vmem:[#allocation3 + $0x50] sm:$0xff]
    %v74 = vld [vmem:[#allocation3 + $0x58] sm:$0xff]
    %v75 = vld [vmem:[#allocation3 + $0x60] sm:$0xff]
    %v76 = vld [vmem:[#allocation3 + $0x68] sm:$0xff]
    %v77 = vld [vmem:[#allocation3 + $0x70] sm:$0xff]
    %v78 = vld [vmem:[#allocation3 + $0x78] sm:$0xff]
    %v79 = vpack.c.bf16 %v64, %v63
    %v80 = vpack.c.bf16 %v66, %v65
    %v81 = vpack.c.bf16 %v68, %v67
    %v82 = vpack.c.bf16 %v70, %v69
    %v83 = vpack.c.bf16 %v72, %v71
    %v84 = vpack.c.bf16 %v74, %v73
    %v85 = vpack.c.bf16 %v76, %v75
    %v86 = vpack.c.bf16 %v78, %v77
    %v87 = vld [vmem:[#allocation6] sm:$0xff]
    %v88 = vld [vmem:[#allocation6 + $0x8] sm:$0xf]
    %v89 = vld [vmem:[#allocation6 + $0xc] sm:$0xff]
    %v90 = vld [vmem:[#allocation6 + $0x14] sm:$0xf]
    %v91 = vld [vmem:[#allocation6 + $0x18] sm:$0xff]
    %v92 = vld [vmem:[#allocation6 + $0x20] sm:$0xf]
    %v93 = vld [vmem:[#allocation6 + $0x24] sm:$0xff]
    %v94 = vld [vmem:[#allocation6 + $0x2c] sm:$0xf]
    %v95 = vld [vmem:[#allocation6 + $0x30] sm:$0xff]
    %v96 = vld [vmem:[#allocation6 + $0x38] sm:$0xf]
    %v97 = vld [vmem:[#allocation6 + $0x3c] sm:$0xff]
    %v98 = vld [vmem:[#allocation6 + $0x44] sm:$0xf]
    %v99 = vld [vmem:[#allocation6 + $0x48] sm:$0xff]
    %v100 = vld [vmem:[#allocation6 + $0x50] sm:$0xf]
    %v101 = vld [vmem:[#allocation6 + $0x54] sm:$0xff]
    %v102 = vld [vmem:[#allocation6 + $0x5c] sm:$0xf]
    %v103 = vld [vmem:[#allocation6 + $0x60] sm:$0xff]
    %v104 = vld [vmem:[#allocation6 + $0x68] sm:$0xf]
    %v105 = vld [vmem:[#allocation6 + $0x6c] sm:$0xff]
    %v106 = vld [vmem:[#allocation6 + $0x74] sm:$0xf]
    %v107 = vld [vmem:[#allocation6 + $0x78] sm:$0xff]
    %v108 = vld [vmem:[#allocation6 + $0x80] sm:$0xf]
    %v109 = vld [vmem:[#allocation6 + $0x84] sm:$0xff]
    %v110 = vld [vmem:[#allocation6 + $0x8c] sm:$0xf]
    %v111 = vld [vmem:[#allocation6 + $0x90] sm:$0xff]
    %v112 = vld [vmem:[#allocation6 + $0x98] sm:$0xf]
    %v113 = vld [vmem:[#allocation6 + $0x9c] sm:$0xff]
    %v114 = vld [vmem:[#allocation6 + $0xa4] sm:$0xf]
    %v115 = vld [vmem:[#allocation6 + $0xa8] sm:$0xff]
    %v116 = vld [vmem:[#allocation6 + $0xb0] sm:$0xf]
    %v117 = vld [vmem:[#allocation6 + $0xb4] sm:$0xff]
    %v118 = vld [vmem:[#allocation6 + $0xbc] sm:$0xf]
    %v119 = vld [vmem:[%s2] sm:$0x7]
    %v121 = vlaneseq
    %v122 = vshrl.u32 %v121, 7
    %v123 = vsub.s32 0, %v122
    %v124 = vrot.slane %v119, %v123
    %v125 = vlaneseq
    %v126 = vshrl.u32 %v125, 7
    %v127 = vsub.s32 1, %v126
    %v128 = vrot.slane %v119, %v127
    %v129 = vlaneseq
    %v130 = vshrl.u32 %v129, 7
    %v131 = vsub.s32 2, %v130
    %v132 = vrot.slane %v119, %v131
    %v168 = vunpack.c.l.b16 %v87
    %v169 = vunpack.c.h.b16 %v87
    %v170 = vunpack.c.l.b16 %v88
    %v171 = vunpack.c.l.b16 %v89
    %v172 = vunpack.c.h.b16 %v89
    %v173 = vunpack.c.l.b16 %v90
    %v174 = vunpack.c.l.b16 %v91
    %v175 = vunpack.c.h.b16 %v91
    %v176 = vunpack.c.l.b16 %v92
    %v177 = vunpack.c.l.b16 %v93
    %v178 = vunpack.c.h.b16 %v93
    %v179 = vunpack.c.l.b16 %v94
    %v180 = vunpack.c.l.b16 %v95
    %v181 = vunpack.c.h.b16 %v95
    %v182 = vunpack.c.l.b16 %v96
    %v183 = vunpack.c.l.b16 %v97
    %v184 = vunpack.c.h.b16 %v97
    %v185 = vunpack.c.l.b16 %v98
    %v186 = vunpack.c.l.b16 %v99
    %v187 = vunpack.c.h.b16 %v99
    %v188 = vunpack.c.l.b16 %v100
    %v189 = vunpack.c.l.b16 %v101
    %v190 = vunpack.c.h.b16 %v101
    %v191 = vunpack.c.l.b16 %v102
    %v192 = vunpack.c.l.b16 %v103
    %v193 = vunpack.c.h.b16 %v103
    %v194 = vunpack.c.l.b16 %v104
    %v195 = vunpack.c.l.b16 %v105
    %v196 = vunpack.c.h.b16 %v105
    %v197 = vunpack.c.l.b16 %v106
    %v198 = vunpack.c.l.b16 %v107
    %v199 = vunpack.c.h.b16 %v107
    %v200 = vunpack.c.l.b16 %v108
    %v201 = vunpack.c.l.b16 %v109
    %v202 = vunpack.c.h.b16 %v109
    %v203 = vunpack.c.l.b16 %v110
    %v204 = vunpack.c.l.b16 %v111
    %v205 = vunpack.c.h.b16 %v111
    %v206 = vunpack.c.l.b16 %v112
    %v207 = vunpack.c.l.b16 %v113
    %v208 = vunpack.c.h.b16 %v113
    %v209 = vunpack.c.l.b16 %v114
    %v210 = vunpack.c.l.b16 %v115
    %v211 = vunpack.c.h.b16 %v115
    %v212 = vunpack.c.l.b16 %v116
    %v213 = vunpack.c.l.b16 %v117
    %v214 = vunpack.c.h.b16 %v117
    %v215 = vunpack.c.l.b16 %v118
    %v216 = vpack.c.b16 %v171, %v168
    %v217 = vpack.c.b16 %v172, %v169
    %v218 = vpack.c.b16 %v173, %v170
    %v219 = vpack.c.b16 %v177, %v174
    %v220 = vpack.c.b16 %v178, %v175
    %v221 = vpack.c.b16 %v179, %v176
    %v222 = vpack.c.b16 %v183, %v180
    %v223 = vpack.c.b16 %v184, %v181
    %v224 = vpack.c.b16 %v185, %v182
    %v225 = vpack.c.b16 %v189, %v186
    %v226 = vpack.c.b16 %v190, %v187
    %v227 = vpack.c.b16 %v191, %v188
    %v228 = vpack.c.b16 %v195, %v192
    %v229 = vpack.c.b16 %v196, %v193
    %v230 = vpack.c.b16 %v197, %v194
    %v231 = vpack.c.b16 %v201, %v198
    %v232 = vpack.c.b16 %v202, %v199
    %v233 = vpack.c.b16 %v203, %v200
    %v234 = vpack.c.b16 %v207, %v204
    %v235 = vpack.c.b16 %v208, %v205
    %v236 = vpack.c.b16 %v209, %v206
    %v237 = vpack.c.b16 %v213, %v210
    %v238 = vpack.c.b16 %v214, %v211
    %v239 = vpack.c.b16 %v215, %v212
    %264 = vmatprep.subr.bf16.mxu0 %v217
    %265 = vmatpush1.bf16.msra.mxu0 %v216
    %266 = vmatprep.subr.bf16.mxu0 %v220
    %267 = vmatpush1.bf16.msra.mxu0 %v219
    %268 = vmatprep.subr.bf16.mxu0 %v223
    %269 = vmatpush1.bf16.msra.mxu0 %v222
    %270 = vmatprep.subr.bf16.mxu0 %v226
    %271 = vmatpush1.bf16.msra.mxu0 %v225
    %272 = vmatprep.subr.bf16.mxu0 %v229
    %273 = vmatpush1.bf16.msra.mxu0 %v228
    %274 = vmatprep.subr.bf16.mxu0 %v232
    %275 = vmatpush1.bf16.msra.mxu0 %v231
    %276 = vmatprep.subr.bf16.mxu0 %v235
    %277 = vmatpush1.bf16.msra.mxu0 %v234
    %278 = vmatprep.subr.bf16.mxu0 %v238
    %279 = vmatpush1.bf16.msra.mxu0 %v237
    %280 = vmatprep.subr.bf16.mxu0 0
    %281 = vmatpush1.bf16.msra.mxu0 0
    %282 = vmatprep.subr.bf16.mxu0 0
    %283 = vmatpush1.bf16.msra.mxu0 0
    %284 = vmatprep.subr.bf16.mxu0 0
    %285 = vmatpush1.bf16.msra.mxu0 0
    %286 = vmatprep.subr.bf16.mxu0 0
    %287 = vmatpush1.bf16.msra.mxu0 0
    %288 = vmatprep.subr.bf16.mxu0 0
    %289 = vmatpush1.bf16.msra.mxu0 0
    %290 = vmatprep.subr.bf16.mxu0 0
    %291 = vmatpush1.bf16.msra.mxu0 0
    %292 = vmatprep.subr.bf16.mxu0 0
    %293 = vmatpush1.bf16.msra.mxu0 0
    %294 = vmatprep.subr.bf16.mxu0 0
    %295 = vmatpush1.bf16.msra.mxu0 0
    %296 = vmatprep.mubr.bf16.mxu0 0
    %297 = vmatmul.mubr.bf16.gmra.mrb[0].mxu0 %v79
    %v298 = vpop.f32.mrb[0].mxu0
    %v299 = vadd.f32 %v124, %v298
    %v300 = vpop.f32.mrb[0].mxu0
    %v301 = vadd.f32 %v128, %v300
    %v302 = vpop.f32.mrb[0].mxu0
    %v303 = vadd.f32 %v124, %v302
    %v304 = vpop.f32.mrb[0].mxu0
    %v305 = vadd.f32 %v128, %v304
    %306 = vmatprep.mubr.bf16.mxu0 0
    %307 = vmatmul.mubr.bf16.gmra.mrb[0].mxu0 %v80
    %v308 = vpop.f32.mrb[0].mxu0
    %v309 = vadd.f32 %v124, %v308
    %v310 = vpop.f32.mrb[0].mxu0
    %v311 = vadd.f32 %v128, %v310
    %v312 = vpop.f32.mrb[0].mxu0
    %v313 = vadd.f32 %v124, %v312
    %v314 = vpop.f32.mrb[0].mxu0
    %v315 = vadd.f32 %v128, %v314
    %316 = vmatprep.mubr.bf16.mxu0 0
    %317 = vmatmul.mubr.bf16.gmra.mrb[0].mxu0 %v81
    %v318 = vpop.f32.mrb[0].mxu0
    %v319 = vadd.f32 %v124, %v318
    %v320 = vpop.f32.mrb[0].mxu0
    %v321 = vadd.f32 %v128, %v320
    %v322 = vpop.f32.mrb[0].mxu0
    %v323 = vadd.f32 %v124, %v322
    %v324 = vpop.f32.mrb[0].mxu0
    %v325 = vadd.f32 %v128, %v324
    %326 = vmatprep.mubr.bf16.mxu0 0
    %327 = vmatmul.mubr.bf16.gmra.mrb[0].mxu0 %v82
    %v328 = vpop.f32.mrb[0].mxu0
    %v329 = vadd.f32 %v124, %v328
    %v330 = vpop.f32.mrb[0].mxu0
    %v331 = vadd.f32 %v128, %v330
    %v332 = vpop.f32.mrb[0].mxu0
    %v333 = vadd.f32 %v124, %v332
    %v334 = vpop.f32.mrb[0].mxu0
    %v335 = vadd.f32 %v128, %v334
    %336 = vmatprep.mubr.bf16.mxu0 0
    %337 = vmatmul.mubr.bf16.gmra.mrb[0].mxu0 %v83
    %v338 = vpop.f32.mrb[0].mxu0
    %v339 = vadd.f32 %v124, %v338
    %v340 = vpop.f32.mrb[0].mxu0
    %v341 = vadd.f32 %v128, %v340
    %v342 = vpop.f32.mrb[0].mxu0
    %v343 = vadd.f32 %v124, %v342
    %v344 = vpop.f32.mrb[0].mxu0
    %v345 = vadd.f32 %v128, %v344
    %346 = vmatprep.mubr.bf16.mxu0 0
    %347 = vmatmul.mubr.bf16.gmra.mrb[0].mxu0 %v84
    %v348 = vpop.f32.mrb[0].mxu0
    %v349 = vadd.f32 %v124, %v348
    %v350 = vpop.f32.mrb[0].mxu0
    %v351 = vadd.f32 %v128, %v350
    %v352 = vpop.f32.mrb[0].mxu0
    %v353 = vadd.f32 %v124, %v352
    %v354 = vpop.f32.mrb[0].mxu0
    %v355 = vadd.f32 %v128, %v354
    %356 = vmatprep.mubr.bf16.mxu0 0
    %357 = vmatmul.mubr.bf16.gmra.mrb[0].mxu0 %v85
    %v358 = vpop.f32.mrb[0].mxu0
    %v359 = vadd.f32 %v124, %v358
    %v360 = vpop.f32.mrb[0].mxu0
    %v361 = vadd.f32 %v128, %v360
    %v362 = vpop.f32.mrb[0].mxu0
    %v363 = vadd.f32 %v124, %v362
    %v364 = vpop.f32.mrb[0].mxu0
    %v365 = vadd.f32 %v128, %v364
    %366 = vmatprep.mubr.bf16.mxu0 0
    %367 = vmatmul.mubr.bf16.gmra.mrb[0].mxu0 %v86
    %v368 = vpop.f32.mrb[0].mxu0
    %v369 = vadd.f32 %v124, %v368
    %v370 = vpop.f32.mrb[0].mxu0
    %v371 = vadd.f32 %v128, %v370
    %v372 = vpop.f32.mrb[0].mxu0
    %v373 = vadd.f32 %v124, %v372
    %v374 = vpop.f32.mrb[0].mxu0
    %v375 = vadd.f32 %v128, %v374
    %376 = vdwg.mxu0
    %377 = vmatprep.subr.bf16.mxu0 0
    %378 = vmatpush1.bf16.msra.mxu0 %v218
    %379 = vmatprep.subr.bf16.mxu0 0
    %380 = vmatpush1.bf16.msra.mxu0 %v221
    %381 = vmatprep.subr.bf16.mxu0 0
    %382 = vmatpush1.bf16.msra.mxu0 %v224
    %383 = vmatprep.subr.bf16.mxu0 0
    %384 = vmatpush1.bf16.msra.mxu0 %v227
    %385 = vmatprep.subr.bf16.mxu0 0
    %386 = vmatpush1.bf16.msra.mxu0 %v230
    %387 = vmatprep.subr.bf16.mxu0 0
    %388 = vmatpush1.bf16.msra.mxu0 %v233
    %389 = vmatprep.subr.bf16.mxu0 0
    %390 = vmatpush1.bf16.msra.mxu0 %v236
    %391 = vmatprep.subr.bf16.mxu0 0
    %392 = vmatpush1.bf16.msra.mxu0 %v239
    %393 = vmatprep.subr.bf16.mxu0 0
    %394 = vmatpush1.bf16.msra.mxu0 0
    %395 = vmatprep.subr.bf16.mxu0 0
    %396 = vmatpush1.bf16.msra.mxu0 0
    %397 = vmatprep.subr.bf16.mxu0 0
    %398 = vmatpush1.bf16.msra.mxu0 0
    %399 = vmatprep.subr.bf16.mxu0 0
    %400 = vmatpush1.bf16.msra.mxu0 0
    %401 = vmatprep.subr.bf16.mxu0 0
    %402 = vmatpush1.bf16.msra.mxu0 0
    %403 = vmatprep.subr.bf16.mxu0 0
    %404 = vmatpush1.bf16.msra.mxu0 0
    %405 = vmatprep.subr.bf16.mxu0 0
    %406 = vmatpush1.bf16.msra.mxu0 0
    %407 = vmatprep.subr.bf16.mxu0 0
    %408 = vmatpush1.bf16.msra.mxu0 0
    %409 = vmatprep.mubr.bf16.mxu0 0
    %410 = vmatmul.mubr.bf16.gmra.mrb[0].mxu0 %v79
    %v411 = vpop.f32.mrb[0].mxu0
    %v412 = vadd.f32 %v132, %v411
    %v413 = vpop.f32.mrb[0].mxu0
    %v414 = vpop.f32.mrb[0].mxu0
    %v415 = vadd.f32 %v132, %v414
    %v416 = vpop.f32.mrb[0].mxu0
    %417 = vmatprep.mubr.bf16.mxu0 0
    %418 = vmatmul.mubr.bf16.gmra.mrb[0].mxu0 %v80
    %v419 = vpop.f32.mrb[0].mxu0
    %v420 = vadd.f32 %v132, %v419
    %v421 = vpop.f32.mrb[0].mxu0
    %v422 = vpop.f32.mrb[0].mxu0
    %v423 = vadd.f32 %v132, %v422
    %v424 = vpop.f32.mrb[0].mxu0
    %425 = vmatprep.mubr.bf16.mxu0 0
    %426 = vmatmul.mubr.bf16.gmra.mrb[0].mxu0 %v81
    %v427 = vpop.f32.mrb[0].mxu0
    %v428 = vadd.f32 %v132, %v427
    %v429 = vpop.f32.mrb[0].mxu0
    %v430 = vpop.f32.mrb[0].mxu0
    %v431 = vadd.f32 %v132, %v430
    %v432 = vpop.f32.mrb[0].mxu0
    %433 = vmatprep.mubr.bf16.mxu0 0
    %434 = vmatmul.mubr.bf16.gmra.mrb[0].mxu0 %v82
    %v435 = vpop.f32.mrb[0].mxu0
    %v436 = vadd.f32 %v132, %v435
    %v437 = vpop.f32.mrb[0].mxu0
    %v438 = vpop.f32.mrb[0].mxu0
    %v439 = vadd.f32 %v132, %v438
    %v440 = vpop.f32.mrb[0].mxu0
    %441 = vmatprep.mubr.bf16.mxu0 0
    %442 = vmatmul.mubr.bf16.gmra.mrb[0].mxu0 %v83
    %v443 = vpop.f32.mrb[0].mxu0
    %v444 = vadd.f32 %v132, %v443
    %v445 = vpop.f32.mrb[0].mxu0
    %v446 = vpop.f32.mrb[0].mxu0
    %v447 = vadd.f32 %v132, %v446
    %v448 = vpop.f32.mrb[0].mxu0
    %449 = vmatprep.mubr.bf16.mxu0 0
    %450 = vmatmul.mubr.bf16.gmra.mrb[0].mxu0 %v84
    %v451 = vpop.f32.mrb[0].mxu0
    %v452 = vadd.f32 %v132, %v451
    %v453 = vpop.f32.mrb[0].mxu0
    %v454 = vpop.f32.mrb[0].mxu0
    %v455 = vadd.f32 %v132, %v454
    %v456 = vpop.f32.mrb[0].mxu0
    %457 = vmatprep.mubr.bf16.mxu0 0
    %458 = vmatmul.mubr.bf16.gmra.mrb[0].mxu0 %v85
    %v459 = vpop.f32.mrb[0].mxu0
    %v460 = vadd.f32 %v132, %v459
    %v461 = vpop.f32.mrb[0].mxu0
    %v462 = vpop.f32.mrb[0].mxu0
    %v463 = vadd.f32 %v132, %v462
    %v464 = vpop.f32.mrb[0].mxu0
    %465 = vmatprep.mubr.bf16.mxu0 0
    %466 = vmatmul.mubr.bf16.gmra.mrb[0].mxu0 %v86
    %v467 = vpop.f32.mrb[0].mxu0
    %v468 = vadd.f32 %v132, %v467
    %v469 = vpop.f32.mrb[0].mxu0
    %v470 = vpop.f32.mrb[0].mxu0
    %v471 = vadd.f32 %v132, %v470
    %v472 = vpop.f32.mrb[0].mxu0
    %473 = vdwg.mxu0
    %474 = vst [vmem:[#allocation2] sm:$0xff] %v299
    %475 = vst [vmem:[#allocation2 + $0x8] sm:$0xff] %v301
    %476 = vst [vmem:[#allocation2 + $0x10] sm:$0xff] %v412
    %477 = vst [vmem:[#allocation2 + $0x18] sm:$0xff] %v303
    %478 = vst [vmem:[#allocation2 + $0x20] sm:$0xff] %v305
    %479 = vst [vmem:[#allocation2 + $0x28] sm:$0xff] %v415
    %480 = vst [vmem:[#allocation2 + $0x30] sm:$0xff] %v309
    %481 = vst [vmem:[#allocation2 + $0x38] sm:$0xff] %v311
    %482 = vst [vmem:[#allocation2 + $0x40] sm:$0xff] %v420
    %483 = vst [vmem:[#allocation2 + $0x48] sm:$0xff] %v313
    %484 = vst [vmem:[#allocation2 + $0x50] sm:$0xff] %v315
    %485 = vst [vmem:[#allocation2 + $0x58] sm:$0xff] %v423
    %486 = vst [vmem:[#allocation2 + $0x60] sm:$0xff] %v319
    %487 = vst [vmem:[#allocation2 + $0x68] sm:$0xff] %v321
    %488 = vst [vmem:[#allocation2 + $0x70] sm:$0xff] %v428
    %489 = vst [vmem:[#allocation2 + $0x78] sm:$0xff] %v323
    %490 = vst [vmem:[#allocation2 + $0x80] sm:$0xff] %v325
    %491 = vst [vmem:[#allocation2 + $0x88] sm:$0xff] %v431
    %492 = vst [vmem:[#allocation2 + $0x90] sm:$0xff] %v329
    %493 = vst [vmem:[#allocation2 + $0x98] sm:$0xff] %v331
    %494 = vst [vmem:[#allocation2 + $0xa0] sm:$0xff] %v436
    %495 = vst [vmem:[#allocation2 + $0xa8] sm:$0xff] %v333
    %496 = vst [vmem:[#allocation2 + $0xb0] sm:$0xff] %v335
    %497 = vst [vmem:[#allocation2 + $0xb8] sm:$0xff] %v439
    %498 = vst [vmem:[#allocation2 + $0xc0] sm:$0xff] %v339
    %499 = vst [vmem:[#allocation2 + $0xc8] sm:$0xff] %v341
    %500 = vst [vmem:[#allocation2 + $0xd0] sm:$0xff] %v444
    %501 = vst [vmem:[#allocation2 + $0xd8] sm:$0xff] %v343
    %502 = vst [vmem:[#allocation2 + $0xe0] sm:$0xff] %v345
    %503 = vst [vmem:[#allocation2 + $0xe8] sm:$0xff] %v447
    %504 = vst [vmem:[#allocation2 + $0xf0] sm:$0xff] %v349
    %505 = vst [vmem:[#allocation2 + $0xf8] sm:$0xff] %v351
    %506 = vst [vmem:[#allocation2 + $0x100] sm:$0xff] %v452
    %507 = vst [vmem:[#allocation2 + $0x108] sm:$0xff] %v353
    %508 = vst [vmem:[#allocation2 + $0x110] sm:$0xff] %v355
    %509 = vst [vmem:[#allocation2 + $0x118] sm:$0xff] %v455
    %510 = vst [vmem:[#allocation2 + $0x120] sm:$0xff] %v359
    %511 = vst [vmem:[#allocation2 + $0x128] sm:$0xff] %v361
    %512 = vst [vmem:[#allocation2 + $0x130] sm:$0xff] %v460
    %513 = vst [vmem:[#allocation2 + $0x138] sm:$0xff] %v363
    %514 = vst [vmem:[#allocation2 + $0x140] sm:$0xff] %v365
    %515 = vst [vmem:[#allocation2 + $0x148] sm:$0xff] %v463
    %516 = vst [vmem:[#allocation2 + $0x150] sm:$0xff] %v369
    %517 = vst [vmem:[#allocation2 + $0x158] sm:$0xff] %v371
    %518 = vst [vmem:[#allocation2 + $0x160] sm:$0xff] %v468
    %519 = vst [vmem:[#allocation2 + $0x168] sm:$0xff] %v373
    %520 = vst [vmem:[#allocation2 + $0x170] sm:$0xff] %v375
    %521 = vst [vmem:[#allocation2 + $0x178] sm:$0xff] %v471
    %v522 = vld [vmem:[%s4] sm:$0x1]
    %v524 = vlaneseq
    %v525 = vshrl.u32 %v524, 7
    %v526 = vsub.s32 0, %v525
    %v527 = vrot.slane %v522, %v526
    %v529 = vld [vmem:[#allocation2] sm:$0xff]
    %v530 = vld [vmem:[#allocation2 + $0x8] sm:$0xff]
    %v531 = vld [vmem:[#allocation2 + $0x10] sm:$0xff]
    %v532 = vld [vmem:[#allocation2 + $0x18] sm:$0xff]
    %v533 = vld [vmem:[#allocation2 + $0x20] sm:$0xff]
    %v534 = vld [vmem:[#allocation2 + $0x28] sm:$0xff]
    %v535 = vld [vmem:[#allocation8] sm:$0xff]
    %v536 = vld [vmem:[#allocation8 + $0x8] sm:$0xf]
    %v537 = vld [vmem:[#allocation8 + $0xc] sm:$0xff]
    %v538 = vld [vmem:[#allocation8 + $0x14] sm:$0xf]
    %v539 = vld [vmem:[#allocation8 + $0x18] sm:$0xff]
    %v540 = vld [vmem:[#allocation8 + $0x20] sm:$0xf]
    %v541 = vld [vmem:[#allocation8 + $0x24] sm:$0xff]
    %v542 = vld [vmem:[#allocation8 + $0x2c] sm:$0xf]
    %v543 = vld [vmem:[#allocation8 + $0x30] sm:$0xff]
    %v544 = vld [vmem:[#allocation8 + $0x38] sm:$0xf]
    %v545 = vld [vmem:[#allocation8 + $0x3c] sm:$0xff]
    %v546 = vld [vmem:[#allocation8 + $0x44] sm:$0xf]
    %v547 = vld [vmem:[#allocation8 + $0x48] sm:$0xff]
    %v548 = vld [vmem:[#allocation8 + $0x50] sm:$0xf]
    %v549 = vld [vmem:[#allocation8 + $0x54] sm:$0xff]
    %v550 = vld [vmem:[#allocation8 + $0x5c] sm:$0xf]
    %v551 = vld [vmem:[#allocation8 + $0x60] sm:$0xff]
    %v552 = vld [vmem:[#allocation8 + $0x68] sm:$0xf]
    %v553 = vld [vmem:[#allocation8 + $0x6c] sm:$0xff]
    %v554 = vld [vmem:[#allocation8 + $0x74] sm:$0xf]
    %v555 = vld [vmem:[#allocation8 + $0x78] sm:$0xff]
    %v556 = vld [vmem:[#allocation8 + $0x80] sm:$0xf]
    %v557 = vld [vmem:[#allocation8 + $0x84] sm:$0xff]
    %v558 = vld [vmem:[#allocation8 + $0x8c] sm:$0xf]
    %v559 = vld [vmem:[#allocation8 + $0x90] sm:$0xff]
    %v560 = vld [vmem:[#allocation8 + $0x98] sm:$0xf]
    %v561 = vld [vmem:[#allocation8 + $0x9c] sm:$0xff]
    %v562 = vld [vmem:[#allocation8 + $0xa4] sm:$0xf]
    %v563 = vld [vmem:[#allocation8 + $0xa8] sm:$0xff]
    %v564 = vld [vmem:[#allocation8 + $0xb0] sm:$0xf]
    %v565 = vld [vmem:[#allocation8 + $0xb4] sm:$0xff]
    %v566 = vld [vmem:[#allocation8 + $0xbc] sm:$0xf]
    %v599 = vunpack.c.l.b16 %v535
    %v600 = vunpack.c.h.b16 %v535
    %v601 = vunpack.c.l.b16 %v536
    %v602 = vunpack.c.l.b16 %v537
    %v603 = vunpack.c.h.b16 %v537
    %v604 = vunpack.c.l.b16 %v538
    %v605 = vunpack.c.l.b16 %v539
    %v606 = vunpack.c.h.b16 %v539
    %v607 = vunpack.c.l.b16 %v540
    %v608 = vunpack.c.l.b16 %v541
    %v609 = vunpack.c.h.b16 %v541
    %v610 = vunpack.c.l.b16 %v542
    %v611 = vunpack.c.l.b16 %v543
    %v612 = vunpack.c.h.b16 %v543
    %v613 = vunpack.c.l.b16 %v544
    %v614 = vunpack.c.l.b16 %v545
    %v615 = vunpack.c.h.b16 %v545
    %v616 = vunpack.c.l.b16 %v546
    %v617 = vunpack.c.l.b16 %v547
    %v618 = vunpack.c.h.b16 %v547
    %v619 = vunpack.c.l.b16 %v548
    %v620 = vunpack.c.l.b16 %v549
    %v621 = vunpack.c.h.b16 %v549
    %v622 = vunpack.c.l.b16 %v550
    %v623 = vunpack.c.l.b16 %v551
    %v624 = vunpack.c.h.b16 %v551
    %v625 = vunpack.c.l.b16 %v552
    %v626 = vunpack.c.l.b16 %v553
    %v627 = vunpack.c.h.b16 %v553
    %v628 = vunpack.c.l.b16 %v554
    %v629 = vunpack.c.l.b16 %v555
    %v630 = vunpack.c.h.b16 %v555
    %v631 = vunpack.c.l.b16 %v556
    %v632 = vunpack.c.l.b16 %v557
    %v633 = vunpack.c.h.b16 %v557
    %v634 = vunpack.c.l.b16 %v558
    %v635 = vunpack.c.l.b16 %v559
    %v636 = vunpack.c.h.b16 %v559
    %v637 = vunpack.c.l.b16 %v560
    %v638 = vunpack.c.l.b16 %v561
    %v639 = vunpack.c.h.b16 %v561
    %v640 = vunpack.c.l.b16 %v562
    %v641 = vunpack.c.l.b16 %v563
    %v642 = vunpack.c.h.b16 %v563
    %v643 = vunpack.c.l.b16 %v564
    %v644 = vunpack.c.l.b16 %v565
    %v645 = vunpack.c.h.b16 %v565
    %v646 = vunpack.c.l.b16 %v566
    %v647 = vpack.c.b16 %v602, %v599
    %v648 = vpack.c.b16 %v603, %v600
    %v649 = vpack.c.b16 %v604, %v601
    %v650 = vpack.c.b16 %v608, %v605
    %v651 = vpack.c.b16 %v609, %v606
    %v652 = vpack.c.b16 %v610, %v607
    %v653 = vpack.c.b16 %v614, %v611
    %v654 = vpack.c.b16 %v615, %v612
    %v655 = vpack.c.b16 %v616, %v613
    %v656 = vpack.c.b16 %v620, %v617
    %v657 = vpack.c.b16 %v621, %v618
    %v658 = vpack.c.b16 %v622, %v619
    %v659 = vpack.c.b16 %v626, %v623
    %v660 = vpack.c.b16 %v627, %v624
    %v661 = vpack.c.b16 %v628, %v625
    %v662 = vpack.c.b16 %v632, %v629
    %v663 = vpack.c.b16 %v633, %v630
    %v664 = vpack.c.b16 %v634, %v631
    %v665 = vpack.c.b16 %v638, %v635
    %v666 = vpack.c.b16 %v639, %v636
    %v667 = vpack.c.b16 %v640, %v637
    %v668 = vpack.c.b16 %v644, %v641
    %v669 = vpack.c.b16 %v645, %v642
    %v670 = vpack.c.b16 %v646, %v643
    %695 = vmatprep.subr.bf16.mxu0 %v648
    %696 = vmatpush1.bf16.msra.mxu0 %v647
    %697 = vmatprep.subr.bf16.mxu0 %v651
    %698 = vmatpush1.bf16.msra.mxu0 %v650
    %699 = vmatprep.subr.bf16.mxu0 %v654
    %700 = vmatpush1.bf16.msra.mxu0 %v653
    %701 = vmatprep.subr.bf16.mxu0 %v657
    %702 = vmatpush1.bf16.msra.mxu0 %v656
    %703 = vmatprep.subr.bf16.mxu0 %v660
    %704 = vmatpush1.bf16.msra.mxu0 %v659
    %705 = vmatprep.subr.bf16.mxu0 %v663
    %706 = vmatpush1.bf16.msra.mxu0 %v662
    %707 = vmatprep.subr.bf16.mxu0 %v666
    %708 = vmatpush1.bf16.msra.mxu0 %v665
    %709 = vmatprep.subr.bf16.mxu0 %v669
    %710 = vmatpush1.bf16.msra.mxu0 %v668
    %711 = vmatprep.subr.bf16.mxu0 0
    %712 = vmatpush1.bf16.msra.mxu0 0
    %713 = vmatprep.subr.bf16.mxu0 0
    %714 = vmatpush1.bf16.msra.mxu0 0
    %715 = vmatprep.subr.bf16.mxu0 0
    %716 = vmatpush1.bf16.msra.mxu0 0
    %717 = vmatprep.subr.bf16.mxu0 0
    %718 = vmatpush1.bf16.msra.mxu0 0
    %719 = vmatprep.subr.bf16.mxu0 0
    %720 = vmatpush1.bf16.msra.mxu0 0
    %721 = vmatprep.subr.bf16.mxu0 0
    %722 = vmatpush1.bf16.msra.mxu0 0
    %723 = vmatprep.subr.bf16.mxu0 0
    %724 = vmatpush1.bf16.msra.mxu0 0
    %725 = vmatprep.subr.bf16.mxu0 0
    %726 = vmatpush1.bf16.msra.mxu0 0
    %727 = vmatprep.mubr.bf16.mxu0 0
    %728 = vmatmul.mubr.bf16.gmra.mrb[0].mxu0 0
    %v729 = vpop.f32.mrb[0].mxu0
    %v730 = vadd.f32 0.0, %v729
    %v731 = vpop.f32.mrb[0].mxu0
    %v732 = vadd.f32 0.0, %v731
    %v733 = vpop.f32.mrb[0].mxu0
    %v734 = vadd.f32 0.0, %v733
    %v735 = vpop.f32.mrb[0].mxu0
    %v736 = vadd.f32 0.0, %v735
    %737 = vdwg.mxu0
    %738 = vmatprep.subr.bf16.mxu0 0
    %739 = vmatpush1.bf16.msra.mxu0 %v649
    %740 = vmatprep.subr.bf16.mxu0 0
    %741 = vmatpush1.bf16.msra.mxu0 %v652
    %742 = vmatprep.subr.bf16.mxu0 0
    %743 = vmatpush1.bf16.msra.mxu0 %v655
    %744 = vmatprep.subr.bf16.mxu0 0
    %745 = vmatpush1.bf16.msra.mxu0 %v658
    %746 = vmatprep.subr.bf16.mxu0 0
    %747 = vmatpush1.bf16.msra.mxu0 %v661
    %748 = vmatprep.subr.bf16.mxu0 0
    %749 = vmatpush1.bf16.msra.mxu0 %v664
    %750 = vmatprep.subr.bf16.mxu0 0
    %751 = vmatpush1.bf16.msra.mxu0 %v667
    %752 = vmatprep.subr.bf16.mxu0 0
    %753 = vmatpush1.bf16.msra.mxu0 %v670
    %754 = vmatprep.subr.bf16.mxu0 0
    %755 = vmatpush1.bf16.msra.mxu0 0
    %756 = vmatprep.subr.bf16.mxu0 0
    %757 = vmatpush1.bf16.msra.mxu0 0
    %758 = vmatprep.subr.bf16.mxu0 0
    %759 = vmatpush1.bf16.msra.mxu0 0
    %760 = vmatprep.subr.bf16.mxu0 0
    %761 = vmatpush1.bf16.msra.mxu0 0
    %762 = vmatprep.subr.bf16.mxu0 0
    %763 = vmatpush1.bf16.msra.mxu0 0
    %764 = vmatprep.subr.bf16.mxu0 0
    %765 = vmatpush1.bf16.msra.mxu0 0
    %766 = vmatprep.subr.bf16.mxu0 0
    %767 = vmatpush1.bf16.msra.mxu0 0
    %768 = vmatprep.subr.bf16.mxu0 0
    %769 = vmatpush1.bf16.msra.mxu0 0
    %770 = vmatprep.mubr.bf16.mxu0 0
    %771 = vmatmul.mubr.bf16.gmra.mrb[0].mxu0 0
    %v772 = vpop.f32.mrb[0].mxu0
    %v773 = vadd.f32 0.0, %v772
    %v774 = vpop.f32.mrb[0].mxu0
    %v775 = vpop.f32.mrb[0].mxu0
    %v776 = vadd.f32 0.0, %v775
    %v777 = vpop.f32.mrb[0].mxu0
    %778 = vdwg.mxu0
    %v779 = vadd.f32 %v529, %v730
    %v780 = vadd.f32 %v532, %v734
    %v781 = vtanh.pop %v779
    %v782 = vtanh.pop %v780
    %vm783 = vcmp.gt.f32.partialorder %v779, 0.0
    %vm784 = vcmp.gt.f32.partialorder %v780, 0.0
    %v785 = vmul.f32 %v781, 0.25
    %v786 = vmul.f32 %v782, 0.25
    %v787 = vsel %vm783, %v781, %v785
    %v788 = vsel %vm784, %v782, %v786
    %v789 = vadd.f32 %v530, %v732
    %v790 = vadd.f32 %v533, %v736
    %v791 = vtanh.pop %v789
    %v792 = vtanh.pop %v790
    %vm793 = vcmp.gt.f32.partialorder %v789, 0.0
    %vm794 = vcmp.gt.f32.partialorder %v790, 0.0
    %v795 = vmul.f32 %v791, 0.25
    %v796 = vmul.f32 %v792, 0.25
    %v797 = vsel %vm793, %v791, %v795
    %v798 = vsel %vm794, %v792, %v796
    %v799 = vadd.f32 %v773, %v527
    %v800 = vadd.f32 %v776, %v527
    %v801 = vmul.f32 %v787, %v799
    %v802 = vmul.f32 %v788, %v800
    %v803 = vadd.f32 %v531, %v801
    %v804 = vadd.f32 %v534, %v802
    %v805 = vtanh.pop %v803
    %v806 = vtanh.pop %v804
    %vm807 = vcmp.gt.f32.partialorder %v803, 0.0
    %vm808 = vcmp.gt.f32.partialorder %v804, 0.0
    %v809 = vmul.f32 %v805, 0.25
    %v810 = vmul.f32 %v806, 0.25
    %v811 = vsel %vm807, %v805, %v809
    %v812 = vsel %vm808, %v806, %v810
    %v813 = vsub.f32 0.0, %v811
    %v814 = vsub.f32 0.0, %v812
    %v815 = vmul.f32 %v797, %v813
    %v816 = vmul.f32 %v798, %v814
    %v817 = vadd.f32 %v811, %v815
    %v818 = vadd.f32 %v812, %v816
    %819 = vst [vmem:[#allocation9] sm:$0xff] %v817
    %820 = vst [vmem:[#allocation9 + $0x8] sm:$0xff] %v818
    %s821 = scalar_lea.vmem [#allocation2], 48
    %v822 = vld [vmem:[%s821] sm:$0xff]
    %v823 = vld [vmem:[%s821 + $0x8] sm:$0xff]
    %v824 = vld [vmem:[%s821 + $0x10] sm:$0xff]
    %v825 = vld [vmem:[%s821 + $0x18] sm:$0xff]
    %v826 = vld [vmem:[%s821 + $0x20] sm:$0xff]
    %v827 = vld [vmem:[%s821 + $0x28] sm:$0xff]
    %v828 = vpack.c.bf16 %v818, %v817
    %v829 = vld [vmem:[#allocation8] sm:$0xff]
    %v830 = vld [vmem:[#allocation8 + $0x8] sm:$0xf]
    %v831 = vld [vmem:[#allocation8 + $0xc] sm:$0xff]
    %v832 = vld [vmem:[#allocation8 + $0x14] sm:$0xf]
    %v833 = vld [vmem:[#allocation8 + $0x18] sm:$0xff]
    %v834 = vld [vmem:[#allocation8 + $0x20] sm:$0xf]
    %v835 = vld [vmem:[#allocation8 + $0x24] sm:$0xff]
    %v836 = vld [vmem:[#allocation8 + $0x2c] sm:$0xf]
    %v837 = vld [vmem:[#allocation8 + $0x30] sm:$0xff]
    %v838 = vld [vmem:[#allocation8 + $0x38] sm:$0xf]
    %v839 = vld [vmem:[#allocation8 + $0x3c] sm:$0xff]
    %v840 = vld [vmem:[#allocation8 + $0x44] sm:$0xf]
    %v841 = vld [vmem:[#allocation8 + $0x48] sm:$0xff]
    %v842 = vld [vmem:[#allocation8 + $0x50] sm:$0xf]
    %v843 = vld [vmem:[#allocation8 + $0x54] sm:$0xff]
    %v844 = vld [vmem:[#allocation8 + $0x5c] sm:$0xf]
    %v845 = vld [vmem:[#allocation8 + $0x60] sm:$0xff]
    %v846 = vld [vmem:[#allocation8 + $0x68] sm:$0xf]
    %v847 = vld [vmem:[#allocation8 + $0x6c] sm:$0xff]
    %v848 = vld [vmem:[#allocation8 + $0x74] sm:$0xf]
    %v849 = vld [vmem:[#allocation8 + $0x78] sm:$0xff]
    %v850 = vld [vmem:[#allocation8 + $0x80] sm:$0xf]
    %v851 = vld [vmem:[#allocation8 + $0x84] sm:$0xff]
    %v852 = vld [vmem:[#allocation8 + $0x8c] sm:$0xf]
    %v853 = vld [vmem:[#allocation8 + $0x90] sm:$0xff]
    %v854 = vld [vmem:[#allocation8 + $0x98] sm:$0xf]
    %v855 = vld [vmem:[#allocation8 + $0x9c] sm:$0xff]
    %v856 = vld [vmem:[#allocation8 + $0xa4] sm:$0xf]
    %v857 = vld [vmem:[#allocation8 + $0xa8] sm:$0xff]
    %v858 = vld [vmem:[#allocation8 + $0xb0] sm:$0xf]
    %v859 = vld [vmem:[#allocation8 + $0xb4] sm:$0xff]
    %v860 = vld [vmem:[#allocation8 + $0xbc] sm:$0xf]
    %v893 = vunpack.c.l.b16 %v829
    %v894 = vunpack.c.h.b16 %v829
    %v895 = vunpack.c.l.b16 %v830
    %v896 = vunpack.c.l.b16 %v831
    %v897 = vunpack.c.h.b16 %v831
    %v898 = vunpack.c.l.b16 %v832
    %v899 = vunpack.c.l.b16 %v833
    %v900 = vunpack.c.h.b16 %v833
    %v901 = vunpack.c.l.b16 %v834
    %v902 = vunpack.c.l.b16 %v835
    %v903 = vunpack.c.h.b16 %v835
    %v904 = vunpack.c.l.b16 %v836
    %v905 = vunpack.c.l.b16 %v837
    %v906 = vunpack.c.h.b16 %v837
    %v907 = vunpack.c.l.b16 %v838
    %v908 = vunpack.c.l.b16 %v839
    %v909 = vunpack.c.h.b16 %v839
    %v910 = vunpack.c.l.b16 %v840
    %v911 = vunpack.c.l.b16 %v841
    %v912 = vunpack.c.h.b16 %v841
    %v913 = vunpack.c.l.b16 %v842
    %v914 = vunpack.c.l.b16 %v843
    %v915 = vunpack.c.h.b16 %v843
    %v916 = vunpack.c.l.b16 %v844
    %v917 = vunpack.c.l.b16 %v845
    %v918 = vunpack.c.h.b16 %v845
    %v919 = vunpack.c.l.b16 %v846
    %v920 = vunpack.c.l.b16 %v847
    %v921 = vunpack.c.h.b16 %v847
    %v922 = vunpack.c.l.b16 %v848
    %v923 = vunpack.c.l.b16 %v849
    %v924 = vunpack.c.h.b16 %v849
    %v925 = vunpack.c.l.b16 %v850
    %v926 = vunpack.c.l.b16 %v851
    %v927 = vunpack.c.h.b16 %v851
    %v928 = vunpack.c.l.b16 %v852
    %v929 = vunpack.c.l.b16 %v853
    %v930 = vunpack.c.h.b16 %v853
    %v931 = vunpack.c.l.b16 %v854
    %v932 = vunpack.c.l.b16 %v855
    %v933 = vunpack.c.h.b16 %v855
    %v934 = vunpack.c.l.b16 %v856
    %v935 = vunpack.c.l.b16 %v857
    %v936 = vunpack.c.h.b16 %v857
    %v937 = vunpack.c.l.b16 %v858
    %v938 = vunpack.c.l.b16 %v859
    %v939 = vunpack.c.h.b16 %v859
    %v940 = vunpack.c.l.b16 %v860
    %v941 = vpack.c.b16 %v896, %v893
    %v942 = vpack.c.b16 %v897, %v894
    %v943 = vpack.c.b16 %v898, %v895
    %v944 = vpack.c.b16 %v902, %v899
    %v945 = vpack.c.b16 %v903, %v900
    %v946 = vpack.c.b16 %v904, %v901
    %v947 = vpack.c.b16 %v908, %v905
    %v948 = vpack.c.b16 %v909, %v906
    %v949 = vpack.c.b16 %v910, %v907
    %v950 = vpack.c.b16 %v914, %v911
    %v951 = vpack.c.b16 %v915, %v912
    %v952 = vpack.c.b16 %v916, %v913
    %v953 = vpack.c.b16 %v920, %v917
    %v954 = vpack.c.b16 %v921, %v918
    %v955 = vpack.c.b16 %v922, %v919
    %v956 = vpack.c.b16 %v926, %v923
    %v957 = vpack.c.b16 %v927, %v924
    %v958 = vpack.c.b16 %v928, %v925
    %v959 = vpack.c.b16 %v932, %v929
    %v960 = vpack.c.b16 %v933, %v930
    %v961 = vpack.c.b16 %v934, %v931
    %v962 = vpack.c.b16 %v938, %v935
    %v963 = vpack.c.b16 %v939, %v936
    %v964 = vpack.c.b16 %v940, %v937
    %989 = vmatprep.subr.bf16.mxu0 %v942
    %990 = vmatpush1.bf16.msra.mxu0 %v941
    %991 = vmatprep.subr.bf16.mxu0 %v945
    %992 = vmatpush1.bf16.msra.mxu0 %v944
    %993 = vmatprep.subr.bf16.mxu0 %v948
    %994 = vmatpush1.bf16.msra.mxu0 %v947
    %995 = vmatprep.subr.bf16.mxu0 %v951
    %996 = vmatpush1.bf16.msra.mxu0 %v950
    %997 = vmatprep.subr.bf16.mxu0 %v954
    %998 = vmatpush1.bf16.msra.mxu0 %v953
    %999 = vmatprep.subr.bf16.mxu0 %v957
    %1000 = vmatpush1.bf16.msra.mxu0 %v956
    %1001 = vmatprep.subr.bf16.mxu0 %v960
    %1002 = vmatpush1.bf16.msra.mxu0 %v959
    %1003 = vmatprep.subr.bf16.mxu0 %v963
    %1004 = vmatpush1.bf16.msra.mxu0 %v962
    %1005 = vmatprep.subr.bf16.mxu0 0
    %1006 = vmatpush1.bf16.msra.mxu0 0
    %1007 = vmatprep.subr.bf16.mxu0 0
    %1008 = vmatpush1.bf16.msra.mxu0 0
    %1009 = vmatprep.subr.bf16.mxu0 0
    %1010 = vmatpush1.bf16.msra.mxu0 0
    %1011 = vmatprep.subr.bf16.mxu0 0
    %1012 = vmatpush1.bf16.msra.mxu0 0
    %1013 = vmatprep.subr.bf16.mxu0 0
    %1014 = vmatpush1.bf16.msra.mxu0 0
    %1015 = vmatprep.subr.bf16.mxu0 0
    %1016 = vmatpush1.bf16.msra.mxu0 0
    %1017 = vmatprep.subr.bf16.mxu0 0
    %1018 = vmatpush1.bf16.msra.mxu0 0
    %1019 = vmatprep.subr.bf16.mxu0 0
    %1020 = vmatpush1.bf16.msra.mxu0 0
    %1021 = vmatprep.mubr.bf16.mxu0 0
    %1022 = vmatmul.mubr.bf16.gmra.mrb[0].mxu0 %v828
    %v1023 = vpop.f32.mrb[0].mxu0
    %v1024 = vadd.f32 0.0, %v1023
    %v1025 = vpop.f32.mrb[0].mxu0
    %v1026 = vadd.f32 0.0, %v1025
    %v1027 = vpop.f32.mrb[0].mxu0
    %v1028 = vadd.f32 0.0, %v1027
    %v1029 = vpop.f32.mrb[0].mxu0
    %v1030 = vadd.f32 0.0, %v1029
    %1031 = vdwg.mxu0
    %1032 = vmatprep.subr.bf16.mxu0 0
    %1033 = vmatpush1.bf16.msra.mxu0 %v943
    %1034 = vmatprep.subr.bf16.mxu0 0
    %1035 = vmatpush1.bf16.msra.mxu0 %v946
    %1036 = vmatprep.subr.bf16.mxu0 0
    %1037 = vmatpush1.bf16.msra.mxu0 %v949
    %1038 = vmatprep.subr.bf16.mxu0 0
    %1039 = vmatpush1.bf16.msra.mxu0 %v952
    %1040 = vmatprep.subr.bf16.mxu0 0
    %1041 = vmatpush1.bf16.msra.mxu0 %v955
    %1042 = vmatprep.subr.bf16.mxu0 0
    %1043 = vmatpush1.bf16.msra.mxu0 %v958
    %1044 = vmatprep.subr.bf16.mxu0 0
    %1045 = vmatpush1.bf16.msra.mxu0 %v961
    %1046 = vmatprep.subr.bf16.mxu0 0
    %1047 = vmatpush1.bf16.msra.mxu0 %v964
    %1048 = vmatprep.subr.bf16.mxu0 0
    %1049 = vmatpush1.bf16.msra.mxu0 0
    %1050 = vmatprep.subr.bf16.mxu0 0
    %1051 = vmatpush1.bf16.msra.mxu0 0
    %1052 = vmatprep.subr.bf16.mxu0 0
    %1053 = vmatpush1.bf16.msra.mxu0 0
    %1054 = vmatprep.subr.bf16.mxu0 0
    %1055 = vmatpush1.bf16.msra.mxu0 0
    %1056 = vmatprep.subr.bf16.mxu0 0
    %1057 = vmatpush1.bf16.msra.mxu0 0
    %1058 = vmatprep.subr.bf16.mxu0 0
    %1059 = vmatpush1.bf16.msra.mxu0 0
    %1060 = vmatprep.subr.bf16.mxu0 0
    %1061 = vmatpush1.bf16.msra.mxu0 0
    %1062 = vmatprep.subr.bf16.mxu0 0
    %1063 = vmatpush1.bf16.msra.mxu0 0
    %1064 = vmatprep.mubr.bf16.mxu0 0
    %1065 = vmatmul.mubr.bf16.gmra.mrb[0].mxu0 %v828
    %v1066 = vpop.f32.mrb[0].mxu0
    %v1067 = vadd.f32 0.0, %v1066
    %v1068 = vpop.f32.mrb[0].mxu0
    %v1069 = vpop.f32.mrb[0].mxu0
    %v1070 = vadd.f32 0.0, %v1069
    %v1071 = vpop.f32.mrb[0].mxu0
    %1072 = vdwg.mxu0
    %v1073 = vadd.f32 %v822, %v1024
    %v1074 = vadd.f32 %v825, %v1028
    %v1075 = vtanh.pop %v1073
    %v1076 = vtanh.pop %v1074
    %vm1077 = vcmp.gt.f32.partialorder %v1073, 0.0
    %vm1078 = vcmp.gt.f32.partialorder %v1074, 0.0
    %v1079 = vmul.f32 %v1075, 0.25
    %v1080 = vmul.f32 %v1076, 0.25
    %v1081 = vsel %vm1077, %v1075, %v1079
    %v1082 = vsel %vm1078, %v1076, %v1080
    %v1083 = vadd.f32 %v823, %v1026
    %v1084 = vadd.f32 %v826, %v1030
    %v1085 = vtanh.pop %v1083
    %v1086 = vtanh.pop %v1084
    %vm1087 = vcmp.gt.f32.partialorder %v1083, 0.0
    %vm1088 = vcmp.gt.f32.partialorder %v1084, 0.0
    %v1089 = vmul.f32 %v1085, 0.25
    %v1090 = vmul.f32 %v1086, 0.25
    %v1091 = vsel %vm1087, %v1085, %v1089
    %v1092 = vsel %vm1088, %v1086, %v1090
    %v1093 = vadd.f32 %v1067, %v527
    %v1094 = vadd.f32 %v1070, %v527
    %v1095 = vmul.f32 %v1081, %v1093
    %v1096 = vmul.f32 %v1082, %v1094
    %v1097 = vadd.f32 %v824, %v1095
    %v1098 = vadd.f32 %v827, %v1096
    %v1099 = vtanh.pop %v1097
    %v1100 = vtanh.pop %v1098
    %vm1101 = vcmp.gt.f32.partialorder %v1097, 0.0
    %vm1102 = vcmp.gt.f32.partialorder %v1098, 0.0
    %v1103 = vmul.f32 %v1099, 0.25
    %v1104 = vmul.f32 %v1100, 0.25
    %v1105 = vsel %vm1101, %v1099, %v1103
    %v1106 = vsel %vm1102, %v1100, %v1104
    %v1107 = vsub.f32 %v817, %v1105
    %v1108 = vsub.f32 %v818, %v1106
    %v1109 = vmul.f32 %v1091, %v1107
    %v1110 = vmul.f32 %v1092, %v1108
    %v1111 = vadd.f32 %v1105, %v1109
    %v1112 = vadd.f32 %v1106, %v1110
    %s1113 = scalar_lea.vmem [#allocation9], 16
    %1114 = vst [vmem:[%s1113] sm:$0xff] %v1111
    %1115 = vst [vmem:[%s1113 + $0x8] sm:$0xff] %v1112
    %s1116 = scalar_lea.vmem [#allocation2], 96
    %v1117 = vld [vmem:[%s1116] sm:$0xff]
    %v1118 = vld [vmem:[%s1116 + $0x8] sm:$0xff]
    %v1119 = vld [vmem:[%s1116 + $0x10] sm:$0xff]
    %v1120 = vld [vmem:[%s1116 + $0x18] sm:$0xff]
    %v1121 = vld [vmem:[%s1116 + $0x20] sm:$0xff]
    %v1122 = vld [vmem:[%s1116 + $0x28] sm:$0xff]
    %v1123 = vpack.c.bf16 %v1112, %v1111
    %v1124 = vld [vmem:[#allocation8] sm:$0xff]
    %v1125 = vld [vmem:[#allocation8 + $0x8] sm:$0xf]
    %v1126 = vld [vmem:[#allocation8 + $0xc] sm:$0xff]
    %v1127 = vld [vmem:[#allocation8 + $0x14] sm:$0xf]
    %v1128 = vld [vmem:[#allocation8 + $0x18] sm:$0xff]
    %v1129 = vld [vmem:[#allocation8 + $0x20] sm:$0xf]
    %v1130 = vld [vmem:[#allocation8 + $0x24] sm:$0xff]
    %v1131 = vld [vmem:[#allocation8 + $0x2c] sm:$0xf]
    %v1132 = vld [vmem:[#allocation8 + $0x30] sm:$0xff]
    %v1133 = vld [vmem:[#allocation8 + $0x38] sm:$0xf]
    %v1134 = vld [vmem:[#allocation8 + $0x3c] sm:$0xff]
    %v1135 = vld [vmem:[#allocation8 + $0x44] sm:$0xf]
    %v1136 = vld [vmem:[#allocation8 + $0x48] sm:$0xff]
    %v1137 = vld [vmem:[#allocation8 + $0x50] sm:$0xf]
    %v1138 = vld [vmem:[#allocation8 + $0x54] sm:$0xff]
    %v1139 = vld [vmem:[#allocation8 + $0x5c] sm:$0xf]
    %v1140 = vld [vmem:[#allocation8 + $0x60] sm:$0xff]
    %v1141 = vld [vmem:[#allocation8 + $0x68] sm:$0xf]
    %v1142 = vld [vmem:[#allocation8 + $0x6c] sm:$0xff]
    %v1143 = vld [vmem:[#allocation8 + $0x74] sm:$0xf]
    %v1144 = vld [vmem:[#allocation8 + $0x78] sm:$0xff]
    %v1145 = vld [vmem:[#allocation8 + $0x80] sm:$0xf]
    %v1146 = vld [vmem:[#allocation8 + $0x84] sm:$0xff]
    %v1147 = vld [vmem:[#allocation8 + $0x8c] sm:$0xf]
    %v1148 = vld [vmem:[#allocation8 + $0x90] sm:$0xff]
    %v1149 = vld [vmem:[#allocation8 + $0x98] sm:$0xf]
    %v1150 = vld [vmem:[#allocation8 + $0x9c] sm:$0xff]
    %v1151 = vld [vmem:[#allocation8 + $0xa4] sm:$0xf]
    %v1152 = vld [vmem:[#allocation8 + $0xa8] sm:$0xff]
    %v1153 = vld [vmem:[#allocation8 + $0xb0] sm:$0xf]
    %v1154 = vld [vmem:[#allocation8 + $0xb4] sm:$0xff]
    %v1155 = vld [vmem:[#allocation8 + $0xbc] sm:$0xf]
    %v1188 = vunpack.c.l.b16 %v1124
    %v1189 = vunpack.c.h.b16 %v1124
    %v1190 = vunpack.c.l.b16 %v1125
    %v1191 = vunpack.c.l.b16 %v1126
    %v1192 = vunpack.c.h.b16 %v1126
    %v1193 = vunpack.c.l.b16 %v1127
    %v1194 = vunpack.c.l.b16 %v1128
    %v1195 = vunpack.c.h.b16 %v1128
    %v1196 = vunpack.c.l.b16 %v1129
    %v1197 = vunpack.c.l.b16 %v1130
    %v1198 = vunpack.c.h.b16 %v1130
    %v1199 = vunpack.c.l.b16 %v1131
    %v1200 = vunpack.c.l.b16 %v1132
    %v1201 = vunpack.c.h.b16 %v1132
    %v1202 = vunpack.c.l.b16 %v1133
    %v1203 = vunpack.c.l.b16 %v1134
    %v1204 = vunpack.c.h.b16 %v1134
    %v1205 = vunpack.c.l.b16 %v1135
    %v1206 = vunpack.c.l.b16 %v1136
    %v1207 = vunpack.c.h.b16 %v1136
    %v1208 = vunpack.c.l.b16 %v1137
    %v1209 = vunpack.c.l.b16 %v1138
    %v1210 = vunpack.c.h.b16 %v1138
    %v1211 = vunpack.c.l.b16 %v1139
    %v1212 = vunpack.c.l.b16 %v1140
    %v1213 = vunpack.c.h.b16 %v1140
    %v1214 = vunpack.c.l.b16 %v1141
    %v1215 = vunpack.c.l.b16 %v1142
    %v1216 = vunpack.c.h.b16 %v1142
    %v1217 = vunpack.c.l.b16 %v1143
    %v1218 = vunpack.c.l.b16 %v1144
    %v1219 = vunpack.c.h.b16 %v1144
    %v1220 = vunpack.c.l.b16 %v1145
    %v1221 = vunpack.c.l.b16 %v1146
    %v1222 = vunpack.c.h.b16 %v1146
    %v1223 = vunpack.c.l.b16 %v1147
    %v1224 = vunpack.c.l.b16 %v1148
    %v1225 = vunpack.c.h.b16 %v1148
    %v1226 = vunpack.c.l.b16 %v1149
    %v1227 = vunpack.c.l.b16 %v1150
    %v1228 = vunpack.c.h.b16 %v1150
    %v1229 = vunpack.c.l.b16 %v1151
    %v1230 = vunpack.c.l.b16 %v1152
    %v1231 = vunpack.c.h.b16 %v1152
    %v1232 = vunpack.c.l.b16 %v1153
    %v1233 = vunpack.c.l.b16 %v1154
    %v1234 = vunpack.c.h.b16 %v1154
    %v1235 = vunpack.c.l.b16 %v1155
    %v1236 = vpack.c.b16 %v1191, %v1188
    %v1237 = vpack.c.b16 %v1192, %v1189
    %v1238 = vpack.c.b16 %v1193, %v1190
    %v1239 = vpack.c.b16 %v1197, %v1194
    %v1240 = vpack.c.b16 %v1198, %v1195
    %v1241 = vpack.c.b16 %v1199, %v1196
    %v1242 = vpack.c.b16 %v1203, %v1200
    %v1243 = vpack.c.b16 %v1204, %v1201
    %v1244 = vpack.c.b16 %v1205, %v1202
    %v1245 = vpack.c.b16 %v1209, %v1206
    %v1246 = vpack.c.b16 %v1210, %v1207
    %v1247 = vpack.c.b16 %v1211, %v1208
    %v1248 = vpack.c.b16 %v1215, %v1212
    %v1249 = vpack.c.b16 %v1216, %v1213
    %v1250 = vpack.c.b16 %v1217, %v1214
    %v1251 = vpack.c.b16 %v1221, %v1218
    %v1252 = vpack.c.b16 %v1222, %v1219
    %v1253 = vpack.c.b16 %v1223, %v1220
    %v1254 = vpack.c.b16 %v1227, %v1224
    %v1255 = vpack.c.b16 %v1228, %v1225
    %v1256 = vpack.c.b16 %v1229, %v1226
    %v1257 = vpack.c.b16 %v1233, %v1230
    %v1258 = vpack.c.b16 %v1234, %v1231
    %v1259 = vpack.c.b16 %v1235, %v1232
    %1284 = vmatprep.subr.bf16.mxu0 %v1237
    %1285 = vmatpush1.bf16.msra.mxu0 %v1236
    %1286 = vmatprep.subr.bf16.mxu0 %v1240
    %1287 = vmatpush1.bf16.msra.mxu0 %v1239
    %1288 = vmatprep.subr.bf16.mxu0 %v1243
    %1289 = vmatpush1.bf16.msra.mxu0 %v1242
    %1290 = vmatprep.subr.bf16.mxu0 %v1246
    %1291 = vmatpush1.bf16.msra.mxu0 %v1245
    %1292 = vmatprep.subr.bf16.mxu0 %v1249
    %1293 = vmatpush1.bf16.msra.mxu0 %v1248
    %1294 = vmatprep.subr.bf16.mxu0 %v1252
    %1295 = vmatpush1.bf16.msra.mxu0 %v1251
    %1296 = vmatprep.subr.bf16.mxu0 %v1255
    %1297 = vmatpush1.bf16.msra.mxu0 %v1254
    %1298 = vmatprep.subr.bf16.mxu0 %v1258
    %1299 = vmatpush1.bf16.msra.mxu0 %v1257
    %1300 = vmatprep.subr.bf16.mxu0 0
    %1301 = vmatpush1.bf16.msra.mxu0 0
    %1302 = vmatprep.subr.bf16.mxu0 0
    %1303 = vmatpush1.bf16.msra.mxu0 0
    %1304 = vmatprep.subr.bf16.mxu0 0
    %1305 = vmatpush1.bf16.msra.mxu0 0
    %1306 = vmatprep.subr.bf16.mxu0 0
    %1307 = vmatpush1.bf16.msra.mxu0 0
    %1308 = vmatprep.subr.bf16.mxu0 0
    %1309 = vmatpush1.bf16.msra.mxu0 0
    %1310 = vmatprep.subr.bf16.mxu0 0
    %1311 = vmatpush1.bf16.msra.mxu0 0
    %1312 = vmatprep.subr.bf16.mxu0 0
    %1313 = vmatpush1.bf16.msra.mxu0 0
    %1314 = vmatprep.subr.bf16.mxu0 0
    %1315 = vmatpush1.bf16.msra.mxu0 0
    %1316 = vmatprep.mubr.bf16.mxu0 0
    %1317 = vmatmul.mubr.bf16.gmra.mrb[0].mxu0 %v1123
    %v1318 = vpop.f32.mrb[0].mxu0
    %v1319 = vadd.f32 0.0, %v1318
    %v1320 = vpop.f32.mrb[0].mxu0
    %v1321 = vadd.f32 0.0, %v1320
    %v1322 = vpop.f32.mrb[0].mxu0
    %v1323 = vadd.f32 0.0, %v1322
    %v1324 = vpop.f32.mrb[0].mxu0
    %v1325 = vadd.f32 0.0, %v1324
    %1326 = vdwg.mxu0
    %1327 = vmatprep.subr.bf16.mxu0 0
    %1328 = vmatpush1.bf16.msra.mxu0 %v1238
    %1329 = vmatprep.subr.bf16.mxu0 0
    %1330 = vmatpush1.bf16.msra.mxu0 %v1241
    %1331 = vmatprep.subr.bf16.mxu0 0
    %1332 = vmatpush1.bf16.msra.mxu0 %v1244
    %1333 = vmatprep.subr.bf16.mxu0 0
    %1334 = vmatpush1.bf16.msra.mxu0 %v1247
    %1335 = vmatprep.subr.bf16.mxu0 0
    %1336 = vmatpush1.bf16.msra.mxu0 %v1250
    %1337 = vmatprep.subr.bf16.mxu0 0
    %1338 = vmatpush1.bf16.msra.mxu0 %v1253
    %1339 = vmatprep.subr.bf16.mxu0 0
    %1340 = vmatpush1.bf16.msra.mxu0 %v1256
    %1341 = vmatprep.subr.bf16.mxu0 0
    %1342 = vmatpush1.bf16.msra.mxu0 %v1259
    %1343 = vmatprep.subr.bf16.mxu0 0
    %1344 = vmatpush1.bf16.msra.mxu0 0
    %1345 = vmatprep.subr.bf16.mxu0 0
    %1346 = vmatpush1.bf16.msra.mxu0 0
    %1347 = vmatprep.subr.bf16.mxu0 0
    %1348 = vmatpush1.bf16.msra.mxu0 0
    %1349 = vmatprep.subr.bf16.mxu0 0
    %1350 = vmatpush1.bf16.msra.mxu0 0
    %1351 = vmatprep.subr.bf16.mxu0 0
    %1352 = vmatpush1.bf16.msra.mxu0 0
    %1353 = vmatprep.subr.bf16.mxu0 0
    %1354 = vmatpush1.bf16.msra.mxu0 0
    %1355 = vmatprep.subr.bf16.mxu0 0
    %1356 = vmatpush1.bf16.msra.mxu0 0
    %1357 = vmatprep.subr.bf16.mxu0 0
    %1358 = vmatpush1.bf16.msra.mxu0 0
    %1359 = vmatprep.mubr.bf16.mxu0 0
    %1360 = vmatmul.mubr.bf16.gmra.mrb[0].mxu0 %v1123
    %v1361 = vpop.f32.mrb[0].mxu0
    %v1362 = vadd.f32 0.0, %v1361
    %v1363 = vpop.f32.mrb[0].mxu0
    %v1364 = vpop.f32.mrb[0].mxu0
    %v1365 = vadd.f32 0.0, %v1364
    %v1366 = vpop.f32.mrb[0].mxu0
    %1367 = vdwg.mxu0
    %v1368 = vadd.f32 %v1117, %v1319
    %v1369 = vadd.f32 %v1120, %v1323
    %v1370 = vtanh.pop %v1368
    %v1371 = vtanh.pop %v1369
    %vm1372 = vcmp.gt.f32.partialorder %v1368, 0.0
    %vm1373 = vcmp.gt.f32.partialorder %v1369, 0.0
    %v1374 = vmul.f32 %v1370, 0.25
    %v1375 = vmul.f32 %v1371, 0.25
    %v1376 = vsel %vm1372, %v1370, %v1374
    %v1377 = vsel %vm1373, %v1371, %v1375
    %v1378 = vadd.f32 %v1118, %v1321
    %v1379 = vadd.f32 %v1121, %v1325
    %v1380 = vtanh.pop %v1378
    %v1381 = vtanh.pop %v1379
    %vm1382 = vcmp.gt.f32.partialorder %v1378, 0.0
    %vm1383 = vcmp.gt.f32.partialorder %v1379, 0.0
    %v1384 = vmul.f32 %v1380, 0.25
    %v1385 = vmul.f32 %v1381, 0.25
    %v1386 = vsel %vm1382, %v1380, %v1384
    %v1387 = vsel %vm1383, %v1381, %v1385
    %v1388 = vadd.f32 %v1362, %v527
    %v1389 = vadd.f32 %v1365, %v527
    %v1390 = vmul.f32 %v1376, %v1388
    %v1391 = vmul.f32 %v1377, %v1389
    %v1392 = vadd.f32 %v1119, %v1390
    %v1393 = vadd.f32 %v1122, %v1391
    %v1394 = vtanh.pop %v1392
    %v1395 = vtanh.pop %v1393
    %vm1396 = vcmp.gt.f32.partialorder %v1392, 0.0
    %vm1397 = vcmp.gt.f32.partialorder %v1393, 0.0
    %v1398 = vmul.f32 %v1394, 0.25
    %v1399 = vmul.f32 %v1395, 0.25
    %v1400 = vsel %vm1396, %v1394, %v1398
    %v1401 = vsel %vm1397, %v1395, %v1399
    %v1402 = vsub.f32 %v1111, %v1400
    %v1403 = vsub.f32 %v1112, %v1401
    %v1404 = vmul.f32 %v1386, %v1402
    %v1405 = vmul.f32 %v1387, %v1403
    %v1406 = vadd.f32 %v1400, %v1404
    %v1407 = vadd.f32 %v1401, %v1405
    %s1408 = scalar_lea.vmem [#allocation9], 32
    %1409 = vst [vmem:[%s1408] sm:$0xff] %v1406
    %1410 = vst [vmem:[%s1408 + $0x8] sm:$0xff] %v1407
    %s1411 = scalar_lea.vmem [#allocation2], 144
    %v1412 = vld [vmem:[%s1411] sm:$0xff]
    %v1413 = vld [vmem:[%s1411 + $0x8] sm:$0xff]
    %v1414 = vld [vmem:[%s1411 + $0x10] sm:$0xff]
    %v1415 = vld [vmem:[%s1411 + $0x18] sm:$0xff]
    %v1416 = vld [vmem:[%s1411 + $0x20] sm:$0xff]
    %v1417 = vld [vmem:[%s1411 + $0x28] sm:$0xff]
    %v1418 = vpack.c.bf16 %v1407, %v1406
    %v1419 = vld [vmem:[#allocation8] sm:$0xff]
    %v1420 = vld [vmem:[#allocation8 + $0x8] sm:$0xf]
    %v1421 = vld [vmem:[#allocation8 + $0xc] sm:$0xff]
    %v1422 = vld [vmem:[#allocation8 + $0x14] sm:$0xf]
    %v1423 = vld [vmem:[#allocation8 + $0x18] sm:$0xff]
    %v1424 = vld [vmem:[#allocation8 + $0x20] sm:$0xf]
    %v1425 = vld [vmem:[#allocation8 + $0x24] sm:$0xff]
    %v1426 = vld [vmem:[#allocation8 + $0x2c] sm:$0xf]
    %v1427 = vld [vmem:[#allocation8 + $0x30] sm:$0xff]
    %v1428 = vld [vmem:[#allocation8 + $0x38] sm:$0xf]
    %v1429 = vld [vmem:[#allocation8 + $0x3c] sm:$0xff]
    %v1430 = vld [vmem:[#allocation8 + $0x44] sm:$0xf]
    %v1431 = vld [vmem:[#allocation8 + $0x48] sm:$0xff]
    %v1432 = vld [vmem:[#allocation8 + $0x50] sm:$0xf]
    %v1433 = vld [vmem:[#allocation8 + $0x54] sm:$0xff]
    %v1434 = vld [vmem:[#allocation8 + $0x5c] sm:$0xf]
    %v1435 = vld [vmem:[#allocation8 + $0x60] sm:$0xff]
    %v1436 = vld [vmem:[#allocation8 + $0x68] sm:$0xf]
    %v1437 = vld [vmem:[#allocation8 + $0x6c] sm:$0xff]
    %v1438 = vld [vmem:[#allocation8 + $0x74] sm:$0xf]
    %v1439 = vld [vmem:[#allocation8 + $0x78] sm:$0xff]
    %v1440 = vld [vmem:[#allocation8 + $0x80] sm:$0xf]
    %v1441 = vld [vmem:[#allocation8 + $0x84] sm:$0xff]
    %v1442 = vld [vmem:[#allocation8 + $0x8c] sm:$0xf]
    %v1443 = vld [vmem:[#allocation8 + $0x90] sm:$0xff]
    %v1444 = vld [vmem:[#allocation8 + $0x98] sm:$0xf]
    %v1445 = vld [vmem:[#allocation8 + $0x9c] sm:$0xff]
    %v1446 = vld [vmem:[#allocation8 + $0xa4] sm:$0xf]
    %v1447 = vld [vmem:[#allocation8 + $0xa8] sm:$0xff]
    %v1448 = vld [vmem:[#allocation8 + $0xb0] sm:$0xf]
    %v1449 = vld [vmem:[#allocation8 + $0xb4] sm:$0xff]
    %v1450 = vld [vmem:[#allocation8 + $0xbc] sm:$0xf]
    %v1483 = vunpack.c.l.b16 %v1419
    %v1484 = vunpack.c.h.b16 %v1419
    %v1485 = vunpack.c.l.b16 %v1420
    %v1486 = vunpack.c.l.b16 %v1421
    %v1487 = vunpack.c.h.b16 %v1421
    %v1488 = vunpack.c.l.b16 %v1422
    %v1489 = vunpack.c.l.b16 %v1423
    %v1490 = vunpack.c.h.b16 %v1423
    %v1491 = vunpack.c.l.b16 %v1424
    %v1492 = vunpack.c.l.b16 %v1425
    %v1493 = vunpack.c.h.b16 %v1425
    %v1494 = vunpack.c.l.b16 %v1426
    %v1495 = vunpack.c.l.b16 %v1427
    %v1496 = vunpack.c.h.b16 %v1427
    %v1497 = vunpack.c.l.b16 %v1428
    %v1498 = vunpack.c.l.b16 %v1429
    %v1499 = vunpack.c.h.b16 %v1429
    %v1500 = vunpack.c.l.b16 %v1430
    %v1501 = vunpack.c.l.b16 %v1431
    %v1502 = vunpack.c.h.b16 %v1431
    %v1503 = vunpack.c.l.b16 %v1432
    %v1504 = vunpack.c.l.b16 %v1433
    %v1505 = vunpack.c.h.b16 %v1433
    %v1506 = vunpack.c.l.b16 %v1434
    %v1507 = vunpack.c.l.b16 %v1435
    %v1508 = vunpack.c.h.b16 %v1435
    %v1509 = vunpack.c.l.b16 %v1436
    %v1510 = vunpack.c.l.b16 %v1437
    %v1511 = vunpack.c.h.b16 %v1437
    %v1512 = vunpack.c.l.b16 %v1438
    %v1513 = vunpack.c.l.b16 %v1439
    %v1514 = vunpack.c.h.b16 %v1439
    %v1515 = vunpack.c.l.b16 %v1440
    %v1516 = vunpack.c.l.b16 %v1441
    %v1517 = vunpack.c.h.b16 %v1441
    %v1518 = vunpack.c.l.b16 %v1442
    %v1519 = vunpack.c.l.b16 %v1443
    %v1520 = vunpack.c.h.b16 %v1443
    %v1521 = vunpack.c.l.b16 %v1444
    %v1522 = vunpack.c.l.b16 %v1445
    %v1523 = vunpack.c.h.b16 %v1445
    %v1524 = vunpack.c.l.b16 %v1446
    %v1525 = vunpack.c.l.b16 %v1447
    %v1526 = vunpack.c.h.b16 %v1447
    %v1527 = vunpack.c.l.b16 %v1448
    %v1528 = vunpack.c.l.b16 %v1449
    %v1529 = vunpack.c.h.b16 %v1449
    %v1530 = vunpack.c.l.b16 %v1450
    %v1531 = vpack.c.b16 %v1486, %v1483
    %v1532 = vpack.c.b16 %v1487, %v1484
    %v1533 = vpack.c.b16 %v1488, %v1485
    %v1534 = vpack.c.b16 %v1492, %v1489
    %v1535 = vpack.c.b16 %v1493, %v1490
    %v1536 = vpack.c.b16 %v1494, %v1491
    %v1537 = vpack.c.b16 %v1498, %v1495
    %v1538 = vpack.c.b16 %v1499, %v1496
    %v1539 = vpack.c.b16 %v1500, %v1497
    %v1540 = vpack.c.b16 %v1504, %v1501
    %v1541 = vpack.c.b16 %v1505, %v1502
    %v1542 = vpack.c.b16 %v1506, %v1503
    %v1543 = vpack.c.b16 %v1510, %v1507
    %v1544 = vpack.c.b16 %v1511, %v1508
    %v1545 = vpack.c.b16 %v1512, %v1509
    %v1546 = vpack.c.b16 %v1516, %v1513
    %v1547 = vpack.c.b16 %v1517, %v1514
    %v1548 = vpack.c.b16 %v1518, %v1515
    %v1549 = vpack.c.b16 %v1522, %v1519
    %v1550 = vpack.c.b16 %v1523, %v1520
    %v1551 = vpack.c.b16 %v1524, %v1521
    %v1552 = vpack.c.b16 %v1528, %v1525
    %v1553 = vpack.c.b16 %v1529, %v1526
    %v1554 = vpack.c.b16 %v1530, %v1527
    %1579 = vmatprep.subr.bf16.mxu0 %v1532
    %1580 = vmatpush1.bf16.msra.mxu0 %v1531
    %1581 = vmatprep.subr.bf16.mxu0 %v1535
    %1582 = vmatpush1.bf16.msra.mxu0 %v1534
    %1583 = vmatprep.subr.bf16.mxu0 %v1538
    %1584 = vmatpush1.bf16.msra.mxu0 %v1537
    %1585 = vmatprep.subr.bf16.mxu0 %v1541
    %1586 = vmatpush1.bf16.msra.mxu0 %v1540
    %1587 = vmatprep.subr.bf16.mxu0 %v1544
    %1588 = vmatpush1.bf16.msra.mxu0 %v1543
    %1589 = vmatprep.subr.bf16.mxu0 %v1547
    %1590 = vmatpush1.bf16.msra.mxu0 %v1546
    %1591 = vmatprep.subr.bf16.mxu0 %v1550
    %1592 = vmatpush1.bf16.msra.mxu0 %v1549
    %1593 = vmatprep.subr.bf16.mxu0 %v1553
    %1594 = vmatpush1.bf16.msra.mxu0 %v1552
    %1595 = vmatprep.subr.bf16.mxu0 0
    %1596 = vmatpush1.bf16.msra.mxu0 0
    %1597 = vmatprep.subr.bf16.mxu0 0
    %1598 = vmatpush1.bf16.msra.mxu0 0
    %1599 = vmatprep.subr.bf16.mxu0 0
    %1600 = vmatpush1.bf16.msra.mxu0 0
    %1601 = vmatprep.subr.bf16.mxu0 0
    %1602 = vmatpush1.bf16.msra.mxu0 0
    %1603 = vmatprep.subr.bf16.mxu0 0
    %1604 = vmatpush1.bf16.msra.mxu0 0
    %1605 = vmatprep.subr.bf16.mxu0 0
    %1606 = vmatpush1.bf16.msra.mxu0 0
    %1607 = vmatprep.subr.bf16.mxu0 0
    %1608 = vmatpush1.bf16.msra.mxu0 0
    %1609 = vmatprep.subr.bf16.mxu0 0
    %1610 = vmatpush1.bf16.msra.mxu0 0
    %1611 = vmatprep.mubr.bf16.mxu0 0
    %1612 = vmatmul.mubr.bf16.gmra.mrb[0].mxu0 %v1418
    %v1613 = vpop.f32.mrb[0].mxu0
    %v1614 = vadd.f32 0.0, %v1613
    %v1615 = vpop.f32.mrb[0].mxu0
    %v1616 = vadd.f32 0.0, %v1615
    %v1617 = vpop.f32.mrb[0].mxu0
    %v1618 = vadd.f32 0.0, %v1617
    %v1619 = vpop.f32.mrb[0].mxu0
    %v1620 = vadd.f32 0.0, %v1619
    %1621 = vdwg.mxu0
    %1622 = vmatprep.subr.bf16.mxu0 0
    %1623 = vmatpush1.bf16.msra.mxu0 %v1533
    %1624 = vmatprep.subr.bf16.mxu0 0
    %1625 = vmatpush1.bf16.msra.mxu0 %v1536
    %1626 = vmatprep.subr.bf16.mxu0 0
    %1627 = vmatpush1.bf16.msra.mxu0 %v1539
    %1628 = vmatprep.subr.bf16.mxu0 0
    %1629 = vmatpush1.bf16.msra.mxu0 %v1542
    %1630 = vmatprep.subr.bf16.mxu0 0
    %1631 = vmatpush1.bf16.msra.mxu0 %v1545
    %1632 = vmatprep.subr.bf16.mxu0 0
    %1633 = vmatpush1.bf16.msra.mxu0 %v1548
    %1634 = vmatprep.subr.bf16.mxu0 0
    %1635 = vmatpush1.bf16.msra.mxu0 %v1551
    %1636 = vmatprep.subr.bf16.mxu0 0
    %1637 = vmatpush1.bf16.msra.mxu0 %v1554
    %1638 = vmatprep.subr.bf16.mxu0 0
    %1639 = vmatpush1.bf16.msra.mxu0 0
    %1640 = vmatprep.subr.bf16.mxu0 0
    %1641 = vmatpush1.bf16.msra.mxu0 0
    %1642 = vmatprep.subr.bf16.mxu0 0
    %1643 = vmatpush1.bf16.msra.mxu0 0
    %1644 = vmatprep.subr.bf16.mxu0 0
    %1645 = vmatpush1.bf16.msra.mxu0 0
    %1646 = vmatprep.subr.bf16.mxu0 0
    %1647 = vmatpush1.bf16.msra.mxu0 0
    %1648 = vmatprep.subr.bf16.mxu0 0
    %1649 = vmatpush1.bf16.msra.mxu0 0
    %1650 = vmatprep.subr.bf16.mxu0 0
    %1651 = vmatpush1.bf16.msra.mxu0 0
    %1652 = vmatprep.subr.bf16.mxu0 0
    %1653 = vmatpush1.bf16.msra.mxu0 0
    %1654 = vmatprep.mubr.bf16.mxu0 0
    %1655 = vmatmul.mubr.bf16.gmra.mrb[0].mxu0 %v1418
    %v1656 = vpop.f32.mrb[0].mxu0
    %v1657 = vadd.f32 0.0, %v1656
    %v1658 = vpop.f32.mrb[0].mxu0
    %v1659 = vpop.f32.mrb[0].mxu0
    %v1660 = vadd.f32 0.0, %v1659
    %v1661 = vpop.f32.mrb[0].mxu0
    %1662 = vdwg.mxu0
    %v1663 = vadd.f32 %v1412, %v1614
    %v1664 = vadd.f32 %v1415, %v1618
    %v1665 = vtanh.pop %v1663
    %v1666 = vtanh.pop %v1664
    %vm1667 = vcmp.gt.f32.partialorder %v1663, 0.0
    %vm1668 = vcmp.gt.f32.partialorder %v1664, 0.0
    %v1669 = vmul.f32 %v1665, 0.25
    %v1670 = vmul.f32 %v1666, 0.25
    %v1671 = vsel %vm1667, %v1665, %v1669
    %v1672 = vsel %vm1668, %v1666, %v1670
    %v1673 = vadd.f32 %v1413, %v1616
    %v1674 = vadd.f32 %v1416, %v1620
    %v1675 = vtanh.pop %v1673
    %v1676 = vtanh.pop %v1674
    %vm1677 = vcmp.gt.f32.partialorder %v1673, 0.0
    %vm1678 = vcmp.gt.f32.partialorder %v1674, 0.0
    %v1679 = vmul.f32 %v1675, 0.25
    %v1680 = vmul.f32 %v1676, 0.25
    %v1681 = vsel %vm1677, %v1675, %v1679
    %v1682 = vsel %vm1678, %v1676, %v1680
    %v1683 = vadd.f32 %v1657, %v527
    %v1684 = vadd.f32 %v1660, %v527
    %v1685 = vmul.f32 %v1671, %v1683
    %v1686 = vmul.f32 %v1672, %v1684
    %v1687 = vadd.f32 %v1414, %v1685
    %v1688 = vadd.f32 %v1417, %v1686
    %v1689 = vtanh.pop %v1687
    %v1690 = vtanh.pop %v1688
    %vm1691 = vcmp.gt.f32.partialorder %v1687, 0.0
    %vm1692 = vcmp.gt.f32.partialorder %v1688, 0.0
    %v1693 = vmul.f32 %v1689, 0.25
    %v1694 = vmul.f32 %v1690, 0.25
    %v1695 = vsel %vm1691, %v1689, %v1693
    %v1696 = vsel %vm1692, %v1690, %v1694
    %v1697 = vsub.f32 %v1406, %v1695
    %v1698 = vsub.f32 %v1407, %v1696
    %v1699 = vmul.f32 %v1681, %v1697
    %v1700 = vmul.f32 %v1682, %v1698
    %v1701 = vadd.f32 %v1695, %v1699
    %v1702 = vadd.f32 %v1696, %v1700
    %s1703 = scalar_lea.vmem [#allocation9], 48
    %1704 = vst [vmem:[%s1703] sm:$0xff] %v1701
    %1705 = vst [vmem:[%s1703 + $0x8] sm:$0xff] %v1702
    %s1706 = scalar_lea.vmem [#allocation2], 192
    %v1707 = vld [vmem:[%s1706] sm:$0xff]
    %v1708 = vld [vmem:[%s1706 + $0x8] sm:$0xff]
    %v1709 = vld [vmem:[%s1706 + $0x10] sm:$0xff]
    %v1710 = vld [vmem:[%s1706 + $0x18] sm:$0xff]
    %v1711 = vld [vmem:[%s1706 + $0x20] sm:$0xff]
    %v1712 = vld [vmem:[%s1706 + $0x28] sm:$0xff]
    %v1713 = vpack.c.bf16 %v1702, %v1701
    %v1714 = vld [vmem:[#allocation8] sm:$0xff]
    %v1715 = vld [vmem:[#allocation8 + $0x8] sm:$0xf]
    %v1716 = vld [vmem:[#allocation8 + $0xc] sm:$0xff]
    %v1717 = vld [vmem:[#allocation8 + $0x14] sm:$0xf]
    %v1718 = vld [vmem:[#allocation8 + $0x18] sm:$0xff]
    %v1719 = vld [vmem:[#allocation8 + $0x20] sm:$0xf]
    %v1720 = vld [vmem:[#allocation8 + $0x24] sm:$0xff]
    %v1721 = vld [vmem:[#allocation8 + $0x2c] sm:$0xf]
    %v1722 = vld [vmem:[#allocation8 + $0x30] sm:$0xff]
    %v1723 = vld [vmem:[#allocation8 + $0x38] sm:$0xf]
    %v1724 = vld [vmem:[#allocation8 + $0x3c] sm:$0xff]
    %v1725 = vld [vmem:[#allocation8 + $0x44] sm:$0xf]
    %v1726 = vld [vmem:[#allocation8 + $0x48] sm:$0xff]
    %v1727 = vld [vmem:[#allocation8 + $0x50] sm:$0xf]
    %v1728 = vld [vmem:[#allocation8 + $0x54] sm:$0xff]
    %v1729 = vld [vmem:[#allocation8 + $0x5c] sm:$0xf]
    %v1730 = vld [vmem:[#allocation8 + $0x60] sm:$0xff]
    %v1731 = vld [vmem:[#allocation8 + $0x68] sm:$0xf]
    %v1732 = vld [vmem:[#allocation8 + $0x6c] sm:$0xff]
    %v1733 = vld [vmem:[#allocation8 + $0x74] sm:$0xf]
    %v1734 = vld [vmem:[#allocation8 + $0x78] sm:$0xff]
    %v1735 = vld [vmem:[#allocation8 + $0x80] sm:$0xf]
    %v1736 = vld [vmem:[#allocation8 + $0x84] sm:$0xff]
    %v1737 = vld [vmem:[#allocation8 + $0x8c] sm:$0xf]
    %v1738 = vld [vmem:[#allocation8 + $0x90] sm:$0xff]
    %v1739 = vld [vmem:[#allocation8 + $0x98] sm:$0xf]
    %v1740 = vld [vmem:[#allocation8 + $0x9c] sm:$0xff]
    %v1741 = vld [vmem:[#allocation8 + $0xa4] sm:$0xf]
    %v1742 = vld [vmem:[#allocation8 + $0xa8] sm:$0xff]
    %v1743 = vld [vmem:[#allocation8 + $0xb0] sm:$0xf]
    %v1744 = vld [vmem:[#allocation8 + $0xb4] sm:$0xff]
    %v1745 = vld [vmem:[#allocation8 + $0xbc] sm:$0xf]
    %v1778 = vunpack.c.l.b16 %v1714
    %v1779 = vunpack.c.h.b16 %v1714
    %v1780 = vunpack.c.l.b16 %v1715
    %v1781 = vunpack.c.l.b16 %v1716
    %v1782 = vunpack.c.h.b16 %v1716
    %v1783 = vunpack.c.l.b16 %v1717
    %v1784 = vunpack.c.l.b16 %v1718
    %v1785 = vunpack.c.h.b16 %v1718
    %v1786 = vunpack.c.l.b16 %v1719
    %v1787 = vunpack.c.l.b16 %v1720
    %v1788 = vunpack.c.h.b16 %v1720
    %v1789 = vunpack.c.l.b16 %v1721
    %v1790 = vunpack.c.l.b16 %v1722
    %v1791 = vunpack.c.h.b16 %v1722
    %v1792 = vunpack.c.l.b16 %v1723
    %v1793 = vunpack.c.l.b16 %v1724
    %v1794 = vunpack.c.h.b16 %v1724
    %v1795 = vunpack.c.l.b16 %v1725
    %v1796 = vunpack.c.l.b16 %v1726
    %v1797 = vunpack.c.h.b16 %v1726
    %v1798 = vunpack.c.l.b16 %v1727
    %v1799 = vunpack.c.l.b16 %v1728
    %v1800 = vunpack.c.h.b16 %v1728
    %v1801 = vunpack.c.l.b16 %v1729
    %v1802 = vunpack.c.l.b16 %v1730
    %v1803 = vunpack.c.h.b16 %v1730
    %v1804 = vunpack.c.l.b16 %v1731
    %v1805 = vunpack.c.l.b16 %v1732
    %v1806 = vunpack.c.h.b16 %v1732
    %v1807 = vunpack.c.l.b16 %v1733
    %v1808 = vunpack.c.l.b16 %v1734
    %v1809 = vunpack.c.h.b16 %v1734
    %v1810 = vunpack.c.l.b16 %v1735
    %v1811 = vunpack.c.l.b16 %v1736
    %v1812 = vunpack.c.h.b16 %v1736
    %v1813 = vunpack.c.l.b16 %v1737
    %v1814 = vunpack.c.l.b16 %v1738
    %v1815 = vunpack.c.h.b16 %v1738
    %v1816 = vunpack.c.l.b16 %v1739
    %v1817 = vunpack.c.l.b16 %v1740
    %v1818 = vunpack.c.h.b16 %v1740
    %v1819 = vunpack.c.l.b16 %v1741
    %v1820 = vunpack.c.l.b16 %v1742
    %v1821 = vunpack.c.h.b16 %v1742
    %v1822 = vunpack.c.l.b16 %v1743
    %v1823 = vunpack.c.l.b16 %v1744
    %v1824 = vunpack.c.h.b16 %v1744
    %v1825 = vunpack.c.l.b16 %v1745
    %v1826 = vpack.c.b16 %v1781, %v1778
    %v1827 = vpack.c.b16 %v1782, %v1779
    %v1828 = vpack.c.b16 %v1783, %v1780
    %v1829 = vpack.c.b16 %v1787, %v1784
    %v1830 = vpack.c.b16 %v1788, %v1785
    %v1831 = vpack.c.b16 %v1789, %v1786
    %v1832 = vpack.c.b16 %v1793, %v1790
    %v1833 = vpack.c.b16 %v1794, %v1791
    %v1834 = vpack.c.b16 %v1795, %v1792
    %v1835 = vpack.c.b16 %v1799, %v1796
    %v1836 = vpack.c.b16 %v1800, %v1797
    %v1837 = vpack.c.b16 %v1801, %v1798
    %v1838 = vpack.c.b16 %v1805, %v1802
    %v1839 = vpack.c.b16 %v1806, %v1803
    %v1840 = vpack.c.b16 %v1807, %v1804
    %v1841 = vpack.c.b16 %v1811, %v1808
    %v1842 = vpack.c.b16 %v1812, %v1809
    %v1843 = vpack.c.b16 %v1813, %v1810
    %v1844 = vpack.c.b16 %v1817, %v1814
    %v1845 = vpack.c.b16 %v1818, %v1815
    %v1846 = vpack.c.b16 %v1819, %v1816
    %v1847 = vpack.c.b16 %v1823, %v1820
    %v1848 = vpack.c.b16 %v1824, %v1821
    %v1849 = vpack.c.b16 %v1825, %v1822
    %1874 = vmatprep.subr.bf16.mxu0 %v1827
    %1875 = vmatpush1.bf16.msra.mxu0 %v1826
    %1876 = vmatprep.subr.bf16.mxu0 %v1830
    %1877 = vmatpush1.bf16.msra.mxu0 %v1829
    %1878 = vmatprep.subr.bf16.mxu0 %v1833
    %1879 = vmatpush1.bf16.msra.mxu0 %v1832
    %1880 = vmatprep.subr.bf16.mxu0 %v1836
    %1881 = vmatpush1.bf16.msra.mxu0 %v1835
    %1882 = vmatprep.subr.bf16.mxu0 %v1839
    %1883 = vmatpush1.bf16.msra.mxu0 %v1838
    %1884 = vmatprep.subr.bf16.mxu0 %v1842
    %1885 = vmatpush1.bf16.msra.mxu0 %v1841
    %1886 = vmatprep.subr.bf16.mxu0 %v1845
    %1887 = vmatpush1.bf16.msra.mxu0 %v1844
    %1888 = vmatprep.subr.bf16.mxu0 %v1848
    %1889 = vmatpush1.bf16.msra.mxu0 %v1847
    %1890 = vmatprep.subr.bf16.mxu0 0
    %1891 = vmatpush1.bf16.msra.mxu0 0
    %1892 = vmatprep.subr.bf16.mxu0 0
    %1893 = vmatpush1.bf16.msra.mxu0 0
    %1894 = vmatprep.subr.bf16.mxu0 0
    %1895 = vmatpush1.bf16.msra.mxu0 0
    %1896 = vmatprep.subr.bf16.mxu0 0
    %1897 = vmatpush1.bf16.msra.mxu0 0
    %1898 = vmatprep.subr.bf16.mxu0 0
    %1899 = vmatpush1.bf16.msra.mxu0 0
    %1900 = vmatprep.subr.bf16.mxu0 0
    %1901 = vmatpush1.bf16.msra.mxu0 0
    %1902 = vmatprep.subr.bf16.mxu0 0
    %1903 = vmatpush1.bf16.msra.mxu0 0
    %1904 = vmatprep.subr.bf16.mxu0 0
    %1905 = vmatpush1.bf16.msra.mxu0 0
    %1906 = vmatprep.mubr.bf16.mxu0 0
    %1907 = vmatmul.mubr.bf16.gmra.mrb[0].mxu0 %v1713
    %v1908 = vpop.f32.mrb[0].mxu0
    %v1909 = vadd.f32 0.0, %v1908
    %v1910 = vpop.f32.mrb[0].mxu0
    %v1911 = vadd.f32 0.0, %v1910
    %v1912 = vpop.f32.mrb[0].mxu0
    %v1913 = vadd.f32 0.0, %v1912
    %v1914 = vpop.f32.mrb[0].mxu0
    %v1915 = vadd.f32 0.0, %v1914
    %1916 = vdwg.mxu0
    %1917 = vmatprep.subr.bf16.mxu0 0
    %1918 = vmatpush1.bf16.msra.mxu0 %v1828
    %1919 = vmatprep.subr.bf16.mxu0 0
    %1920 = vmatpush1.bf16.msra.mxu0 %v1831
    %1921 = vmatprep.subr.bf16.mxu0 0
    %1922 = vmatpush1.bf16.msra.mxu0 %v1834
    %1923 = vmatprep.subr.bf16.mxu0 0
    %1924 = vmatpush1.bf16.msra.mxu0 %v1837
    %1925 = vmatprep.subr.bf16.mxu0 0
    %1926 = vmatpush1.bf16.msra.mxu0 %v1840
    %1927 = vmatprep.subr.bf16.mxu0 0
    %1928 = vmatpush1.bf16.msra.mxu0 %v1843
    %1929 = vmatprep.subr.bf16.mxu0 0
    %1930 = vmatpush1.bf16.msra.mxu0 %v1846
    %1931 = vmatprep.subr.bf16.mxu0 0
    %1932 = vmatpush1.bf16.msra.mxu0 %v1849
    %1933 = vmatprep.subr.bf16.mxu0 0
    %1934 = vmatpush1.bf16.msra.mxu0 0
    %1935 = vmatprep.subr.bf16.mxu0 0
    %1936 = vmatpush1.bf16.msra.mxu0 0
    %1937 = vmatprep.subr.bf16.mxu0 0
    %1938 = vmatpush1.bf16.msra.mxu0 0
    %1939 = vmatprep.subr.bf16.mxu0 0
    %1940 = vmatpush1.bf16.msra.mxu0 0
    %1941 = vmatprep.subr.bf16.mxu0 0
    %1942 = vmatpush1.bf16.msra.mxu0 0
    %1943 = vmatprep.subr.bf16.mxu0 0
    %1944 = vmatpush1.bf16.msra.mxu0 0
    %1945 = vmatprep.subr.bf16.mxu0 0
    %1946 = vmatpush1.bf16.msra.mxu0 0
    %1947 = vmatprep.subr.bf16.mxu0 0
    %1948 = vmatpush1.bf16.msra.mxu0 0
    %1949 = vmatprep.mubr.bf16.mxu0 0
    %1950 = vmatmul.mubr.bf16.gmra.mrb[0].mxu0 %v1713
    %v1951 = vpop.f32.mrb[0].mxu0
    %v1952 = vadd.f32 0.0, %v1951
    %v1953 = vpop.f32.mrb[0].mxu0
    %v1954 = vpop.f32.mrb[0].mxu0
    %v1955 = vadd.f32 0.0, %v1954
    %v1956 = vpop.f32.mrb[0].mxu0
    %1957 = vdwg.mxu0
    %v1958 = vadd.f32 %v1707, %v1909
    %v1959 = vadd.f32 %v1710, %v1913
    %v1960 = vtanh.pop %v1958
    %v1961 = vtanh.pop %v1959
    %vm1962 = vcmp.gt.f32.partialorder %v1958, 0.0
    %vm1963 = vcmp.gt.f32.partialorder %v1959, 0.0
    %v1964 = vmul.f32 %v1960, 0.25
    %v1965 = vmul.f32 %v1961, 0.25
    %v1966 = vsel %vm1962, %v1960, %v1964
    %v1967 = vsel %vm1963, %v1961, %v1965
    %v1968 = vadd.f32 %v1708, %v1911
    %v1969 = vadd.f32 %v1711, %v1915
    %v1970 = vtanh.pop %v1968
    %v1971 = vtanh.pop %v1969
    %vm1972 = vcmp.gt.f32.partialorder %v1968, 0.0
    %vm1973 = vcmp.gt.f32.partialorder %v1969, 0.0
    %v1974 = vmul.f32 %v1970, 0.25
    %v1975 = vmul.f32 %v1971, 0.25
    %v1976 = vsel %vm1972, %v1970, %v1974
    %v1977 = vsel %vm1973, %v1971, %v1975
    %v1978 = vadd.f32 %v1952, %v527
    %v1979 = vadd.f32 %v1955, %v527
    %v1980 = vmul.f32 %v1966, %v1978
    %v1981 = vmul.f32 %v1967, %v1979
    %v1982 = vadd.f32 %v1709, %v1980
    %v1983 = vadd.f32 %v1712, %v1981
    %v1984 = vtanh.pop %v1982
    %v1985 = vtanh.pop %v1983
    %vm1986 = vcmp.gt.f32.partialorder %v1982, 0.0
    %vm1987 = vcmp.gt.f32.partialorder %v1983, 0.0
    %v1988 = vmul.f32 %v1984, 0.25
    %v1989 = vmul.f32 %v1985, 0.25
    %v1990 = vsel %vm1986, %v1984, %v1988
    %v1991 = vsel %vm1987, %v1985, %v1989
    %v1992 = vsub.f32 %v1701, %v1990
    %v1993 = vsub.f32 %v1702, %v1991
    %v1994 = vmul.f32 %v1976, %v1992
    %v1995 = vmul.f32 %v1977, %v1993
    %v1996 = vadd.f32 %v1990, %v1994
    %v1997 = vadd.f32 %v1991, %v1995
    %s1998 = scalar_lea.vmem [#allocation9], 64
    %1999 = vst [vmem:[%s1998] sm:$0xff] %v1996
    %2000 = vst [vmem:[%s1998 + $0x8] sm:$0xff] %v1997
    %s2001 = scalar_lea.vmem [#allocation2], 240
    %v2002 = vld [vmem:[%s2001] sm:$0xff]
    %v2003 = vld [vmem:[%s2001 + $0x8] sm:$0xff]
    %v2004 = vld [vmem:[%s2001 + $0x10] sm:$0xff]
    %v2005 = vld [vmem:[%s2001 + $0x18] sm:$0xff]
    %v2006 = vld [vmem:[%s2001 + $0x20] sm:$0xff]
    %v2007 = vld [vmem:[%s2001 + $0x28] sm:$0xff]
    %v2008 = vpack.c.bf16 %v1997, %v1996
    %v2009 = vld [vmem:[#allocation8] sm:$0xff]
    %v2010 = vld [vmem:[#allocation8 + $0x8] sm:$0xf]
    %v2011 = vld [vmem:[#allocation8 + $0xc] sm:$0xff]
    %v2012 = vld [vmem:[#allocation8 + $0x14] sm:$0xf]
    %v2013 = vld [vmem:[#allocation8 + $0x18] sm:$0xff]
    %v2014 = vld [vmem:[#allocation8 + $0x20] sm:$0xf]
    %v2015 = vld [vmem:[#allocation8 + $0x24] sm:$0xff]
    %v2016 = vld [vmem:[#allocation8 + $0x2c] sm:$0xf]
    %v2017 = vld [vmem:[#allocation8 + $0x30] sm:$0xff]
    %v2018 = vld [vmem:[#allocation8 + $0x38] sm:$0xf]
    %v2019 = vld [vmem:[#allocation8 + $0x3c] sm:$0xff]
    %v2020 = vld [vmem:[#allocation8 + $0x44] sm:$0xf]
    %v2021 = vld [vmem:[#allocation8 + $0x48] sm:$0xff]
    %v2022 = vld [vmem:[#allocation8 + $0x50] sm:$0xf]
    %v2023 = vld [vmem:[#allocation8 + $0x54] sm:$0xff]
    %v2024 = vld [vmem:[#allocation8 + $0x5c] sm:$0xf]
    %v2025 = vld [vmem:[#allocation8 + $0x60] sm:$0xff]
    %v2026 = vld [vmem:[#allocation8 + $0x68] sm:$0xf]
    %v2027 = vld [vmem:[#allocation8 + $0x6c] sm:$0xff]
    %v2028 = vld [vmem:[#allocation8 + $0x74] sm:$0xf]
    %v2029 = vld [vmem:[#allocation8 + $0x78] sm:$0xff]
    %v2030 = vld [vmem:[#allocation8 + $0x80] sm:$0xf]
    %v2031 = vld [vmem:[#allocation8 + $0x84] sm:$0xff]
    %v2032 = vld [vmem:[#allocation8 + $0x8c] sm:$0xf]
    %v2033 = vld [vmem:[#allocation8 + $0x90] sm:$0xff]
    %v2034 = vld [vmem:[#allocation8 + $0x98] sm:$0xf]
    %v2035 = vld [vmem:[#allocation8 + $0x9c] sm:$0xff]
    %v2036 = vld [vmem:[#allocation8 + $0xa4] sm:$0xf]
    %v2037 = vld [vmem:[#allocation8 + $0xa8] sm:$0xff]
    %v2038 = vld [vmem:[#allocation8 + $0xb0] sm:$0xf]
    %v2039 = vld [vmem:[#allocation8 + $0xb4] sm:$0xff]
    %v2040 = vld [vmem:[#allocation8 + $0xbc] sm:$0xf]
    %v2073 = vunpack.c.l.b16 %v2009
    %v2074 = vunpack.c.h.b16 %v2009
    %v2075 = vunpack.c.l.b16 %v2010
    %v2076 = vunpack.c.l.b16 %v2011
    %v2077 = vunpack.c.h.b16 %v2011
    %v2078 = vunpack.c.l.b16 %v2012
    %v2079 = vunpack.c.l.b16 %v2013
    %v2080 = vunpack.c.h.b16 %v2013
    %v2081 = vunpack.c.l.b16 %v2014
    %v2082 = vunpack.c.l.b16 %v2015
    %v2083 = vunpack.c.h.b16 %v2015
    %v2084 = vunpack.c.l.b16 %v2016
    %v2085 = vunpack.c.l.b16 %v2017
    %v2086 = vunpack.c.h.b16 %v2017
    %v2087 = vunpack.c.l.b16 %v2018
    %v2088 = vunpack.c.l.b16 %v2019
    %v2089 = vunpack.c.h.b16 %v2019
    %v2090 = vunpack.c.l.b16 %v2020
    %v2091 = vunpack.c.l.b16 %v2021
    %v2092 = vunpack.c.h.b16 %v2021
    %v2093 = vunpack.c.l.b16 %v2022
    %v2094 = vunpack.c.l.b16 %v2023
    %v2095 = vunpack.c.h.b16 %v2023
    %v2096 = vunpack.c.l.b16 %v2024
    %v2097 = vunpack.c.l.b16 %v2025
    %v2098 = vunpack.c.h.b16 %v2025
    %v2099 = vunpack.c.l.b16 %v2026
    %v2100 = vunpack.c.l.b16 %v2027
    %v2101 = vunpack.c.h.b16 %v2027
    %v2102 = vunpack.c.l.b16 %v2028
    %v2103 = vunpack.c.l.b16 %v2029
    %v2104 = vunpack.c.h.b16 %v2029
    %v2105 = vunpack.c.l.b16 %v2030
    %v2106 = vunpack.c.l.b16 %v2031
    %v2107 = vunpack.c.h.b16 %v2031
    %v2108 = vunpack.c.l.b16 %v2032
    %v2109 = vunpack.c.l.b16 %v2033
    %v2110 = vunpack.c.h.b16 %v2033
    %v2111 = vunpack.c.l.b16 %v2034
    %v2112 = vunpack.c.l.b16 %v2035
    %v2113 = vunpack.c.h.b16 %v2035
    %v2114 = vunpack.c.l.b16 %v2036
    %v2115 = vunpack.c.l.b16 %v2037
    %v2116 = vunpack.c.h.b16 %v2037
    %v2117 = vunpack.c.l.b16 %v2038
    %v2118 = vunpack.c.l.b16 %v2039
    %v2119 = vunpack.c.h.b16 %v2039
    %v2120 = vunpack.c.l.b16 %v2040
    %v2121 = vpack.c.b16 %v2076, %v2073
    %v2122 = vpack.c.b16 %v2077, %v2074
    %v2123 = vpack.c.b16 %v2078, %v2075
    %v2124 = vpack.c.b16 %v2082, %v2079
    %v2125 = vpack.c.b16 %v2083, %v2080
    %v2126 = vpack.c.b16 %v2084, %v2081
    %v2127 = vpack.c.b16 %v2088, %v2085
    %v2128 = vpack.c.b16 %v2089, %v2086
    %v2129 = vpack.c.b16 %v2090, %v2087
    %v2130 = vpack.c.b16 %v2094, %v2091
    %v2131 = vpack.c.b16 %v2095, %v2092
    %v2132 = vpack.c.b16 %v2096, %v2093
    %v2133 = vpack.c.b16 %v2100, %v2097
    %v2134 = vpack.c.b16 %v2101, %v2098
    %v2135 = vpack.c.b16 %v2102, %v2099
    %v2136 = vpack.c.b16 %v2106, %v2103
    %v2137 = vpack.c.b16 %v2107, %v2104
    %v2138 = vpack.c.b16 %v2108, %v2105
    %v2139 = vpack.c.b16 %v2112, %v2109
    %v2140 = vpack.c.b16 %v2113, %v2110
    %v2141 = vpack.c.b16 %v2114, %v2111
    %v2142 = vpack.c.b16 %v2118, %v2115
    %v2143 = vpack.c.b16 %v2119, %v2116
    %v2144 = vpack.c.b16 %v2120, %v2117
    %2169 = vmatprep.subr.bf16.mxu0 %v2122
    %2170 = vmatpush1.bf16.msra.mxu0 %v2121
    %2171 = vmatprep.subr.bf16.mxu0 %v2125
    %2172 = vmatpush1.bf16.msra.mxu0 %v2124
    %2173 = vmatprep.subr.bf16.mxu0 %v2128
    %2174 = vmatpush1.bf16.msra.mxu0 %v2127
    %2175 = vmatprep.subr.bf16.mxu0 %v2131
    %2176 = vmatpush1.bf16.msra.mxu0 %v2130
    %2177 = vmatprep.subr.bf16.mxu0 %v2134
    %2178 = vmatpush1.bf16.msra.mxu0 %v2133
    %2179 = vmatprep.subr.bf16.mxu0 %v2137
    %2180 = vmatpush1.bf16.msra.mxu0 %v2136
    %2181 = vmatprep.subr.bf16.mxu0 %v2140
    %2182 = vmatpush1.bf16.msra.mxu0 %v2139
    %2183 = vmatprep.subr.bf16.mxu0 %v2143
    %2184 = vmatpush1.bf16.msra.mxu0 %v2142
    %2185 = vmatprep.subr.bf16.mxu0 0
    %2186 = vmatpush1.bf16.msra.mxu0 0
    %2187 = vmatprep.subr.bf16.mxu0 0
    %2188 = vmatpush1.bf16.msra.mxu0 0
    %2189 = vmatprep.subr.bf16.mxu0 0
    %2190 = vmatpush1.bf16.msra.mxu0 0
    %2191 = vmatprep.subr.bf16.mxu0 0
    %2192 = vmatpush1.bf16.msra.mxu0 0
    %2193 = vmatprep.subr.bf16.mxu0 0
    %2194 = vmatpush1.bf16.msra.mxu0 0
    %2195 = vmatprep.subr.bf16.mxu0 0
    %2196 = vmatpush1.bf16.msra.mxu0 0
    %2197 = vmatprep.subr.bf16.mxu0 0
    %2198 = vmatpush1.bf16.msra.mxu0 0
    %2199 = vmatprep.subr.bf16.mxu0 0
    %2200 = vmatpush1.bf16.msra.mxu0 0
    %2201 = vmatprep.mubr.bf16.mxu0 0
    %2202 = vmatmul.mubr.bf16.gmra.mrb[0].mxu0 %v2008
    %v2203 = vpop.f32.mrb[0].mxu0
    %v2204 = vadd.f32 0.0, %v2203
    %v2205 = vpop.f32.mrb[0].mxu0
    %v2206 = vadd.f32 0.0, %v2205
    %v2207 = vpop.f32.mrb[0].mxu0
    %v2208 = vadd.f32 0.0, %v2207
    %v2209 = vpop.f32.mrb[0].mxu0
    %v2210 = vadd.f32 0.0, %v2209
    %2211 = vdwg.mxu0
    %2212 = vmatprep.subr.bf16.mxu0 0
    %2213 = vmatpush1.bf16.msra.mxu0 %v2123
    %2214 = vmatprep.subr.bf16.mxu0 0
    %2215 = vmatpush1.bf16.msra.mxu0 %v2126
    %2216 = vmatprep.subr.bf16.mxu0 0
    %2217 = vmatpush1.bf16.msra.mxu0 %v2129
    %2218 = vmatprep.subr.bf16.mxu0 0
    %2219 = vmatpush1.bf16.msra.mxu0 %v2132
    %2220 = vmatprep.subr.bf16.mxu0 0
    %2221 = vmatpush1.bf16.msra.mxu0 %v2135
    %2222 = vmatprep.subr.bf16.mxu0 0
    %2223 = vmatpush1.bf16.msra.mxu0 %v2138
    %2224 = vmatprep.subr.bf16.mxu0 0
    %2225 = vmatpush1.bf16.msra.mxu0 %v2141
    %2226 = vmatprep.subr.bf16.mxu0 0
    %2227 = vmatpush1.bf16.msra.mxu0 %v2144
    %2228 = vmatprep.subr.bf16.mxu0 0
    %2229 = vmatpush1.bf16.msra.mxu0 0
    %2230 = vmatprep.subr.bf16.mxu0 0
    %2231 = vmatpush1.bf16.msra.mxu0 0
    %2232 = vmatprep.subr.bf16.mxu0 0
    %2233 = vmatpush1.bf16.msra.mxu0 0
    %2234 = vmatprep.subr.bf16.mxu0 0
    %2235 = vmatpush1.bf16.msra.mxu0 0
    %2236 = vmatprep.subr.bf16.mxu0 0
    %2237 = vmatpush1.bf16.msra.mxu0 0
    %2238 = vmatprep.subr.bf16.mxu0 0
    %2239 = vmatpush1.bf16.msra.mxu0 0
    %2240 = vmatprep.subr.bf16.mxu0 0
    %2241 = vmatpush1.bf16.msra.mxu0 0
    %2242 = vmatprep.subr.bf16.mxu0 0
    %2243 = vmatpush1.bf16.msra.mxu0 0
    %2244 = vmatprep.mubr.bf16.mxu0 0
    %2245 = vmatmul.mubr.bf16.gmra.mrb[0].mxu0 %v2008
    %v2246 = vpop.f32.mrb[0].mxu0
    %v2247 = vadd.f32 0.0, %v2246
    %v2248 = vpop.f32.mrb[0].mxu0
    %v2249 = vpop.f32.mrb[0].mxu0
    %v2250 = vadd.f32 0.0, %v2249
    %v2251 = vpop.f32.mrb[0].mxu0
    %2252 = vdwg.mxu0
    %v2253 = vadd.f32 %v2002, %v2204
    %v2254 = vadd.f32 %v2005, %v2208
    %v2255 = vtanh.pop %v2253
    %v2256 = vtanh.pop %v2254
    %vm2257 = vcmp.gt.f32.partialorder %v2253, 0.0
    %vm2258 = vcmp.gt.f32.partialorder %v2254, 0.0
    %v2259 = vmul.f32 %v2255, 0.25
    %v2260 = vmul.f32 %v2256, 0.25
    %v2261 = vsel %vm2257, %v2255, %v2259
    %v2262 = vsel %vm2258, %v2256, %v2260
    %v2263 = vadd.f32 %v2003, %v2206
    %v2264 = vadd.f32 %v2006, %v2210
    %v2265 = vtanh.pop %v2263
    %v2266 = vtanh.pop %v2264
    %vm2267 = vcmp.gt.f32.partialorder %v2263, 0.0
    %vm2268 = vcmp.gt.f32.partialorder %v2264, 0.0
    %v2269 = vmul.f32 %v2265, 0.25
    %v2270 = vmul.f32 %v2266, 0.25
    %v2271 = vsel %vm2267, %v2265, %v2269
    %v2272 = vsel %vm2268, %v2266, %v2270
    %v2273 = vadd.f32 %v2247, %v527
    %v2274 = vadd.f32 %v2250, %v527
    %v2275 = vmul.f32 %v2261, %v2273
    %v2276 = vmul.f32 %v2262, %v2274
    %v2277 = vadd.f32 %v2004, %v2275
    %v2278 = vadd.f32 %v2007, %v2276
    %v2279 = vtanh.pop %v2277
    %v2280 = vtanh.pop %v2278
    %vm2281 = vcmp.gt.f32.partialorder %v2277, 0.0
    %vm2282 = vcmp.gt.f32.partialorder %v2278, 0.0
    %v2283 = vmul.f32 %v2279, 0.25
    %v2284 = vmul.f32 %v2280, 0.25
    %v2285 = vsel %vm2281, %v2279, %v2283
    %v2286 = vsel %vm2282, %v2280, %v2284
    %v2287 = vsub.f32 %v1996, %v2285
    %v2288 = vsub.f32 %v1997, %v2286
    %v2289 = vmul.f32 %v2271, %v2287
    %v2290 = vmul.f32 %v2272, %v2288
    %v2291 = vadd.f32 %v2285, %v2289
    %v2292 = vadd.f32 %v2286, %v2290
    %s2293 = scalar_lea.vmem [#allocation9], 80
    %2294 = vst [vmem:[%s2293] sm:$0xff] %v2291
    %2295 = vst [vmem:[%s2293 + $0x8] sm:$0xff] %v2292
    %s2296 = scalar_lea.vmem [#allocation2], 288
    %v2297 = vld [vmem:[%s2296] sm:$0xff]
    %v2298 = vld [vmem:[%s2296 + $0x8] sm:$0xff]
    %v2299 = vld [vmem:[%s2296 + $0x10] sm:$0xff]
    %v2300 = vld [vmem:[%s2296 + $0x18] sm:$0xff]
    %v2301 = vld [vmem:[%s2296 + $0x20] sm:$0xff]
    %v2302 = vld [vmem:[%s2296 + $0x28] sm:$0xff]
    %v2303 = vpack.c.bf16 %v2292, %v2291
    %v2304 = vld [vmem:[#allocation8] sm:$0xff]
    %v2305 = vld [vmem:[#allocation8 + $0x8] sm:$0xf]
    %v2306 = vld [vmem:[#allocation8 + $0xc] sm:$0xff]
    %v2307 = vld [vmem:[#allocation8 + $0x14] sm:$0xf]
    %v2308 = vld [vmem:[#allocation8 + $0x18] sm:$0xff]
    %v2309 = vld [vmem:[#allocation8 + $0x20] sm:$0xf]
    %v2310 = vld [vmem:[#allocation8 + $0x24] sm:$0xff]
    %v2311 = vld [vmem:[#allocation8 + $0x2c] sm:$0xf]
    %v2312 = vld [vmem:[#allocation8 + $0x30] sm:$0xff]
    %v2313 = vld [vmem:[#allocation8 + $0x38] sm:$0xf]
    %v2314 = vld [vmem:[#allocation8 + $0x3c] sm:$0xff]
    %v2315 = vld [vmem:[#allocation8 + $0x44] sm:$0xf]
    %v2316 = vld [vmem:[#allocation8 + $0x48] sm:$0xff]
    %v2317 = vld [vmem:[#allocation8 + $0x50] sm:$0xf]
    %v2318 = vld [vmem:[#allocation8 + $0x54] sm:$0xff]
    %v2319 = vld [vmem:[#allocation8 + $0x5c] sm:$0xf]
    %v2320 = vld [vmem:[#allocation8 + $0x60] sm:$0xff]
    %v2321 = vld [vmem:[#allocation8 + $0x68] sm:$0xf]
    %v2322 = vld [vmem:[#allocation8 + $0x6c] sm:$0xff]
    %v2323 = vld [vmem:[#allocation8 + $0x74] sm:$0xf]
    %v2324 = vld [vmem:[#allocation8 + $0x78] sm:$0xff]
    %v2325 = vld [vmem:[#allocation8 + $0x80] sm:$0xf]
    %v2326 = vld [vmem:[#allocation8 + $0x84] sm:$0xff]
    %v2327 = vld [vmem:[#allocation8 + $0x8c] sm:$0xf]
    %v2328 = vld [vmem:[#allocation8 + $0x90] sm:$0xff]
    %v2329 = vld [vmem:[#allocation8 + $0x98] sm:$0xf]
    %v2330 = vld [vmem:[#allocation8 + $0x9c] sm:$0xff]
    %v2331 = vld [vmem:[#allocation8 + $0xa4] sm:$0xf]
    %v2332 = vld [vmem:[#allocation8 + $0xa8] sm:$0xff]
    %v2333 = vld [vmem:[#allocation8 + $0xb0] sm:$0xf]
    %v2334 = vld [vmem:[#allocation8 + $0xb4] sm:$0xff]
    %v2335 = vld [vmem:[#allocation8 + $0xbc] sm:$0xf]
    %v2368 = vunpack.c.l.b16 %v2304
    %v2369 = vunpack.c.h.b16 %v2304
    %v2370 = vunpack.c.l.b16 %v2305
    %v2371 = vunpack.c.l.b16 %v2306
    %v2372 = vunpack.c.h.b16 %v2306
    %v2373 = vunpack.c.l.b16 %v2307
    %v2374 = vunpack.c.l.b16 %v2308
    %v2375 = vunpack.c.h.b16 %v2308
    %v2376 = vunpack.c.l.b16 %v2309
    %v2377 = vunpack.c.l.b16 %v2310
    %v2378 = vunpack.c.h.b16 %v2310
    %v2379 = vunpack.c.l.b16 %v2311
    %v2380 = vunpack.c.l.b16 %v2312
    %v2381 = vunpack.c.h.b16 %v2312
    %v2382 = vunpack.c.l.b16 %v2313
    %v2383 = vunpack.c.l.b16 %v2314
    %v2384 = vunpack.c.h.b16 %v2314
    %v2385 = vunpack.c.l.b16 %v2315
    %v2386 = vunpack.c.l.b16 %v2316
    %v2387 = vunpack.c.h.b16 %v2316
    %v2388 = vunpack.c.l.b16 %v2317
    %v2389 = vunpack.c.l.b16 %v2318
    %v2390 = vunpack.c.h.b16 %v2318
    %v2391 = vunpack.c.l.b16 %v2319
    %v2392 = vunpack.c.l.b16 %v2320
    %v2393 = vunpack.c.h.b16 %v2320
    %v2394 = vunpack.c.l.b16 %v2321
    %v2395 = vunpack.c.l.b16 %v2322
    %v2396 = vunpack.c.h.b16 %v2322
    %v2397 = vunpack.c.l.b16 %v2323
    %v2398 = vunpack.c.l.b16 %v2324
    %v2399 = vunpack.c.h.b16 %v2324
    %v2400 = vunpack.c.l.b16 %v2325
    %v2401 = vunpack.c.l.b16 %v2326
    %v2402 = vunpack.c.h.b16 %v2326
    %v2403 = vunpack.c.l.b16 %v2327
    %v2404 = vunpack.c.l.b16 %v2328
    %v2405 = vunpack.c.h.b16 %v2328
    %v2406 = vunpack.c.l.b16 %v2329
    %v2407 = vunpack.c.l.b16 %v2330
    %v2408 = vunpack.c.h.b16 %v2330
    %v2409 = vunpack.c.l.b16 %v2331
    %v2410 = vunpack.c.l.b16 %v2332
    %v2411 = vunpack.c.h.b16 %v2332
    %v2412 = vunpack.c.l.b16 %v2333
    %v2413 = vunpack.c.l.b16 %v2334
    %v2414 = vunpack.c.h.b16 %v2334
    %v2415 = vunpack.c.l.b16 %v2335
    %v2416 = vpack.c.b16 %v2371, %v2368
    %v2417 = vpack.c.b16 %v2372, %v2369
    %v2418 = vpack.c.b16 %v2373, %v2370
    %v2419 = vpack.c.b16 %v2377, %v2374
    %v2420 = vpack.c.b16 %v2378, %v2375
    %v2421 = vpack.c.b16 %v2379, %v2376
    %v2422 = vpack.c.b16 %v2383, %v2380
    %v2423 = vpack.c.b16 %v2384, %v2381
    %v2424 = vpack.c.b16 %v2385, %v2382
    %v2425 = vpack.c.b16 %v2389, %v2386
    %v2426 = vpack.c.b16 %v2390, %v2387
    %v2427 = vpack.c.b16 %v2391, %v2388
    %v2428 = vpack.c.b16 %v2395, %v2392
    %v2429 = vpack.c.b16 %v2396, %v2393
    %v2430 = vpack.c.b16 %v2397, %v2394
    %v2431 = vpack.c.b16 %v2401, %v2398
    %v2432 = vpack.c.b16 %v2402, %v2399
    %v2433 = vpack.c.b16 %v2403, %v2400
    %v2434 = vpack.c.b16 %v2407, %v2404
    %v2435 = vpack.c.b16 %v2408, %v2405
    %v2436 = vpack.c.b16 %v2409, %v2406
    %v2437 = vpack.c.b16 %v2413, %v2410
    %v2438 = vpack.c.b16 %v2414, %v2411
    %v2439 = vpack.c.b16 %v2415, %v2412
    %2464 = vmatprep.subr.bf16.mxu0 %v2417
    %2465 = vmatpush1.bf16.msra.mxu0 %v2416
    %2466 = vmatprep.subr.bf16.mxu0 %v2420
    %2467 = vmatpush1.bf16.msra.mxu0 %v2419
    %2468 = vmatprep.subr.bf16.mxu0 %v2423
    %2469 = vmatpush1.bf16.msra.mxu0 %v2422
    %2470 = vmatprep.subr.bf16.mxu0 %v2426
    %2471 = vmatpush1.bf16.msra.mxu0 %v2425
    %2472 = vmatprep.subr.bf16.mxu0 %v2429
    %2473 = vmatpush1.bf16.msra.mxu0 %v2428
    %2474 = vmatprep.subr.bf16.mxu0 %v2432
    %2475 = vmatpush1.bf16.msra.mxu0 %v2431
    %2476 = vmatprep.subr.bf16.mxu0 %v2435
    %2477 = vmatpush1.bf16.msra.mxu0 %v2434
    %2478 = vmatprep.subr.bf16.mxu0 %v2438
    %2479 = vmatpush1.bf16.msra.mxu0 %v2437
    %2480 = vmatprep.subr.bf16.mxu0 0
    %2481 = vmatpush1.bf16.msra.mxu0 0
    %2482 = vmatprep.subr.bf16.mxu0 0
    %2483 = vmatpush1.bf16.msra.mxu0 0
    %2484 = vmatprep.subr.bf16.mxu0 0
    %2485 = vmatpush1.bf16.msra.mxu0 0
    %2486 = vmatprep.subr.bf16.mxu0 0
    %2487 = vmatpush1.bf16.msra.mxu0 0
    %2488 = vmatprep.subr.bf16.mxu0 0
    %2489 = vmatpush1.bf16.msra.mxu0 0
    %2490 = vmatprep.subr.bf16.mxu0 0
    %2491 = vmatpush1.bf16.msra.mxu0 0
    %2492 = vmatprep.subr.bf16.mxu0 0
    %2493 = vmatpush1.bf16.msra.mxu0 0
    %2494 = vmatprep.subr.bf16.mxu0 0
    %2495 = vmatpush1.bf16.msra.mxu0 0
    %2496 = vmatprep.mubr.bf16.mxu0 0
    %2497 = vmatmul.mubr.bf16.gmra.mrb[0].mxu0 %v2303
    %v2498 = vpop.f32.mrb[0].mxu0
    %v2499 = vadd.f32 0.0, %v2498
    %v2500 = vpop.f32.mrb[0].mxu0
    %v2501 = vadd.f32 0.0, %v2500
    %v2502 = vpop.f32.mrb[0].mxu0
    %v2503 = vadd.f32 0.0, %v2502
    %v2504 = vpop.f32.mrb[0].mxu0
    %v2505 = vadd.f32 0.0, %v2504
    %2506 = vdwg.mxu0
    %2507 = vmatprep.subr.bf16.mxu0 0
    %2508 = vmatpush1.bf16.msra.mxu0 %v2418
    %2509 = vmatprep.subr.bf16.mxu0 0
    %2510 = vmatpush1.bf16.msra.mxu0 %v2421
    %2511 = vmatprep.subr.bf16.mxu0 0
    %2512 = vmatpush1.bf16.msra.mxu0 %v2424
    %2513 = vmatprep.subr.bf16.mxu0 0
    %2514 = vmatpush1.bf16.msra.mxu0 %v2427
    %2515 = vmatprep.subr.bf16.mxu0 0
    %2516 = vmatpush1.bf16.msra.mxu0 %v2430
    %2517 = vmatprep.subr.bf16.mxu0 0
    %2518 = vmatpush1.bf16.msra.mxu0 %v2433
    %2519 = vmatprep.subr.bf16.mxu0 0
    %2520 = vmatpush1.bf16.msra.mxu0 %v2436
    %2521 = vmatprep.subr.bf16.mxu0 0
    %2522 = vmatpush1.bf16.msra.mxu0 %v2439
    %2523 = vmatprep.subr.bf16.mxu0 0
    %2524 = vmatpush1.bf16.msra.mxu0 0
    %2525 = vmatprep.subr.bf16.mxu0 0
    %2526 = vmatpush1.bf16.msra.mxu0 0
    %2527 = vmatprep.subr.bf16.mxu0 0
    %2528 = vmatpush1.bf16.msra.mxu0 0
    %2529 = vmatprep.subr.bf16.mxu0 0
    %2530 = vmatpush1.bf16.msra.mxu0 0
    %2531 = vmatprep.subr.bf16.mxu0 0
    %2532 = vmatpush1.bf16.msra.mxu0 0
    %2533 = vmatprep.subr.bf16.mxu0 0
    %2534 = vmatpush1.bf16.msra.mxu0 0
    %2535 = vmatprep.subr.bf16.mxu0 0
    %2536 = vmatpush1.bf16.msra.mxu0 0
    %2537 = vmatprep.subr.bf16.mxu0 0
    %2538 = vmatpush1.bf16.msra.mxu0 0
    %2539 = vmatprep.mubr.bf16.mxu0 0
    %2540 = vmatmul.mubr.bf16.gmra.mrb[0].mxu0 %v2303
    %v2541 = vpop.f32.mrb[0].mxu0
    %v2542 = vadd.f32 0.0, %v2541
    %v2543 = vpop.f32.mrb[0].mxu0
    %v2544 = vpop.f32.mrb[0].mxu0
    %v2545 = vadd.f32 0.0, %v2544
    %v2546 = vpop.f32.mrb[0].mxu0
    %2547 = vdwg.mxu0
    %v2548 = vadd.f32 %v2297, %v2499
    %v2549 = vadd.f32 %v2300, %v2503
    %v2550 = vtanh.pop %v2548
    %v2551 = vtanh.pop %v2549
    %vm2552 = vcmp.gt.f32.partialorder %v2548, 0.0
    %vm2553 = vcmp.gt.f32.partialorder %v2549, 0.0
    %v2554 = vmul.f32 %v2550, 0.25
    %v2555 = vmul.f32 %v2551, 0.25
    %v2556 = vsel %vm2552, %v2550, %v2554
    %v2557 = vsel %vm2553, %v2551, %v2555
    %v2558 = vadd.f32 %v2298, %v2501
    %v2559 = vadd.f32 %v2301, %v2505
    %v2560 = vtanh.pop %v2558
    %v2561 = vtanh.pop %v2559
    %vm2562 = vcmp.gt.f32.partialorder %v2558, 0.0
    %vm2563 = vcmp.gt.f32.partialorder %v2559, 0.0
    %v2564 = vmul.f32 %v2560, 0.25
    %v2565 = vmul.f32 %v2561, 0.25
    %v2566 = vsel %vm2562, %v2560, %v2564
    %v2567 = vsel %vm2563, %v2561, %v2565
    %v2568 = vadd.f32 %v2542, %v527
    %v2569 = vadd.f32 %v2545, %v527
    %v2570 = vmul.f32 %v2556, %v2568
    %v2571 = vmul.f32 %v2557, %v2569
    %v2572 = vadd.f32 %v2299, %v2570
    %v2573 = vadd.f32 %v2302, %v2571
    %v2574 = vtanh.pop %v2572
    %v2575 = vtanh.pop %v2573
    %vm2576 = vcmp.gt.f32.partialorder %v2572, 0.0
    %vm2577 = vcmp.gt.f32.partialorder %v2573, 0.0
    %v2578 = vmul.f32 %v2574, 0.25
    %v2579 = vmul.f32 %v2575, 0.25
    %v2580 = vsel %vm2576, %v2574, %v2578
    %v2581 = vsel %vm2577, %v2575, %v2579
    %v2582 = vsub.f32 %v2291, %v2580
    %v2583 = vsub.f32 %v2292, %v2581
    %v2584 = vmul.f32 %v2566, %v2582
    %v2585 = vmul.f32 %v2567, %v2583
    %v2586 = vadd.f32 %v2580, %v2584
    %v2587 = vadd.f32 %v2581, %v2585
    %s2588 = scalar_lea.vmem [#allocation9], 96
    %2589 = vst [vmem:[%s2588] sm:$0xff] %v2586
    %2590 = vst [vmem:[%s2588 + $0x8] sm:$0xff] %v2587
    %s2591 = scalar_lea.vmem [#allocation2], 336
    %v2592 = vld [vmem:[%s2591] sm:$0xff]
    %v2593 = vld [vmem:[%s2591 + $0x8] sm:$0xff]
    %v2594 = vld [vmem:[%s2591 + $0x10] sm:$0xff]
    %v2595 = vld [vmem:[%s2591 + $0x18] sm:$0xff]
    %v2596 = vld [vmem:[%s2591 + $0x20] sm:$0xff]
    %v2597 = vld [vmem:[%s2591 + $0x28] sm:$0xff]
    %v2598 = vpack.c.bf16 %v2587, %v2586
    %v2599 = vld [vmem:[#allocation8] sm:$0xff]
    %v2600 = vld [vmem:[#allocation8 + $0x8] sm:$0xf]
    %v2601 = vld [vmem:[#allocation8 + $0xc] sm:$0xff]
    %v2602 = vld [vmem:[#allocation8 + $0x14] sm:$0xf]
    %v2603 = vld [vmem:[#allocation8 + $0x18] sm:$0xff]
    %v2604 = vld [vmem:[#allocation8 + $0x20] sm:$0xf]
    %v2605 = vld [vmem:[#allocation8 + $0x24] sm:$0xff]
    %v2606 = vld [vmem:[#allocation8 + $0x2c] sm:$0xf]
    %v2607 = vld [vmem:[#allocation8 + $0x30] sm:$0xff]
    %v2608 = vld [vmem:[#allocation8 + $0x38] sm:$0xf]
    %v2609 = vld [vmem:[#allocation8 + $0x3c] sm:$0xff]
    %v2610 = vld [vmem:[#allocation8 + $0x44] sm:$0xf]
    %v2611 = vld [vmem:[#allocation8 + $0x48] sm:$0xff]
    %v2612 = vld [vmem:[#allocation8 + $0x50] sm:$0xf]
    %v2613 = vld [vmem:[#allocation8 + $0x54] sm:$0xff]
    %v2614 = vld [vmem:[#allocation8 + $0x5c] sm:$0xf]
    %v2615 = vld [vmem:[#allocation8 + $0x60] sm:$0xff]
    %v2616 = vld [vmem:[#allocation8 + $0x68] sm:$0xf]
    %v2617 = vld [vmem:[#allocation8 + $0x6c] sm:$0xff]
    %v2618 = vld [vmem:[#allocation8 + $0x74] sm:$0xf]
    %v2619 = vld [vmem:[#allocation8 + $0x78] sm:$0xff]
    %v2620 = vld [vmem:[#allocation8 + $0x80] sm:$0xf]
    %v2621 = vld [vmem:[#allocation8 + $0x84] sm:$0xff]
    %v2622 = vld [vmem:[#allocation8 + $0x8c] sm:$0xf]
    %v2623 = vld [vmem:[#allocation8 + $0x90] sm:$0xff]
    %v2624 = vld [vmem:[#allocation8 + $0x98] sm:$0xf]
    %v2625 = vld [vmem:[#allocation8 + $0x9c] sm:$0xff]
    %v2626 = vld [vmem:[#allocation8 + $0xa4] sm:$0xf]
    %v2627 = vld [vmem:[#allocation8 + $0xa8] sm:$0xff]
    %v2628 = vld [vmem:[#allocation8 + $0xb0] sm:$0xf]
    %v2629 = vld [vmem:[#allocation8 + $0xb4] sm:$0xff]
    %v2630 = vld [vmem:[#allocation8 + $0xbc] sm:$0xf]
    %v2663 = vunpack.c.l.b16 %v2599
    %v2664 = vunpack.c.h.b16 %v2599
    %v2665 = vunpack.c.l.b16 %v2600
    %v2666 = vunpack.c.l.b16 %v2601
    %v2667 = vunpack.c.h.b16 %v2601
    %v2668 = vunpack.c.l.b16 %v2602
    %v2669 = vunpack.c.l.b16 %v2603
    %v2670 = vunpack.c.h.b16 %v2603
    %v2671 = vunpack.c.l.b16 %v2604
    %v2672 = vunpack.c.l.b16 %v2605
    %v2673 = vunpack.c.h.b16 %v2605
    %v2674 = vunpack.c.l.b16 %v2606
    %v2675 = vunpack.c.l.b16 %v2607
    %v2676 = vunpack.c.h.b16 %v2607
    %v2677 = vunpack.c.l.b16 %v2608
    %v2678 = vunpack.c.l.b16 %v2609
    %v2679 = vunpack.c.h.b16 %v2609
    %v2680 = vunpack.c.l.b16 %v2610
    %v2681 = vunpack.c.l.b16 %v2611
    %v2682 = vunpack.c.h.b16 %v2611
    %v2683 = vunpack.c.l.b16 %v2612
    %v2684 = vunpack.c.l.b16 %v2613
    %v2685 = vunpack.c.h.b16 %v2613
    %v2686 = vunpack.c.l.b16 %v2614
    %v2687 = vunpack.c.l.b16 %v2615
    %v2688 = vunpack.c.h.b16 %v2615
    %v2689 = vunpack.c.l.b16 %v2616
    %v2690 = vunpack.c.l.b16 %v2617
    %v2691 = vunpack.c.h.b16 %v2617
    %v2692 = vunpack.c.l.b16 %v2618
    %v2693 = vunpack.c.l.b16 %v2619
    %v2694 = vunpack.c.h.b16 %v2619
    %v2695 = vunpack.c.l.b16 %v2620
    %v2696 = vunpack.c.l.b16 %v2621
    %v2697 = vunpack.c.h.b16 %v2621
    %v2698 = vunpack.c.l.b16 %v2622
    %v2699 = vunpack.c.l.b16 %v2623
    %v2700 = vunpack.c.h.b16 %v2623
    %v2701 = vunpack.c.l.b16 %v2624
    %v2702 = vunpack.c.l.b16 %v2625
    %v2703 = vunpack.c.h.b16 %v2625
    %v2704 = vunpack.c.l.b16 %v2626
    %v2705 = vunpack.c.l.b16 %v2627
    %v2706 = vunpack.c.h.b16 %v2627
    %v2707 = vunpack.c.l.b16 %v2628
    %v2708 = vunpack.c.l.b16 %v2629
    %v2709 = vunpack.c.h.b16 %v2629
    %v2710 = vunpack.c.l.b16 %v2630
    %v2711 = vpack.c.b16 %v2666, %v2663
    %v2712 = vpack.c.b16 %v2667, %v2664
    %v2713 = vpack.c.b16 %v2668, %v2665
    %v2714 = vpack.c.b16 %v2672, %v2669
    %v2715 = vpack.c.b16 %v2673, %v2670
    %v2716 = vpack.c.b16 %v2674, %v2671
    %v2717 = vpack.c.b16 %v2678, %v2675
    %v2718 = vpack.c.b16 %v2679, %v2676
    %v2719 = vpack.c.b16 %v2680, %v2677
    %v2720 = vpack.c.b16 %v2684, %v2681
    %v2721 = vpack.c.b16 %v2685, %v2682
    %v2722 = vpack.c.b16 %v2686, %v2683
    %v2723 = vpack.c.b16 %v2690, %v2687
    %v2724 = vpack.c.b16 %v2691, %v2688
    %v2725 = vpack.c.b16 %v2692, %v2689
    %v2726 = vpack.c.b16 %v2696, %v2693
    %v2727 = vpack.c.b16 %v2697, %v2694
    %v2728 = vpack.c.b16 %v2698, %v2695
    %v2729 = vpack.c.b16 %v2702, %v2699
    %v2730 = vpack.c.b16 %v2703, %v2700
    %v2731 = vpack.c.b16 %v2704, %v2701
    %v2732 = vpack.c.b16 %v2708, %v2705
    %v2733 = vpack.c.b16 %v2709, %v2706
    %v2734 = vpack.c.b16 %v2710, %v2707
    %2759 = vmatprep.subr.bf16.mxu0 %v2712
    %2760 = vmatpush1.bf16.msra.mxu0 %v2711
    %2761 = vmatprep.subr.bf16.mxu0 %v2715
    %2762 = vmatpush1.bf16.msra.mxu0 %v2714
    %2763 = vmatprep.subr.bf16.mxu0 %v2718
    %2764 = vmatpush1.bf16.msra.mxu0 %v2717
    %2765 = vmatprep.subr.bf16.mxu0 %v2721
    %2766 = vmatpush1.bf16.msra.mxu0 %v2720
    %2767 = vmatprep.subr.bf16.mxu0 %v2724
    %2768 = vmatpush1.bf16.msra.mxu0 %v2723
    %2769 = vmatprep.subr.bf16.mxu0 %v2727
    %2770 = vmatpush1.bf16.msra.mxu0 %v2726
    %2771 = vmatprep.subr.bf16.mxu0 %v2730
    %2772 = vmatpush1.bf16.msra.mxu0 %v2729
    %2773 = vmatprep.subr.bf16.mxu0 %v2733
    %2774 = vmatpush1.bf16.msra.mxu0 %v2732
    %2775 = vmatprep.subr.bf16.mxu0 0
    %2776 = vmatpush1.bf16.msra.mxu0 0
    %2777 = vmatprep.subr.bf16.mxu0 0
    %2778 = vmatpush1.bf16.msra.mxu0 0
    %2779 = vmatprep.subr.bf16.mxu0 0
    %2780 = vmatpush1.bf16.msra.mxu0 0
    %2781 = vmatprep.subr.bf16.mxu0 0
    %2782 = vmatpush1.bf16.msra.mxu0 0
    %2783 = vmatprep.subr.bf16.mxu0 0
    %2784 = vmatpush1.bf16.msra.mxu0 0
    %2785 = vmatprep.subr.bf16.mxu0 0
    %2786 = vmatpush1.bf16.msra.mxu0 0
    %2787 = vmatprep.subr.bf16.mxu0 0
    %2788 = vmatpush1.bf16.msra.mxu0 0
    %2789 = vmatprep.subr.bf16.mxu0 0
    %2790 = vmatpush1.bf16.msra.mxu0 0
    %2791 = vmatprep.mubr.bf16.mxu0 0
    %2792 = vmatmul.mubr.bf16.gmra.mrb[0].mxu0 %v2598
    %v2793 = vpop.f32.mrb[0].mxu0
    %v2794 = vadd.f32 0.0, %v2793
    %v2795 = vpop.f32.mrb[0].mxu0
    %v2796 = vadd.f32 0.0, %v2795
    %v2797 = vpop.f32.mrb[0].mxu0
    %v2798 = vadd.f32 0.0, %v2797
    %v2799 = vpop.f32.mrb[0].mxu0
    %v2800 = vadd.f32 0.0, %v2799
    %2801 = vdwg.mxu0
    %2802 = vmatprep.subr.bf16.mxu0 0
    %2803 = vmatpush1.bf16.msra.mxu0 %v2713
    %2804 = vmatprep.subr.bf16.mxu0 0
    %2805 = vmatpush1.bf16.msra.mxu0 %v2716
    %2806 = vmatprep.subr.bf16.mxu0 0
    %2807 = vmatpush1.bf16.msra.mxu0 %v2719
    %2808 = vmatprep.subr.bf16.mxu0 0
    %2809 = vmatpush1.bf16.msra.mxu0 %v2722
    %2810 = vmatprep.subr.bf16.mxu0 0
    %2811 = vmatpush1.bf16.msra.mxu0 %v2725
    %2812 = vmatprep.subr.bf16.mxu0 0
    %2813 = vmatpush1.bf16.msra.mxu0 %v2728
    %2814 = vmatprep.subr.bf16.mxu0 0
    %2815 = vmatpush1.bf16.msra.mxu0 %v2731
    %2816 = vmatprep.subr.bf16.mxu0 0
    %2817 = vmatpush1.bf16.msra.mxu0 %v2734
    %2818 = vmatprep.subr.bf16.mxu0 0
    %2819 = vmatpush1.bf16.msra.mxu0 0
    %2820 = vmatprep.subr.bf16.mxu0 0
    %2821 = vmatpush1.bf16.msra.mxu0 0
    %2822 = vmatprep.subr.bf16.mxu0 0
    %2823 = vmatpush1.bf16.msra.mxu0 0
    %2824 = vmatprep.subr.bf16.mxu0 0
    %2825 = vmatpush1.bf16.msra.mxu0 0
    %2826 = vmatprep.subr.bf16.mxu0 0
    %2827 = vmatpush1.bf16.msra.mxu0 0
    %2828 = vmatprep.subr.bf16.mxu0 0
    %2829 = vmatpush1.bf16.msra.mxu0 0
    %2830 = vmatprep.subr.bf16.mxu0 0
    %2831 = vmatpush1.bf16.msra.mxu0 0
    %2832 = vmatprep.subr.bf16.mxu0 0
    %2833 = vmatpush1.bf16.msra.mxu0 0
    %2834 = vmatprep.mubr.bf16.mxu0 0
    %2835 = vmatmul.mubr.bf16.gmra.mrb[0].mxu0 %v2598
    %v2836 = vpop.f32.mrb[0].mxu0
    %v2837 = vadd.f32 0.0, %v2836
    %v2838 = vpop.f32.mrb[0].mxu0
    %v2839 = vpop.f32.mrb[0].mxu0
    %v2840 = vadd.f32 0.0, %v2839
    %v2841 = vpop.f32.mrb[0].mxu0
    %2842 = vdwg.mxu0
    %v2843 = vadd.f32 %v2592, %v2794
    %v2844 = vadd.f32 %v2595, %v2798
    %v2845 = vtanh.pop %v2843
    %v2846 = vtanh.pop %v2844
    %vm2847 = vcmp.gt.f32.partialorder %v2843, 0.0
    %vm2848 = vcmp.gt.f32.partialorder %v2844, 0.0
    %v2849 = vmul.f32 %v2845, 0.25
    %v2850 = vmul.f32 %v2846, 0.25
    %v2851 = vsel %vm2847, %v2845, %v2849
    %v2852 = vsel %vm2848, %v2846, %v2850
    %v2853 = vadd.f32 %v2593, %v2796
    %v2854 = vadd.f32 %v2596, %v2800
    %v2855 = vtanh.pop %v2853
    %v2856 = vtanh.pop %v2854
    %vm2857 = vcmp.gt.f32.partialorder %v2853, 0.0
    %vm2858 = vcmp.gt.f32.partialorder %v2854, 0.0
    %v2859 = vmul.f32 %v2855, 0.25
    %v2860 = vmul.f32 %v2856, 0.25
    %v2861 = vsel %vm2857, %v2855, %v2859
    %v2862 = vsel %vm2858, %v2856, %v2860
    %v2863 = vadd.f32 %v2837, %v527
    %v2864 = vadd.f32 %v2840, %v527
    %v2865 = vmul.f32 %v2851, %v2863
    %v2866 = vmul.f32 %v2852, %v2864
    %v2867 = vadd.f32 %v2594, %v2865
    %v2868 = vadd.f32 %v2597, %v2866
    %v2869 = vtanh.pop %v2867
    %v2870 = vtanh.pop %v2868
    %vm2871 = vcmp.gt.f32.partialorder %v2867, 0.0
    %vm2872 = vcmp.gt.f32.partialorder %v2868, 0.0
    %v2873 = vmul.f32 %v2869, 0.25
    %v2874 = vmul.f32 %v2870, 0.25
    %v2875 = vsel %vm2871, %v2869, %v2873
    %v2876 = vsel %vm2872, %v2870, %v2874
    %v2877 = vsub.f32 %v2586, %v2875
    %v2878 = vsub.f32 %v2587, %v2876
    %v2879 = vmul.f32 %v2861, %v2877
    %v2880 = vmul.f32 %v2862, %v2878
    %v2881 = vadd.f32 %v2875, %v2879
    %v2882 = vadd.f32 %v2876, %v2880
    %s2883 = scalar_lea.vmem [#allocation9], 112
    %2884 = vst [vmem:[%s2883] sm:$0xff] %v2881
    %2885 = vst [vmem:[%s2883 + $0x8] sm:$0xff] %v2882
    // Predicated region
    $region34: #{tpu_custom_call.1} parent=1 // pred_check
      _
    $region35: #{tpu_custom_call.1} parent=1 // pred_check_branch
      %2887 = sbr.rel (0) target = $region37
    $region36: #{tpu_custom_call.1} parent=1 // pred_region
      %s2889 = ssub.s32 2048, 2048
      %2890 = vsyncadd [#allocation5], %s2889
      %s2891 = sshll.u32 [#allocation9], 4
      %s2892 = int_to_ptr.vmem [resolvable:$true] %s2891
      %2897 = dma.vmem_to_hbm [thread:$0]  %s2892, 2048, %s5, [#allocation5], 128, 128, 8
    $region37: #{tpu_custom_call.1} parent=1 // pred_fallthru
      _
    // Predicated region
    $region38: #{tpu_custom_call.1} parent=1 // pred_check
      _
    $region39: #{tpu_custom_call.1} parent=1 // pred_check_branch
      %2899 = sbr.rel (0) target = $region41
    $region40: #{tpu_custom_call.1} parent=1 // pred_region
      %2900 = dma.done [#allocation5], 2048
    $region41: #{tpu_custom_call.1} parent=1 // pred_fallthru
      _
    %2901 = vsyncpa [#allocation4], 1
    %2902 = vsyncpa [#allocation7], 1
    %2903 = vsyncpa [#allocation5], 1

</llo_original>
